<compile_context>
chip_gen: v7x
topology: tpu7x:2x2x1
jax: 0.10.0
libtpu: 0.0.40
codegen_flags: <defaults>
</compile_context>

<pallas_src>
import jax
import jax.numpy as jnp
import numpy as np
from jax.experimental import pallas as pl
from jax.experimental.pallas import tpu as pltpu

# ---- hyper-parameters: AttentionGCN(hidden_size=4, num_nodes=16, num_features=16) ----
HIDDEN = 4                       # temporal kernel size
N_NODES = 16
N_FEAT = 16
PAD = HIDDEN - 1
T_IN = N_FEAT + 2 * PAD          # 22, time length after F.pad
T_MID = T_IN - (HIDDEN - 1)      # 19, after TemporalConv 1
T_OUT = T_MID - (HIDDEN - 1)     # 16, after TemporalConv 2 (== num_features)
C_HID = 32                       # STConv hidden channels
C_OUT = 32                       # STConv out channels
C_MID = 16                       # conv-head mid channels
KP = 8                           # temporal-conv-1 contraction dim padded 4 -> 8
B = 2                            # batch size

# packed bf16 weight slab: every sub-slab starts on a 16-row (bf16 tile) boundary
ROW_W1 = 0
ROW_WG = 16
ROW_W2 = 48
WTS_ROWS = ROW_W2 + HIDDEN * C_HID       # 176
WTS_LANES = 3 * C_HID                    # 96

# packed f32 vector slab: row offsets derived from N_NODES
ROW_B1 = N_NODES
ROW_BG = N_NODES + 1
ROW_B2 = N_NODES + 2
ROW_BC1 = N_NODES + 3
ROW_WC2 = N_NODES + 4
ROW_BC2 = N_NODES + 5
VEC_ROWS = ((N_NODES + 6 + 7) // 8) * 8  # 24
VEC_LANES = 3 * C_HID                    # 96

ROWS_PER_B_IN = T_MID * N_NODES          # 304 rows per batch element, (t, n) order
ROWS_PER_B_MID = T_OUT * N_NODES         # 256


def attention_gcn_kernel(xw_ref, wts_ref, wc1_ref, vec_ref, out_ref):
    """One grid step = one batch element.  Rows are ordered (t, n) so every temporal
    window is a contiguous, 16-row-aligned slice (no lane concats / gathers)."""
    f32 = jnp.float32
    bf16 = jnp.bfloat16

    # ---- static views into the packed parameter slabs ----
    w1f = wts_ref[ROW_W1:ROW_W1 + KP, :]                        # (8, 96)  bf16
    wg = wts_ref[ROW_WG:ROW_WG + C_HID, 0:C_HID]                # (32, 32) bf16
    gn = vec_ref[0:N_NODES, 0:C_OUT]                            # (16, 32) f32
    bnv = vec_ref[0:N_NODES, C_OUT:2 * C_OUT]                   # (16, 32)
    b1f = vec_ref[ROW_B1:ROW_B1 + 1, 0:3 * C_HID]               # (1, 96)
    bgf = vec_ref[ROW_BG:ROW_BG + 1, 0:C_HID]                   # (1, 32)
    b2f = vec_ref[ROW_B2:ROW_B2 + 1, 0:3 * C_OUT]               # (1, 96)
    bc1 = vec_ref[ROW_BC1:ROW_BC1 + 1, 0:C_MID]                 # (1, 16)  (BN16 folded)
    wc2 = vec_ref[ROW_WC2:ROW_WC2 + 1, 0:C_MID]                 # (1, 16)
    bc2 = vec_ref[ROW_BC2:ROW_BC2 + 1, 0:1]                     # (1, 1)

    # ---- TemporalConv1 (1 -> 32): 3 gates fused into one (304,8)@(8,96) matmul ----
    h1 = jnp.dot(xw_ref[...], w1f, preferred_element_type=f32) + b1f
    p, q, r = h1[:, 0:C_HID], h1[:, C_HID:2 * C_HID], h1[:, 2 * C_HID:]
    g1 = jax.nn.relu(p * jax.nn.sigmoid(q) + r)                 # (304, 32) f32

    # ---- ChebConv(K=1) == linear over channels, then STConv ReLU ----
    hc = jnp.dot(g1.astype(bf16), wg, preferred_element_type=f32) + bgf
    hc = jax.nn.relu(hc).astype(bf16)                           # (304, 32) rows = (t, n)

    # ---- TemporalConv2 (32 -> 32): tap-wise accumulating matmuls.
    #      Tap-k operand = hc rows [k*N, k*N + 256): contiguous, 16-row aligned. ----
    acc = jnp.dot(hc[0:ROWS_PER_B_MID, :],
                  wts_ref[ROW_W2:ROW_W2 + C_HID, :], preferred_element_type=f32)
    for k in range(1, HIDDEN):
        hk = hc[k * N_NODES:k * N_NODES + ROWS_PER_B_MID, :]
        w2k = wts_ref[ROW_W2 + k * C_HID:ROW_W2 + (k + 1) * C_HID, :]
        acc = acc + jnp.dot(hk, w2k, preferred_element_type=f32)
    h2 = acc + b2f                                              # (256, 96)
    p2, q2, r2 = h2[:, 0:C_OUT], h2[:, C_OUT:2 * C_OUT], h2[:, 2 * C_OUT:]
    g2 = jax.nn.relu(p2 * jax.nn.sigmoid(q2) + r2)              # (256, 32) f32

    # ---- STConv BatchNorm2d(num_nodes) folded affine + outer AttentionGCN ReLU ----
    g3 = g2.reshape(T_OUT, N_NODES, C_OUT)
    hbn = jax.nn.relu(g3 * gn[None] + bnv[None])                # (16, 16, 32) f32
    hbn2 = hbn.reshape(ROWS_PER_B_MID, C_OUT).astype(bf16)      # (256, 32) rows = (t, n)

    # ---- conv head: Conv2d(32->16,(1,F)) with BN(16) folded into wc1/bc1.
    #      Per-time-step MXU accumulation over aligned 16-row slices replaces the
    #      previous 16 lane-offset concats (no XLU gather chain). ----
    y = jnp.dot(hbn2[0:N_NODES, :], wc1_ref[0:C_OUT, :], preferred_element_type=f32)
    for t in range(1, T_OUT):
        ht = hbn2[t * N_NODES:(t + 1) * N_NODES, :]             # (16, 32)
        wt = wc1_ref[t * C_OUT:(t + 1) * C_OUT, :]              # (32, 16)
        y = y + jnp.dot(ht, wt, preferred_element_type=f32)
    y = jax.nn.relu(y + bc1)                                    # (16, 16)

    # ---- Conv2d(16 -> 1, (1,1)) ----
    out = jnp.einsum('om,nm->on', wc2, y, preferred_element_type=f32) + bc2  # (1, 16)
    out_ref[0] = out


# -------------------------- wrapper-side packing / glue --------------------------

def pack_params(params):
    """Pack the 14 parameter tensors into 3 DMA-friendly slabs.  Call ONCE at model
    load time (hoisted out of the per-step forward path)."""
    (w1, b1, wg, bg, w2, b2, gamma_n, beta_n, wc1, bc1, g16, be16, wc2, bc2) = params

    w1f = jnp.transpose(w1, (1, 0, 2)).reshape(HIDDEN, 3 * C_HID)             # (4, 96)
    w2f = jnp.transpose(w2, (1, 2, 0, 3)).reshape(HIDDEN * C_HID, 3 * C_OUT)  # (128, 96)

    wts = jnp.zeros((WTS_ROWS, WTS_LANES), jnp.float32)
    wts = wts.at[ROW_W1:ROW_W1 + HIDDEN, :].set(w1f)
    wts = wts.at[ROW_WG:ROW_WG + C_HID, 0:C_HID].set(wg)
    wts = wts.at[ROW_W2:ROW_W2 + HIDDEN * C_HID, :].set(w2f)
    wts = wts.astype(jnp.bfloat16)

    # head conv weight / bias with BatchNorm2d(16) folded in
    wc1h = (wc1 * g16[None, None, :]).reshape(T_OUT * C_OUT, C_MID).astype(jnp.bfloat16)
    bc1h = bc1 * g16 + be16

    vec = jnp.zeros((VEC_ROWS, VEC_LANES), jnp.float32)
    vec = vec.at[0:N_NODES, 0:C_OUT].set(jnp.tile(gamma_n[:, None], (1, C_OUT)))
    vec = vec.at[0:N_NODES, C_OUT:2 * C_OUT].set(jnp.tile(beta_n[:, None], (1, C_OUT)))
    vec = vec.at[ROW_B1, 0:3 * C_HID].set(b1.reshape(-1))
    vec = vec.at[ROW_BG, 0:C_HID].set(bg)
    vec = vec.at[ROW_B2, 0:3 * C_OUT].set(b2.reshape(-1))
    vec = vec.at[ROW_BC1, 0:C_MID].set(bc1h)
    vec = vec.at[ROW_WC2, 0:C_MID].set(wc2)
    vec = vec.at[ROW_BC2, 0].set(bc2)
    return wts, wc1h, vec


def _im2col_input(x_raw):
    """Mirrors F.pad / view / permute and builds the 1-channel temporal-conv windows.
    Rows ordered (b, t, n); contraction dim padded 4 -> 8 with zeros (weights too)."""
    x = jnp.pad(x_raw, ((0, 0), (PAD, PAD)))                                  # (B*N, 22)
    x = x.reshape(B, N_NODES, T_IN).transpose(0, 2, 1)                        # (B, 22, N)
    win = jnp.stack([x[:, k:k + T_MID, :] for k in range(HIDDEN)], axis=-1)   # (B,19,16,4)
    xw = win.reshape(B * T_MID * N_NODES, HIDDEN)
    xw = jnp.pad(xw, ((0, 0), (0, KP - HIDDEN)))
    return xw.astype(jnp.bfloat16)


@jax.jit
def attention_gcn_forward(x_raw, packed, edge_index=None, edge_weight=None):
    """x_raw: (B * num_nodes, num_features) -- mirrors window.x.
    `packed` = pack_params(params) computed once at load time.
    edge_index / edge_weight are accepted and unused (ChebConv K=1 does no propagation)."""
    wts, wc1h, vec = packed
    xw = _im2col_input(x_raw)

    out = pl.pallas_call(
        attention_gcn_kernel,
        out_shape=jax.ShapeDtypeStruct((B, 1, N_NODES), jnp.float32),
        grid_spec=pltpu.PrefetchScalarGridSpec(
            num_scalar_prefetch=0,
            grid=(B,),                                             # batch grid axis
            in_specs=[
                pl.BlockSpec((ROWS_PER_B_IN, KP), lambda b: (b, 0)),
                pl.BlockSpec((WTS_ROWS, WTS_LANES), lambda b: (0, 0)),   # resident
                pl.BlockSpec((T_OUT * C_OUT, C_MID), lambda b: (0, 0)),  # resident
                pl.BlockSpec((VEC_ROWS, VEC_LANES), lambda b: (0, 0)),   # resident
            ],
            out_specs=pl.BlockSpec((1, 1, N_NODES), lambda b: (b, 0, 0)),
        ),
        compiler_params=pltpu.CompilerParams(
            dimension_semantics=("parallel",)),                    # 2 TCs on v7x
    )(xw, wts, wc1h, vec)
    return out.reshape(-1)


def init_params(key):
    ks = jax.random.split(key, 14)
    s = 0.1
    w1 = jax.random.normal(ks[0], (3, HIDDEN, C_HID), jnp.float32) * s
    b1 = jax.random.normal(ks[1], (3, C_HID), jnp.float32) * s
    wg = jax.random.normal(ks[2], (C_HID, C_HID), jnp.float32) * s
    bg = jax.random.normal(ks[3], (C_HID,), jnp.float32) * s
    w2 = jax.random.normal(ks[4], (3, HIDDEN, C_HID, C_OUT), jnp.float32) * s
    b2 = jax.random.normal(ks[5], (3, C_OUT), jnp.float32) * s
    gamma_n = 1.0 + 0.05 * jax.random.normal(ks[6], (N_NODES,), jnp.float32)
    beta_n = 0.05 * jax.random.normal(ks[7], (N_NODES,), jnp.float32)
    wc1 = jax.random.normal(ks[8], (T_OUT, C_OUT, C_MID), jnp.float32) * s
    bc1 = jax.random.normal(ks[9], (C_MID,), jnp.float32) * s
    g16 = 1.0 + 0.05 * jax.random.normal(ks[10], (C_MID,), jnp.float32)
    be16 = 0.05 * jax.random.normal(ks[11], (C_MID,), jnp.float32)
    wc2 = jax.random.normal(ks[12], (C_MID,), jnp.float32) * s
    bc2 = jax.random.normal(ks[13], (), jnp.float32) * s
    return (w1, b1, wg, bg, w2, b2, gamma_n, beta_n, wc1, bc1, g16, be16, wc2, bc2)


def reference_forward(x_raw, params):
    """Pure-JAX f32 reference of the same forward pass (no Pallas), for validation."""
    (w1, b1, wg, bg, w2, b2, gamma_n, beta_n, wc1, bc1, g16, be16, wc2, bc2) = params
    x = jnp.pad(x_raw, ((0, 0), (PAD, PAD)))
    x = x.reshape(B, N_NODES, T_IN).transpose(0, 2, 1)                        # (B, T_IN, N)

    def tconv1(i):
        acc = sum(x[:, k:k + T_MID, :, None] * w1[i, k][None, None, None, :]
                  for k in range(HIDDEN))
        return acc + b1[i][None, None, None, :]

    h = jax.nn.relu(tconv1(0) * jax.nn.sigmoid(tconv1(1)) + tconv1(2))        # (B,19,16,32)
    h = jax.nn.relu(jnp.einsum('btnc,cd->btnd', h, wg) + bg[None, None, None, :])

    def tconv2(i):
        acc = sum(jnp.einsum('btnc,cd->btnd', h[:, k:k + T_OUT], w2[i, k])
                  for k in range(HIDDEN))
        return acc + b2[i][None, None, None, :]

    h2 = jax.nn.relu(tconv2(0) * jax.nn.sigmoid(tconv2(1)) + tconv2(2))       # (B,16,16,32)
    h2 = h2 * gamma_n[None, None, :, None] + beta_n[None, None, :, None]
    h2 = jax.nn.relu(h2)
    y = jnp.einsum('btnc,tcm->bnm', h2, wc1) + bc1[None, None, :]
    y = jax.nn.relu(y * g16[None, None, :] + be16[None, None, :])
    out = jnp.einsum('bnm,m->bn', y, wc2) + bc2
    return out.reshape(-1)


if __name__ == "__main__":
    key = jax.random.PRNGKey(0)
    kx, kp = jax.random.split(key)
    x_raw = jax.random.normal(kx, (B * N_NODES, N_FEAT), dtype=jnp.float32)   # window.x
    params = init_params(kp)

    # dummy graph (unused by ChebConv with K=1; kept for interface fidelity)
    edge_index = jnp.stack([jnp.arange(N_NODES), (jnp.arange(N_NODES) + 1) % N_NODES])
    edge_weight = jnp.ones((N_NODES,), jnp.float32)

    # one-time parameter packing, hoisted out of the per-step forward path
    packed = jax.block_until_ready(pack_params(params))

    out = jax.block_until_ready(
        attention_gcn_forward(x_raw, packed, edge_index, edge_weight))

    ref = reference_forward(x_raw, params)
    assert out.shape == (B * N_NODES,)
    np.testing.assert_allclose(np.asarray(out), np.asarray(ref), rtol=3e-2, atol=3e-2)
    print("KERNEL_OK")
</pallas_src>

<mosaic_0001>
module attributes {stable_mosaic.version = 11 : i64} {
  func.func @attention_gcn_kernel(%arg0: i32, %arg1: memref<304x8xbf16, #tpu.memory_space<vmem>>, %arg2: memref<176x96xbf16, #tpu.memory_space<vmem>>, %arg3: memref<512x16xbf16, #tpu.memory_space<vmem>>, %arg4: memref<24x96xf32, #tpu.memory_space<vmem>>, %arg5: memref<1x1x16xf32, #tpu.memory_space<vmem>>) attributes {dimension_semantics = [#tpu.dimension_semantics<parallel>], iteration_bounds = array<i64: 2>, scalar_prefetch = 0 : i64, scratch_operands = 0 : i64, tpu.core_type = #tpu.core_type<tc>, window_params = [{transform_indices = @transform_0, window_bounds = array<i64: 304, 8>}, {pipeline_mode = #tpu.pipeline_mode<synchronous>, transform_indices = @transform_1, window_bounds = array<i64: 176, 96>}, {pipeline_mode = #tpu.pipeline_mode<synchronous>, transform_indices = @transform_2, window_bounds = array<i64: 512, 16>}, {pipeline_mode = #tpu.pipeline_mode<synchronous>, transform_indices = @transform_3, window_bounds = array<i64: 24, 96>}, {transform_indices = @transform_4, window_bounds = array<i64: 1, 1, 16>}]} {
    %c0 = arith.constant 0 : index
    %c0_0 = arith.constant 0 : index
    %0 = vector.load %arg2[%c0, %c0_0] : memref<176x96xbf16, #tpu.memory_space<vmem>>, vector<8x96xbf16>
    %c16 = arith.constant 16 : index
    %c0_1 = arith.constant 0 : index
    %1 = vector.load %arg2[%c16, %c0_1] : memref<176x96xbf16, #tpu.memory_space<vmem>>, vector<32x32xbf16>
    %c0_2 = arith.constant 0 : index
    %c0_3 = arith.constant 0 : index
    %2 = vector.load %arg4[%c0_2, %c0_3] : memref<24x96xf32, #tpu.memory_space<vmem>>, vector<16x32xf32>
    %c0_4 = arith.constant 0 : index
    %c32 = arith.constant 32 : index
    %3 = vector.load %arg4[%c0_4, %c32] : memref<24x96xf32, #tpu.memory_space<vmem>>, vector<16x32xf32>
    %c16_5 = arith.constant 16 : index
    %c0_6 = arith.constant 0 : index
    %4 = vector.load %arg4[%c16_5, %c0_6] : memref<24x96xf32, #tpu.memory_space<vmem>>, vector<1x96xf32>
    %c17 = arith.constant 17 : index
    %c0_7 = arith.constant 0 : index
    %5 = vector.load %arg4[%c17, %c0_7] : memref<24x96xf32, #tpu.memory_space<vmem>>, vector<1x32xf32>
    %c18 = arith.constant 18 : index
    %c0_8 = arith.constant 0 : index
    %6 = vector.load %arg4[%c18, %c0_8] : memref<24x96xf32, #tpu.memory_space<vmem>>, vector<1x96xf32>
    %c19 = arith.constant 19 : index
    %c0_9 = arith.constant 0 : index
    %7 = vector.load %arg4[%c19, %c0_9] : memref<24x96xf32, #tpu.memory_space<vmem>>, vector<1x16xf32>
    %c20 = arith.constant 20 : index
    %c0_10 = arith.constant 0 : index
    %8 = vector.load %arg4[%c20, %c0_10] : memref<24x96xf32, #tpu.memory_space<vmem>>, vector<1x16xf32>
    %c21 = arith.constant 21 : index
    %c0_11 = arith.constant 0 : index
    %9 = vector.load %arg4[%c21, %c0_11] : memref<24x96xf32, #tpu.memory_space<vmem>>, vector<1x1xf32>
    %c0_12 = arith.constant 0 : index
    %c0_13 = arith.constant 0 : index
    %10 = vector.load %arg1[%c0_12, %c0_13] : memref<304x8xbf16, #tpu.memory_space<vmem>>, vector<304x8xbf16>
    %cst = arith.constant dense<0.000000e+00> : vector<304x96xf32>
    %11 = tpu.matmul %10, %0, %cst {dimension_numbers = #tpu.dot_dimension_numbers<[1], [0], [0], [1], [0, 0, 1, 1], [], []>} : vector<304x8xbf16>, vector<8x96xbf16>, vector<304x96xf32> -> vector<304x96xf32>
    %12 = vector.broadcast %4 : vector<1x96xf32> to vector<304x96xf32>
    %13 = arith.addf %11, %12 : vector<304x96xf32>
    %14 = vector.extract_strided_slice %13 {offsets = [0, 0], sizes = [304, 32], strides = [1, 1]} : vector<304x96xf32> to vector<304x32xf32>
    %15 = vector.extract_strided_slice %13 {offsets = [0, 32], sizes = [304, 32], strides = [1, 1]} : vector<304x96xf32> to vector<304x32xf32>
    %16 = vector.extract_strided_slice %13 {offsets = [0, 64], sizes = [304, 32], strides = [1, 1]} : vector<304x96xf32> to vector<304x32xf32>
    %17 = arith.negf %15 : vector<304x32xf32>
    %18 = math.exp %17 : vector<304x32xf32>
    %cst_14 = arith.constant 1.000000e+00 : f32
    %19 = vector.broadcast %cst_14 : f32 to vector<304x32xf32>
    %20 = arith.addf %19, %18 : vector<304x32xf32>
    %21 = arith.divf %19, %20 : vector<304x32xf32>
    %22 = arith.mulf %14, %21 : vector<304x32xf32>
    %23 = arith.addf %22, %16 : vector<304x32xf32>
    %cst_15 = arith.constant 0.000000e+00 : f32
    %24 = vector.broadcast %cst_15 : f32 to vector<304x32xf32>
    %25 = arith.maximumf %23, %24 : vector<304x32xf32>
    %26 = arith.truncf %25 : vector<304x32xf32> to vector<304x32xbf16>
    %cst_16 = arith.constant dense<0.000000e+00> : vector<304x32xf32>
    %27 = tpu.matmul %26, %1, %cst_16 {dimension_numbers = #tpu.dot_dimension_numbers<[1], [0], [0], [1], [0, 0, 1, 1], [], []>} : vector<304x32xbf16>, vector<32x32xbf16>, vector<304x32xf32> -> vector<304x32xf32>
    %28 = vector.broadcast %5 : vector<1x32xf32> to vector<304x32xf32>
    %29 = arith.addf %27, %28 : vector<304x32xf32>
    %cst_17 = arith.constant 0.000000e+00 : f32
    %30 = vector.broadcast %cst_17 : f32 to vector<304x32xf32>
    %31 = arith.maximumf %29, %30 : vector<304x32xf32>
    %32 = arith.truncf %31 : vector<304x32xf32> to vector<304x32xbf16>
    %33 = vector.extract_strided_slice %32 {offsets = [0, 0], sizes = [256, 32], strides = [1, 1]} : vector<304x32xbf16> to vector<256x32xbf16>
    %c48 = arith.constant 48 : index
    %c0_18 = arith.constant 0 : index
    %34 = vector.load %arg2[%c48, %c0_18] : memref<176x96xbf16, #tpu.memory_space<vmem>>, vector<32x96xbf16>
    %cst_19 = arith.constant dense<0.000000e+00> : vector<256x96xf32>
    %35 = tpu.matmul %33, %34, %cst_19 {dimension_numbers = #tpu.dot_dimension_numbers<[1], [0], [0], [1], [0, 0, 1, 1], [], []>} : vector<256x32xbf16>, vector<32x96xbf16>, vector<256x96xf32> -> vector<256x96xf32>
    %36 = vector.extract_strided_slice %32 {offsets = [16, 0], sizes = [256, 32], strides = [1, 1]} : vector<304x32xbf16> to vector<256x32xbf16>
    %c80 = arith.constant 80 : index
    %c0_20 = arith.constant 0 : index
    %37 = vector.load %arg2[%c80, %c0_20] : memref<176x96xbf16, #tpu.memory_space<vmem>>, vector<32x96xbf16>
    %cst_21 = arith.constant dense<0.000000e+00> : vector<256x96xf32>
    %38 = tpu.matmul %36, %37, %cst_21 {dimension_numbers = #tpu.dot_dimension_numbers<[1], [0], [0], [1], [0, 0, 1, 1], [], []>} : vector<256x32xbf16>, vector<32x96xbf16>, vector<256x96xf32> -> vector<256x96xf32>
    %39 = arith.addf %35, %38 : vector<256x96xf32>
    %40 = vector.extract_strided_slice %32 {offsets = [32, 0], sizes = [256, 32], strides = [1, 1]} : vector<304x32xbf16> to vector<256x32xbf16>
    %c112 = arith.constant 112 : index
    %c0_22 = arith.constant 0 : index
    %41 = vector.load %arg2[%c112, %c0_22] : memref<176x96xbf16, #tpu.memory_space<vmem>>, vector<32x96xbf16>
    %cst_23 = arith.constant dense<0.000000e+00> : vector<256x96xf32>
    %42 = tpu.matmul %40, %41, %cst_23 {dimension_numbers = #tpu.dot_dimension_numbers<[1], [0], [0], [1], [0, 0, 1, 1], [], []>} : vector<256x32xbf16>, vector<32x96xbf16>, vector<256x96xf32> -> vector<256x96xf32>
    %43 = arith.addf %39, %42 : vector<256x96xf32>
    %44 = vector.extract_strided_slice %32 {offsets = [48, 0], sizes = [256, 32], strides = [1, 1]} : vector<304x32xbf16> to vector<256x32xbf16>
    %c144 = arith.constant 144 : index
    %c0_24 = arith.constant 0 : index
    %45 = vector.load %arg2[%c144, %c0_24] : memref<176x96xbf16, #tpu.memory_space<vmem>>, vector<32x96xbf16>
    %cst_25 = arith.constant dense<0.000000e+00> : vector<256x96xf32>
    %46 = tpu.matmul %44, %45, %cst_25 {dimension_numbers = #tpu.dot_dimension_numbers<[1], [0], [0], [1], [0, 0, 1, 1], [], []>} : vector<256x32xbf16>, vector<32x96xbf16>, vector<256x96xf32> -> vector<256x96xf32>
    %47 = arith.addf %43, %46 : vector<256x96xf32>
    %48 = vector.broadcast %6 : vector<1x96xf32> to vector<256x96xf32>
    %49 = arith.addf %47, %48 : vector<256x96xf32>
    %50 = vector.extract_strided_slice %49 {offsets = [0, 0], sizes = [256, 32], strides = [1, 1]} : vector<256x96xf32> to vector<256x32xf32>
    %51 = vector.extract_strided_slice %49 {offsets = [0, 32], sizes = [256, 32], strides = [1, 1]} : vector<256x96xf32> to vector<256x32xf32>
    %52 = vector.extract_strided_slice %49 {offsets = [0, 64], sizes = [256, 32], strides = [1, 1]} : vector<256x96xf32> to vector<256x32xf32>
    %53 = arith.negf %51 : vector<256x32xf32>
    %54 = math.exp %53 : vector<256x32xf32>
    %cst_26 = arith.constant 1.000000e+00 : f32
    %55 = vector.broadcast %cst_26 : f32 to vector<256x32xf32>
    %56 = arith.addf %55, %54 : vector<256x32xf32>
    %57 = arith.divf %55, %56 : vector<256x32xf32>
    %58 = arith.mulf %50, %57 : vector<256x32xf32>
    %59 = arith.addf %58, %52 : vector<256x32xf32>
    %cst_27 = arith.constant 0.000000e+00 : f32
    %60 = vector.broadcast %cst_27 : f32 to vector<256x32xf32>
    %61 = arith.maximumf %59, %60 : vector<256x32xf32>
    %62 = vector.shape_cast %61 : vector<256x32xf32> to vector<16x16x32xf32>
    %63 = vector.shape_cast %2 : vector<16x32xf32> to vector<1x16x32xf32>
    %64 = vector.broadcast %63 : vector<1x16x32xf32> to vector<16x16x32xf32>
    %65 = arith.mulf %62, %64 : vector<16x16x32xf32>
    %66 = vector.shape_cast %3 : vector<16x32xf32> to vector<1x16x32xf32>
    %67 = vector.broadcast %66 : vector<1x16x32xf32> to vector<16x16x32xf32>
    %68 = arith.addf %65, %67 : vector<16x16x32xf32>
    %cst_28 = arith.constant 0.000000e+00 : f32
    %69 = vector.broadcast %cst_28 : f32 to vector<16x16x32xf32>
    %70 = arith.maximumf %68, %69 : vector<16x16x32xf32>
    %71 = vector.shape_cast %70 : vector<16x16x32xf32> to vector<256x32xf32>
    %72 = arith.truncf %71 : vector<256x32xf32> to vector<256x32xbf16>
    %73 = vector.extract_strided_slice %72 {offsets = [0, 0], sizes = [16, 32], strides = [1, 1]} : vector<256x32xbf16> to vector<16x32xbf16>
    %c0_29 = arith.constant 0 : index
    %c0_30 = arith.constant 0 : index
    %74 = vector.load %arg3[%c0_29, %c0_30] : memref<512x16xbf16, #tpu.memory_space<vmem>>, vector<32x16xbf16>
    %cst_31 = arith.constant dense<0.000000e+00> : vector<16x16xf32>
    %75 = tpu.matmul %73, %74, %cst_31 {dimension_numbers = #tpu.dot_dimension_numbers<[1], [0], [0], [1], [0, 0, 1, 1], [], []>} : vector<16x32xbf16>, vector<32x16xbf16>, vector<16x16xf32> -> vector<16x16xf32>
    %76 = vector.extract_strided_slice %72 {offsets = [16, 0], sizes = [16, 32], strides = [1, 1]} : vector<256x32xbf16> to vector<16x32xbf16>
    %c32_32 = arith.constant 32 : index
    %c0_33 = arith.constant 0 : index
    %77 = vector.load %arg3[%c32_32, %c0_33] : memref<512x16xbf16, #tpu.memory_space<vmem>>, vector<32x16xbf16>
    %cst_34 = arith.constant dense<0.000000e+00> : vector<16x16xf32>
    %78 = tpu.matmul %76, %77, %cst_34 {dimension_numbers = #tpu.dot_dimension_numbers<[1], [0], [0], [1], [0, 0, 1, 1], [], []>} : vector<16x32xbf16>, vector<32x16xbf16>, vector<16x16xf32> -> vector<16x16xf32>
    %79 = arith.addf %75, %78 : vector<16x16xf32>
    %80 = vector.extract_strided_slice %72 {offsets = [32, 0], sizes = [16, 32], strides = [1, 1]} : vector<256x32xbf16> to vector<16x32xbf16>
    %c64 = arith.constant 64 : index
    %c0_35 = arith.constant 0 : index
    %81 = vector.load %arg3[%c64, %c0_35] : memref<512x16xbf16, #tpu.memory_space<vmem>>, vector<32x16xbf16>
    %cst_36 = arith.constant dense<0.000000e+00> : vector<16x16xf32>
    %82 = tpu.matmul %80, %81, %cst_36 {dimension_numbers = #tpu.dot_dimension_numbers<[1], [0], [0], [1], [0, 0, 1, 1], [], []>} : vector<16x32xbf16>, vector<32x16xbf16>, vector<16x16xf32> -> vector<16x16xf32>
    %83 = arith.addf %79, %82 : vector<16x16xf32>
    %84 = vector.extract_strided_slice %72 {offsets = [48, 0], sizes = [16, 32], strides = [1, 1]} : vector<256x32xbf16> to vector<16x32xbf16>
    %c96 = arith.constant 96 : index
    %c0_37 = arith.constant 0 : index
    %85 = vector.load %arg3[%c96, %c0_37] : memref<512x16xbf16, #tpu.memory_space<vmem>>, vector<32x16xbf16>
    %cst_38 = arith.constant dense<0.000000e+00> : vector<16x16xf32>
    %86 = tpu.matmul %84, %85, %cst_38 {dimension_numbers = #tpu.dot_dimension_numbers<[1], [0], [0], [1], [0, 0, 1, 1], [], []>} : vector<16x32xbf16>, vector<32x16xbf16>, vector<16x16xf32> -> vector<16x16xf32>
    %87 = arith.addf %83, %86 : vector<16x16xf32>
    %88 = vector.extract_strided_slice %72 {offsets = [64, 0], sizes = [16, 32], strides = [1, 1]} : vector<256x32xbf16> to vector<16x32xbf16>
    %c128 = arith.constant 128 : index
    %c0_39 = arith.constant 0 : index
    %89 = vector.load %arg3[%c128, %c0_39] : memref<512x16xbf16, #tpu.memory_space<vmem>>, vector<32x16xbf16>
    %cst_40 = arith.constant dense<0.000000e+00> : vector<16x16xf32>
    %90 = tpu.matmul %88, %89, %cst_40 {dimension_numbers = #tpu.dot_dimension_numbers<[1], [0], [0], [1], [0, 0, 1, 1], [], []>} : vector<16x32xbf16>, vector<32x16xbf16>, vector<16x16xf32> -> vector<16x16xf32>
    %91 = arith.addf %87, %90 : vector<16x16xf32>
    %92 = vector.extract_strided_slice %72 {offsets = [80, 0], sizes = [16, 32], strides = [1, 1]} : vector<256x32xbf16> to vector<16x32xbf16>
    %c160 = arith.constant 160 : index
    %c0_41 = arith.constant 0 : index
    %93 = vector.load %arg3[%c160, %c0_41] : memref<512x16xbf16, #tpu.memory_space<vmem>>, vector<32x16xbf16>
    %cst_42 = arith.constant dense<0.000000e+00> : vector<16x16xf32>
    %94 = tpu.matmul %92, %93, %cst_42 {dimension_numbers = #tpu.dot_dimension_numbers<[1], [0], [0], [1], [0, 0, 1, 1], [], []>} : vector<16x32xbf16>, vector<32x16xbf16>, vector<16x16xf32> -> vector<16x16xf32>
    %95 = arith.addf %91, %94 : vector<16x16xf32>
    %96 = vector.extract_strided_slice %72 {offsets = [96, 0], sizes = [16, 32], strides = [1, 1]} : vector<256x32xbf16> to vector<16x32xbf16>
    %c192 = arith.constant 192 : index
    %c0_43 = arith.constant 0 : index
    %97 = vector.load %arg3[%c192, %c0_43] : memref<512x16xbf16, #tpu.memory_space<vmem>>, vector<32x16xbf16>
    %cst_44 = arith.constant dense<0.000000e+00> : vector<16x16xf32>
    %98 = tpu.matmul %96, %97, %cst_44 {dimension_numbers = #tpu.dot_dimension_numbers<[1], [0], [0], [1], [0, 0, 1, 1], [], []>} : vector<16x32xbf16>, vector<32x16xbf16>, vector<16x16xf32> -> vector<16x16xf32>
    %99 = arith.addf %95, %98 : vector<16x16xf32>
    %100 = vector.extract_strided_slice %72 {offsets = [112, 0], sizes = [16, 32], strides = [1, 1]} : vector<256x32xbf16> to vector<16x32xbf16>
    %c224 = arith.constant 224 : index
    %c0_45 = arith.constant 0 : index
    %101 = vector.load %arg3[%c224, %c0_45] : memref<512x16xbf16, #tpu.memory_space<vmem>>, vector<32x16xbf16>
    %cst_46 = arith.constant dense<0.000000e+00> : vector<16x16xf32>
    %102 = tpu.matmul %100, %101, %cst_46 {dimension_numbers = #tpu.dot_dimension_numbers<[1], [0], [0], [1], [0, 0, 1, 1], [], []>} : vector<16x32xbf16>, vector<32x16xbf16>, vector<16x16xf32> -> vector<16x16xf32>
    %103 = arith.addf %99, %102 : vector<16x16xf32>
    %104 = vector.extract_strided_slice %72 {offsets = [128, 0], sizes = [16, 32], strides = [1, 1]} : vector<256x32xbf16> to vector<16x32xbf16>
    %c256 = arith.constant 256 : index
    %c0_47 = arith.constant 0 : index
    %105 = vector.load %arg3[%c256, %c0_47] : memref<512x16xbf16, #tpu.memory_space<vmem>>, vector<32x16xbf16>
    %cst_48 = arith.constant dense<0.000000e+00> : vector<16x16xf32>
    %106 = tpu.matmul %104, %105, %cst_48 {dimension_numbers = #tpu.dot_dimension_numbers<[1], [0], [0], [1], [0, 0, 1, 1], [], []>} : vector<16x32xbf16>, vector<32x16xbf16>, vector<16x16xf32> -> vector<16x16xf32>
    %107 = arith.addf %103, %106 : vector<16x16xf32>
    %108 = vector.extract_strided_slice %72 {offsets = [144, 0], sizes = [16, 32], strides = [1, 1]} : vector<256x32xbf16> to vector<16x32xbf16>
    %c288 = arith.constant 288 : index
    %c0_49 = arith.constant 0 : index
    %109 = vector.load %arg3[%c288, %c0_49] : memref<512x16xbf16, #tpu.memory_space<vmem>>, vector<32x16xbf16>
    %cst_50 = arith.constant dense<0.000000e+00> : vector<16x16xf32>
    %110 = tpu.matmul %108, %109, %cst_50 {dimension_numbers = #tpu.dot_dimension_numbers<[1], [0], [0], [1], [0, 0, 1, 1], [], []>} : vector<16x32xbf16>, vector<32x16xbf16>, vector<16x16xf32> -> vector<16x16xf32>
    %111 = arith.addf %107, %110 : vector<16x16xf32>
    %112 = vector.extract_strided_slice %72 {offsets = [160, 0], sizes = [16, 32], strides = [1, 1]} : vector<256x32xbf16> to vector<16x32xbf16>
    %c320 = arith.constant 320 : index
    %c0_51 = arith.constant 0 : index
    %113 = vector.load %arg3[%c320, %c0_51] : memref<512x16xbf16, #tpu.memory_space<vmem>>, vector<32x16xbf16>
    %cst_52 = arith.constant dense<0.000000e+00> : vector<16x16xf32>
    %114 = tpu.matmul %112, %113, %cst_52 {dimension_numbers = #tpu.dot_dimension_numbers<[1], [0], [0], [1], [0, 0, 1, 1], [], []>} : vector<16x32xbf16>, vector<32x16xbf16>, vector<16x16xf32> -> vector<16x16xf32>
    %115 = arith.addf %111, %114 : vector<16x16xf32>
    %116 = vector.extract_strided_slice %72 {offsets = [176, 0], sizes = [16, 32], strides = [1, 1]} : vector<256x32xbf16> to vector<16x32xbf16>
    %c352 = arith.constant 352 : index
    %c0_53 = arith.constant 0 : index
    %117 = vector.load %arg3[%c352, %c0_53] : memref<512x16xbf16, #tpu.memory_space<vmem>>, vector<32x16xbf16>
    %cst_54 = arith.constant dense<0.000000e+00> : vector<16x16xf32>
    %118 = tpu.matmul %116, %117, %cst_54 {dimension_numbers = #tpu.dot_dimension_numbers<[1], [0], [0], [1], [0, 0, 1, 1], [], []>} : vector<16x32xbf16>, vector<32x16xbf16>, vector<16x16xf32> -> vector<16x16xf32>
    %119 = arith.addf %115, %118 : vector<16x16xf32>
    %120 = vector.extract_strided_slice %72 {offsets = [192, 0], sizes = [16, 32], strides = [1, 1]} : vector<256x32xbf16> to vector<16x32xbf16>
    %c384 = arith.constant 384 : index
    %c0_55 = arith.constant 0 : index
    %121 = vector.load %arg3[%c384, %c0_55] : memref<512x16xbf16, #tpu.memory_space<vmem>>, vector<32x16xbf16>
    %cst_56 = arith.constant dense<0.000000e+00> : vector<16x16xf32>
    %122 = tpu.matmul %120, %121, %cst_56 {dimension_numbers = #tpu.dot_dimension_numbers<[1], [0], [0], [1], [0, 0, 1, 1], [], []>} : vector<16x32xbf16>, vector<32x16xbf16>, vector<16x16xf32> -> vector<16x16xf32>
    %123 = arith.addf %119, %122 : vector<16x16xf32>
    %124 = vector.extract_strided_slice %72 {offsets = [208, 0], sizes = [16, 32], strides = [1, 1]} : vector<256x32xbf16> to vector<16x32xbf16>
    %c416 = arith.constant 416 : index
    %c0_57 = arith.constant 0 : index
    %125 = vector.load %arg3[%c416, %c0_57] : memref<512x16xbf16, #tpu.memory_space<vmem>>, vector<32x16xbf16>
    %cst_58 = arith.constant dense<0.000000e+00> : vector<16x16xf32>
    %126 = tpu.matmul %124, %125, %cst_58 {dimension_numbers = #tpu.dot_dimension_numbers<[1], [0], [0], [1], [0, 0, 1, 1], [], []>} : vector<16x32xbf16>, vector<32x16xbf16>, vector<16x16xf32> -> vector<16x16xf32>
    %127 = arith.addf %123, %126 : vector<16x16xf32>
    %128 = vector.extract_strided_slice %72 {offsets = [224, 0], sizes = [16, 32], strides = [1, 1]} : vector<256x32xbf16> to vector<16x32xbf16>
    %c448 = arith.constant 448 : index
    %c0_59 = arith.constant 0 : index
    %129 = vector.load %arg3[%c448, %c0_59] : memref<512x16xbf16, #tpu.memory_space<vmem>>, vector<32x16xbf16>
    %cst_60 = arith.constant dense<0.000000e+00> : vector<16x16xf32>
    %130 = tpu.matmul %128, %129, %cst_60 {dimension_numbers = #tpu.dot_dimension_numbers<[1], [0], [0], [1], [0, 0, 1, 1], [], []>} : vector<16x32xbf16>, vector<32x16xbf16>, vector<16x16xf32> -> vector<16x16xf32>
    %131 = arith.addf %127, %130 : vector<16x16xf32>
    %132 = vector.extract_strided_slice %72 {offsets = [240, 0], sizes = [16, 32], strides = [1, 1]} : vector<256x32xbf16> to vector<16x32xbf16>
    %c480 = arith.constant 480 : index
    %c0_61 = arith.constant 0 : index
    %133 = vector.load %arg3[%c480, %c0_61] : memref<512x16xbf16, #tpu.memory_space<vmem>>, vector<32x16xbf16>
    %cst_62 = arith.constant dense<0.000000e+00> : vector<16x16xf32>
    %134 = tpu.matmul %132, %133, %cst_62 {dimension_numbers = #tpu.dot_dimension_numbers<[1], [0], [0], [1], [0, 0, 1, 1], [], []>} : vector<16x32xbf16>, vector<32x16xbf16>, vector<16x16xf32> -> vector<16x16xf32>
    %135 = arith.addf %131, %134 : vector<16x16xf32>
    %136 = vector.broadcast %7 : vector<1x16xf32> to vector<16x16xf32>
    %137 = arith.addf %135, %136 : vector<16x16xf32>
    %cst_63 = arith.constant 0.000000e+00 : f32
    %138 = vector.broadcast %cst_63 : f32 to vector<16x16xf32>
    %139 = arith.maximumf %137, %138 : vector<16x16xf32>
    "tpu.trace_start"() <{level = 10 : i32, message = "om,nm->on"}> : () -> ()
    %cst_64 = arith.constant dense<0.000000e+00> : vector<1x16xf32>
    %140 = tpu.matmul %8, %139, %cst_64 {dimension_numbers = #tpu.dot_dimension_numbers<[1], [1], [0], [0], [0, 0, 1, 0], [], []>} : vector<1x16xf32>, vector<16x16xf32>, vector<1x16xf32> -> vector<1x16xf32>
    "tpu.trace_stop"() : () -> ()
    %141 = vector.broadcast %9 : vector<1x1xf32> to vector<1x16xf32>
    %142 = arith.addf %140, %141 : vector<1x16xf32>
    %c0_65 = arith.constant 0 : index
    %c0_66 = arith.constant 0 : index
    %c0_67 = arith.constant 0 : index
    %143 = vector.load %arg5[%c0_65, %c0_66, %c0_67] : memref<1x1x16xf32, #tpu.memory_space<vmem>>, vector<1x1x16xf32>
    %144 = vector.shape_cast %143 : vector<1x1x16xf32> to vector<1x16xf32>
    %145 = vector.shape_cast %142 : vector<1x16xf32> to vector<1x1x16xf32>
    tpu.vector_store %arg5[%c0_65, %c0_66, %c0_67], %145 {strides = array<i32>} : memref<1x1x16xf32, #tpu.memory_space<vmem>>, vector<1x1x16xf32>,
    return
  }
  func.func @transform_0(%arg0: i32) -> (i32, i32) {
    %c0_i32 = arith.constant 0 : i32
    %c0_i32_0 = arith.constant 0 : i32
    return %arg0, %c0_i32 : i32, i32
  }
  func.func @transform_1(%arg0: i32) -> (i32, i32) {
    %c0_i32 = arith.constant 0 : i32
    %c0_i32_0 = arith.constant 0 : i32
    %c0_i32_1 = arith.constant 0 : i32
    return %c0_i32, %c0_i32_0 : i32, i32
  }
  func.func @transform_2(%arg0: i32) -> (i32, i32) {
    %c0_i32 = arith.constant 0 : i32
    %c0_i32_0 = arith.constant 0 : i32
    %c0_i32_1 = arith.constant 0 : i32
    return %c0_i32, %c0_i32_0 : i32, i32
  }
  func.func @transform_3(%arg0: i32) -> (i32, i32) {
    %c0_i32 = arith.constant 0 : i32
    %c0_i32_0 = arith.constant 0 : i32
    %c0_i32_1 = arith.constant 0 : i32
    return %c0_i32, %c0_i32_0 : i32, i32
  }
  func.func @transform_4(%arg0: i32) -> (i32, i32, i32) {
    %c0_i32 = arith.constant 0 : i32
    %c0_i32_0 = arith.constant 0 : i32
    %c0_i32_1 = arith.constant 0 : i32
    return %arg0, %c0_i32, %c0_i32_0 : i32, i32, i32
  }
}

</mosaic_0001>

<llo_original>
// kernel: attention_gcn_forward.1
$region0: #{attention_gcn_forward.1}
  #allocation0 [shape = 'u32[]', space=smem, size = 0x4, offset = 0x4, fixed_abs, tag = 'smem constant byte address 0x4 - core index']
  #allocation1 [shape = 'u32[144,128]{1,0:T(1,128)}', space=vmem, size = 0x12000, scoped, tag = 'internal scratch']
  %s0 = inlined_call_operand.vmem [shape: bf16[608,8], index: 0, kind: input, shape index: {}]
  %s1 = inlined_call_operand.vmem [shape: bf16[176,96], index: 1, kind: input, shape index: {}]
  %s2 = inlined_call_operand.vmem [shape: bf16[512,16], index: 2, kind: input, shape index: {}]
  %s3 = inlined_call_operand.vmem [shape: f32[24,96], index: 3, kind: input, shape index: {}]
  %s4 = inlined_call_operand.vmem [shape: f32[2,1,16], index: 4, kind: output, shape index: {}]
  %s5 = sld [smem:[#allocation0]]
  $region49: #{attention_gcn_forward.1} parent=0
    _
  %s7 = ssub.s32 1, %s5
  %s8 = scalar_select 0, %s7, %s5
  loop: start=0, step=1, limit=4
  $region2: #{attention_gcn_forward.1} parent=0 // loop_pre_header
    _
  $region3: #{attention_gcn_forward.1} parent=0 // loop_header
    %s10 = sphi 0, %s14
    %p11 = scmp.ge.s32.totalorder %s10, 4
    %s20 = sphi 0, %s22
    %s23 = sphi 0, %s20
    %s24 = sphi 0, %s23
    %s40 = sphi 0, %s24
    %s44 = sphi 0, %s44
    %s46 = sphi 0, %s44
    %s47 = sphi 0, %s46
    %s61 = sphi 0, %s47
    %s65 = sphi 0, %s65
    %s67 = sphi 0, %s65
    %s68 = sphi 0, %s67
    %s82 = sphi 0, %s68
    %s86 = sphi 0, %s86
    %s88 = sphi 0, %s86
    %s89 = sphi 0, %s88
    %s103 = sphi 0, %s89
    %s109 = sphi 0, %s111
    %s112 = sphi 0, %s109
    %s113 = sphi 0, %s112
    %s129 = sphi 0, %s113
  $region4: #{attention_gcn_forward.1} parent=0 // loop_header_branch
    %13 = sbr.rel (%p11) target = $region8
  $region5: #{attention_gcn_forward.1} parent=0 // loop_body
    %s15 = ssub.s32 %s10, 1
    %s16 = ssub.s32 %s10, 2
    %s17 = sadd.s32 %s10, 1
    %s18 = ssub.s32 %s10, %s17
    %p19 = scmp.eq.s32.totalorder %s18, 0
    %s21 = sadd.s32 %s20, 1
    %s22 = scalar_select %p19, %s20, %s21
    %p25 = pneg %p19
    %p26 = scmp.eq.s32.totalorder %s10, 1
    %p27 = por %p25, %p26
    %p28 = scmp.ne.s32.totalorder %s20, %s23
    %p29 = scmp.eq.s32.totalorder %s10, 0
    %p30 = por %p28, %p29
    %p31 = scmp.ne.s32.totalorder %s20, %s23
    %p32 = scmp.eq.s32.totalorder %s15, 1
    %p33 = por %p31, %p32
    %p34 = scmp.ne.s32.totalorder %s23, %s24
    %p35 = scmp.eq.s32.totalorder %s15, 0
    %p36 = por %p34, %p35
    %p37 = scmp.ne.s32.totalorder %s23, %s24
    %p38 = scmp.eq.s32.totalorder %s16, 1
    %p39 = por %p37, %p38
    %p41 = scmp.ne.s32.totalorder %s24, %s40
    %p42 = scmp.eq.s32.totalorder %s16, 0
    %p43 = por %p41, %p42
    %s45 = sadd.s32 %s44, 1
    %p48 = scmp.eq.s32.totalorder %s10, 1
    %p49 = scmp.ne.s32.totalorder %s44, %s46
    %p50 = scmp.eq.s32.totalorder %s10, 0
    %p51 = por %p49, %p50
    %p52 = scmp.ne.s32.totalorder %s44, %s46
    %p53 = scmp.eq.s32.totalorder %s15, 1
    %p54 = por %p52, %p53
    %p55 = scmp.ne.s32.totalorder %s46, %s47
    %p56 = scmp.eq.s32.totalorder %s15, 0
    %p57 = por %p55, %p56
    %p58 = scmp.ne.s32.totalorder %s46, %s47
    %p59 = scmp.eq.s32.totalorder %s16, 1
    %p60 = por %p58, %p59
    %p62 = scmp.ne.s32.totalorder %s47, %s61
    %p63 = scmp.eq.s32.totalorder %s16, 0
    %p64 = por %p62, %p63
    %s66 = sadd.s32 %s65, 1
    %p69 = scmp.eq.s32.totalorder %s10, 1
    %p70 = scmp.ne.s32.totalorder %s65, %s67
    %p71 = scmp.eq.s32.totalorder %s10, 0
    %p72 = por %p70, %p71
    %p73 = scmp.ne.s32.totalorder %s65, %s67
    %p74 = scmp.eq.s32.totalorder %s15, 1
    %p75 = por %p73, %p74
    %p76 = scmp.ne.s32.totalorder %s67, %s68
    %p77 = scmp.eq.s32.totalorder %s15, 0
    %p78 = por %p76, %p77
    %p79 = scmp.ne.s32.totalorder %s67, %s68
    %p80 = scmp.eq.s32.totalorder %s16, 1
    %p81 = por %p79, %p80
    %p83 = scmp.ne.s32.totalorder %s68, %s82
    %p84 = scmp.eq.s32.totalorder %s16, 0
    %p85 = por %p83, %p84
    %s87 = sadd.s32 %s86, 1
    %p90 = scmp.eq.s32.totalorder %s10, 1
    %p91 = scmp.ne.s32.totalorder %s86, %s88
    %p92 = scmp.eq.s32.totalorder %s10, 0
    %p93 = por %p91, %p92
    %p94 = scmp.ne.s32.totalorder %s86, %s88
    %p95 = scmp.eq.s32.totalorder %s15, 1
    %p96 = por %p94, %p95
    %p97 = scmp.ne.s32.totalorder %s88, %s89
    %p98 = scmp.eq.s32.totalorder %s15, 0
    %p99 = por %p97, %p98
    %p100 = scmp.ne.s32.totalorder %s88, %s89
    %p101 = scmp.eq.s32.totalorder %s16, 1
    %p102 = por %p100, %p101
    %p104 = scmp.ne.s32.totalorder %s89, %s103
    %p105 = scmp.eq.s32.totalorder %s16, 0
    %p106 = por %p104, %p105
    %s107 = ssub.s32 %s10, %s17
    %p108 = scmp.eq.s32.totalorder %s107, 0
    %s110 = sadd.s32 %s109, 1
    %s111 = scalar_select %p108, %s109, %s110
    %p114 = pneg %p108
    %p115 = scmp.eq.s32.totalorder %s10, 1
    %p116 = por %p114, %p115
    %p117 = scmp.ne.s32.totalorder %s109, %s112
    %p118 = scmp.eq.s32.totalorder %s10, 0
    %p119 = por %p117, %p118
    %p120 = scmp.ne.s32.totalorder %s109, %s112
    %p121 = scmp.eq.s32.totalorder %s15, 1
    %p122 = por %p120, %p121
    %p123 = scmp.ne.s32.totalorder %s112, %s113
    %p124 = scmp.eq.s32.totalorder %s15, 0
    %p125 = por %p123, %p124
    %p126 = scmp.ne.s32.totalorder %s112, %s113
    %p127 = scmp.eq.s32.totalorder %s16, 1
    %p128 = por %p126, %p127
    %p130 = scmp.ne.s32.totalorder %s113, %s129
    %p131 = scmp.eq.s32.totalorder %s16, 0
    %p132 = por %p130, %p131
    %p133 = scmp.le.s32.totalorder 1, %s10
    %p134 = scmp.lt.s32.totalorder %s10, 3
    %p135 = pnand %p133, %p134
    %p136 = pneg %p135
    // Predicated region
    $region9: #{attention_gcn_forward.1} parent=5 // pred_check
      _
    $region10: #{attention_gcn_forward.1} parent=5 // pred_check_branch
      %138 = sbr.rel (%p135) target = $region12
    $region11: #{attention_gcn_forward.1} parent=5 // pred_region
      %s139 = ssub.s32 %s10, 1
      // Predicated region
      $region13: #{attention_gcn_forward.1} parent=11 // pred_check
        %p140 = pneg %p57
      $region14: #{attention_gcn_forward.1} parent=11 // pred_check_branch
        %142 = sbr.rel (%p140) target = $region16
      $region15: #{attention_gcn_forward.1} parent=11 // pred_region
        _
      $region16: #{attention_gcn_forward.1} parent=11 // pred_fallthru
        _
      // Predicated region
      $region17: #{attention_gcn_forward.1} parent=11 // pred_check
        %p143 = pneg %p78
      $region18: #{attention_gcn_forward.1} parent=11 // pred_check_branch
        %145 = sbr.rel (%p143) target = $region20
      $region19: #{attention_gcn_forward.1} parent=11 // pred_region
        _
      $region20: #{attention_gcn_forward.1} parent=11 // pred_fallthru
        _
      // Predicated region
      $region21: #{attention_gcn_forward.1} parent=11 // pred_check
        %p146 = pneg %p99
      $region22: #{attention_gcn_forward.1} parent=11 // pred_check_branch
        %148 = sbr.rel (%p146) target = $region24
      $region23: #{attention_gcn_forward.1} parent=11 // pred_region
        _
      $region24: #{attention_gcn_forward.1} parent=11 // pred_fallthru
        _
    $region12: #{attention_gcn_forward.1} parent=5 // pred_fallthru
      _
    %p149 = scmp.lt.s32.totalorder %s10, 2
    // Predicated region
    $region25: #{attention_gcn_forward.1} parent=5 // pred_check
      %p150 = pneg %p149
    $region26: #{attention_gcn_forward.1} parent=5 // pred_check_branch
      %152 = sbr.rel (%p150) target = $region28
    $region27: #{attention_gcn_forward.1} parent=5 // pred_region
      // Predicated region
      $region29: #{attention_gcn_forward.1} parent=27 // pred_check
        %p153 = pneg %p30
      $region30: #{attention_gcn_forward.1} parent=27 // pred_check_branch
        %155 = sbr.rel (%p153) target = $region32
      $region31: #{attention_gcn_forward.1} parent=27 // pred_region
        %s156 = smul.u32 38, %s10
        %p157 = scmp.lt.s32.totalorder %s156, 75
        %s158 = scalar_select %p157, %s156, 75
        %s159 = smul.addr %s158, 4
        %s160 = scalar_lea.vmem %s0, %s159
        %s161 = smul.u32 38, %s10
      $region32: #{attention_gcn_forward.1} parent=27 // pred_fallthru
        _
    $region28: #{attention_gcn_forward.1} parent=5 // pred_fallthru
      _
    %p162 = scmp.le.s32.totalorder 1, %s10
    %p163 = scmp.lt.s32.totalorder %s10, 3
    %p164 = pnand %p162, %p163
    %p165 = pneg %p164
    // Predicated region
    $region33: #{attention_gcn_forward.1} parent=5 // pred_check
      _
    $region34: #{attention_gcn_forward.1} parent=5 // pred_check_branch
      %167 = sbr.rel (%p164) target = $region36
    $region35: #{attention_gcn_forward.1} parent=5 // pred_region
      %s168 = ssub.s32 %s10, 1
      %s169 = smul.u32 38, %s15
      %p170 = scmp.lt.s32.totalorder %s169, 75
      %s171 = scalar_select %p170, %s169, 75
      %s172 = smul.addr %s171, 4
      %s173 = scalar_lea.vmem %s0, %s172
      %p174 = pneg %p36
      %p175 = pneg %p33
      %p176 = pneg %p57
      %p177 = pneg %p54
      %p178 = pneg %p78
      %p179 = pneg %p75
      %p180 = pneg %p99
      %p181 = pneg %p96
      %p182 = pneg %p125
      %p183 = pneg %p122
      %p184 = scmp.lt.s32.totalorder %s15, 1
      %s185 = scalar_select %p184, %s15, 1
      %s186 = scalar_lea.vmem %s4, %s185
      %s187 = smul.u32 38, %s15
      %p188 = scmp.lt.s32.totalorder %s187, 75
      %s189 = scalar_select %p188, %s187, 75
      %s190 = smul.addr %s189, 4
      %s191 = scalar_lea.vmem %s0, %s190
      %s192 = smul.u32 38, %s15
      %p193 = scmp.lt.s32.totalorder %s15, 1
      %s194 = scalar_select %p193, %s15, 1
      %s195 = scalar_lea.vmem %s4, %s194
      %v197 = vld [vmem:[%s1] sm:$0xf]
      %v198 = vld [vmem:[%s1 + $0x8] sm:$0xf]
      %v199 = vld [vmem:[%s1 + $0xc] sm:$0xf]
      %v200 = vld [vmem:[%s1 + $0x10] sm:$0xf]
      %v201 = vld [vmem:[%s1 + $0x14] sm:$0xf]
      %v202 = vld [vmem:[%s3] sm:$0xff]
      %v203 = vld [vmem:[%s3 + $0x8] sm:$0xff]
      %v204 = vld [vmem:[%s3 + $0x10] sm:$0x1]
      %v205 = vld [vmem:[%s3 + $0x11] sm:$0x1]
      %v206 = vld [vmem:[%s3 + $0x12] sm:$0x1]
      %v207 = vld [vmem:[%s3 + $0x13] sm:$0x1]
      %v208 = vld [vmem:[%s3 + $0x14] sm:$0x1]
      %v209 = vld [vmem:[%s3 + $0x15] sm:$0x1]
      %v210 = vld [vmem:[%s191] sm:$0xf]
      %v211 = vld [vmem:[%s191 + $0x4] sm:$0xf]
      %v212 = vld [vmem:[%s191 + $0x8] sm:$0xf]
      %v213 = vld [vmem:[%s191 + $0xc] sm:$0xf]
      %v214 = vld [vmem:[%s191 + $0x10] sm:$0xf]
      %v215 = vld [vmem:[%s191 + $0x14] sm:$0xf]
      %v216 = vld [vmem:[%s191 + $0x18] sm:$0xf]
      %v217 = vld [vmem:[%s191 + $0x1c] sm:$0xf]
      %v218 = vld [vmem:[%s191 + $0x20] sm:$0xf]
      %v219 = vld [vmem:[%s191 + $0x24] sm:$0xf]
      %v220 = vld [vmem:[%s191 + $0x28] sm:$0xf]
      %v221 = vld [vmem:[%s191 + $0x2c] sm:$0xf]
      %v222 = vld [vmem:[%s191 + $0x30] sm:$0xf]
      %v223 = vld [vmem:[%s191 + $0x34] sm:$0xf]
      %v224 = vld [vmem:[%s191 + $0x38] sm:$0xf]
      %v225 = vld [vmem:[%s191 + $0x3c] sm:$0xf]
      %v226 = vld [vmem:[%s191 + $0x40] sm:$0xf]
      %v227 = vld [vmem:[%s191 + $0x44] sm:$0xf]
      %v228 = vld [vmem:[%s191 + $0x48] sm:$0xf]
      %v229 = vld [vmem:[%s191 + $0x4c] sm:$0xf]
      %v230 = vld [vmem:[%s191 + $0x50] sm:$0xf]
      %v231 = vld [vmem:[%s191 + $0x54] sm:$0xf]
      %v232 = vld [vmem:[%s191 + $0x58] sm:$0xf]
      %v233 = vld [vmem:[%s191 + $0x5c] sm:$0xf]
      %v234 = vld [vmem:[%s191 + $0x60] sm:$0xf]
      %v235 = vld [vmem:[%s191 + $0x64] sm:$0xf]
      %v236 = vld [vmem:[%s191 + $0x68] sm:$0xf]
      %v237 = vld [vmem:[%s191 + $0x6c] sm:$0xf]
      %v238 = vld [vmem:[%s191 + $0x70] sm:$0xf]
      %v239 = vld [vmem:[%s191 + $0x74] sm:$0xf]
      %v240 = vld [vmem:[%s191 + $0x78] sm:$0xf]
      %v241 = vld [vmem:[%s191 + $0x7c] sm:$0xf]
      %v242 = vld [vmem:[%s191 + $0x80] sm:$0xf]
      %v243 = vld [vmem:[%s191 + $0x84] sm:$0xf]
      %v244 = vld [vmem:[%s191 + $0x88] sm:$0xf]
      %v245 = vld [vmem:[%s191 + $0x8c] sm:$0xf]
      %v246 = vld [vmem:[%s191 + $0x90] sm:$0xf]
      %v247 = vld [vmem:[%s191 + $0x94] sm:$0xf]
      %v248 = vlaneseq
      %v249 = vshrl.u32 %v248, 7
      %v250 = vsub.s32 0, %v249
      %v251 = vrot.slane %v204, %v250
      %v290 = vunpack.c.l.b16 %v210
      %v291 = vunpack.c.l.b16 %v211
      %v292 = vunpack.c.l.b16 %v212
      %v293 = vunpack.c.l.b16 %v213
      %v294 = vunpack.c.l.b16 %v214
      %v295 = vunpack.c.l.b16 %v215
      %v296 = vunpack.c.l.b16 %v216
      %v297 = vunpack.c.l.b16 %v217
      %v298 = vunpack.c.l.b16 %v218
      %v299 = vunpack.c.l.b16 %v219
      %v300 = vunpack.c.l.b16 %v220
      %v301 = vunpack.c.l.b16 %v221
      %v302 = vunpack.c.l.b16 %v222
      %v303 = vunpack.c.l.b16 %v223
      %v304 = vunpack.c.l.b16 %v224
      %v305 = vunpack.c.l.b16 %v225
      %v306 = vunpack.c.l.b16 %v226
      %v307 = vunpack.c.l.b16 %v227
      %v308 = vunpack.c.l.b16 %v228
      %v309 = vunpack.c.l.b16 %v229
      %v310 = vunpack.c.l.b16 %v230
      %v311 = vunpack.c.l.b16 %v231
      %v312 = vunpack.c.l.b16 %v232
      %v313 = vunpack.c.l.b16 %v233
      %v314 = vunpack.c.l.b16 %v234
      %v315 = vunpack.c.l.b16 %v235
      %v316 = vunpack.c.l.b16 %v236
      %v317 = vunpack.c.l.b16 %v237
      %v318 = vunpack.c.l.b16 %v238
      %v319 = vunpack.c.l.b16 %v239
      %v320 = vunpack.c.l.b16 %v240
      %v321 = vunpack.c.l.b16 %v241
      %v322 = vunpack.c.l.b16 %v242
      %v323 = vunpack.c.l.b16 %v243
      %v324 = vunpack.c.l.b16 %v244
      %v325 = vunpack.c.l.b16 %v245
      %v326 = vunpack.c.l.b16 %v246
      %v327 = vunpack.c.l.b16 %v247
      %v328 = vpack.c.b16 %v291, %v290
      %v329 = vpack.c.b16 %v293, %v292
      %v330 = vpack.c.b16 %v295, %v294
      %v331 = vpack.c.b16 %v297, %v296
      %v332 = vpack.c.b16 %v299, %v298
      %v333 = vpack.c.b16 %v301, %v300
      %v334 = vpack.c.b16 %v303, %v302
      %v335 = vpack.c.b16 %v305, %v304
      %v336 = vpack.c.b16 %v307, %v306
      %v337 = vpack.c.b16 %v309, %v308
      %v338 = vpack.c.b16 %v311, %v310
      %v339 = vpack.c.b16 %v313, %v312
      %v340 = vpack.c.b16 %v315, %v314
      %v341 = vpack.c.b16 %v317, %v316
      %v342 = vpack.c.b16 %v319, %v318
      %v343 = vpack.c.b16 %v321, %v320
      %v344 = vpack.c.b16 %v323, %v322
      %v345 = vpack.c.b16 %v325, %v324
      %v346 = vpack.c.b16 %v327, %v326
      %vm347 = vcmask 64512
      %v349 = vsel %vm347, %v328, 0
      %v352 = vsel %vm347, %v329, 0
      %v355 = vsel %vm347, %v330, 0
      %v358 = vsel %vm347, %v331, 0
      %v361 = vsel %vm347, %v332, 0
      %v364 = vsel %vm347, %v333, 0
      %v367 = vsel %vm347, %v334, 0
      %v370 = vsel %vm347, %v335, 0
      %v373 = vsel %vm347, %v336, 0
      %v376 = vsel %vm347, %v337, 0
      %v379 = vsel %vm347, %v338, 0
      %v382 = vsel %vm347, %v339, 0
      %v385 = vsel %vm347, %v340, 0
      %v388 = vsel %vm347, %v341, 0
      %v391 = vsel %vm347, %v342, 0
      %v394 = vsel %vm347, %v343, 0
      %v397 = vsel %vm347, %v344, 0
      %v400 = vsel %vm347, %v345, 0
      %v403 = vsel %vm347, %v346, 0
      %vm405 = vcmask 1043456
      %v407 = vsel %vm405, %v197, 0
      %409 = vmatprep.subr.bf16.mxu0 0
      %410 = vmatpush1.bf16.msra.mxu0 %v407
      %411 = vmatprep.subr.bf16.mxu0 0
      %412 = vmatpush1.bf16.msra.mxu0 0
      %413 = vmatprep.subr.bf16.mxu0 0
      %414 = vmatpush1.bf16.msra.mxu0 0
      %415 = vmatprep.subr.bf16.mxu0 0
      %416 = vmatpush1.bf16.msra.mxu0 0
      %417 = vmatprep.subr.bf16.mxu0 0
      %418 = vmatpush1.bf16.msra.mxu0 0
      %419 = vmatprep.subr.bf16.mxu0 0
      %420 = vmatpush1.bf16.msra.mxu0 0
      %421 = vmatprep.subr.bf16.mxu0 0
      %422 = vmatpush1.bf16.msra.mxu0 0
      %423 = vmatprep.subr.bf16.mxu0 0
      %424 = vmatpush1.bf16.msra.mxu0 0
      %425 = vmatprep.subr.bf16.mxu0 0
      %426 = vmatpush1.bf16.msra.mxu0 0
      %427 = vmatprep.subr.bf16.mxu0 0
      %428 = vmatpush1.bf16.msra.mxu0 0
      %429 = vmatprep.subr.bf16.mxu0 0
      %430 = vmatpush1.bf16.msra.mxu0 0
      %431 = vmatprep.subr.bf16.mxu0 0
      %432 = vmatpush1.bf16.msra.mxu0 0
      %433 = vmatprep.subr.bf16.mxu0 0
      %434 = vmatpush1.bf16.msra.mxu0 0
      %435 = vmatprep.subr.bf16.mxu0 0
      %436 = vmatpush1.bf16.msra.mxu0 0
      %437 = vmatprep.subr.bf16.mxu0 0
      %438 = vmatpush1.bf16.msra.mxu0 0
      %439 = vmatprep.subr.bf16.mxu0 0
      %440 = vmatpush1.bf16.msra.mxu0 0
      %441 = vmatprep.mubr.bf16.mxu0 0
      %442 = vmatmul.mubr.bf16.gmra.mrb[0].mxu0 %v349
      %v443 = vpop.f32.mrb[0].mxu0
      %v444 = vadd.f32 %v251, %v443
      %v445 = vpop.f32.mrb[0].mxu0
      %v446 = vpop.f32.mrb[0].mxu0
      %v447 = vadd.f32 %v251, %v446
      %v448 = vpop.f32.mrb[0].mxu0
      %449 = vmatprep.mubr.bf16.mxu0 0
      %450 = vmatmul.mubr.bf16.gmra.mrb[0].mxu0 %v352
      %v451 = vpop.f32.mrb[0].mxu0
      %v452 = vadd.f32 %v251, %v451
      %v453 = vpop.f32.mrb[0].mxu0
      %v454 = vpop.f32.mrb[0].mxu0
      %v455 = vadd.f32 %v251, %v454
      %v456 = vpop.f32.mrb[0].mxu0
      %457 = vmatprep.mubr.bf16.mxu0 0
      %458 = vmatmul.mubr.bf16.gmra.mrb[0].mxu0 %v355
      %v459 = vpop.f32.mrb[0].mxu0
      %v460 = vadd.f32 %v251, %v459
      %v461 = vpop.f32.mrb[0].mxu0
      %v462 = vpop.f32.mrb[0].mxu0
      %v463 = vadd.f32 %v251, %v462
      %v464 = vpop.f32.mrb[0].mxu0
      %465 = vmatprep.mubr.bf16.mxu0 0
      %466 = vmatmul.mubr.bf16.gmra.mrb[0].mxu0 %v358
      %v467 = vpop.f32.mrb[0].mxu0
      %v468 = vadd.f32 %v251, %v467
      %v469 = vpop.f32.mrb[0].mxu0
      %v470 = vpop.f32.mrb[0].mxu0
      %v471 = vadd.f32 %v251, %v470
      %v472 = vpop.f32.mrb[0].mxu0
      %473 = vmatprep.mubr.bf16.mxu0 0
      %474 = vmatmul.mubr.bf16.gmra.mrb[0].mxu0 %v361
      %v475 = vpop.f32.mrb[0].mxu0
      %v476 = vadd.f32 %v251, %v475
      %v477 = vpop.f32.mrb[0].mxu0
      %v478 = vpop.f32.mrb[0].mxu0
      %v479 = vadd.f32 %v251, %v478
      %v480 = vpop.f32.mrb[0].mxu0
      %481 = vmatprep.mubr.bf16.mxu0 0
      %482 = vmatmul.mubr.bf16.gmra.mrb[0].mxu0 %v364
      %v483 = vpop.f32.mrb[0].mxu0
      %v484 = vadd.f32 %v251, %v483
      %v485 = vpop.f32.mrb[0].mxu0
      %v486 = vpop.f32.mrb[0].mxu0
      %v487 = vadd.f32 %v251, %v486
      %v488 = vpop.f32.mrb[0].mxu0
      %489 = vmatprep.mubr.bf16.mxu0 0
      %490 = vmatmul.mubr.bf16.gmra.mrb[0].mxu0 %v367
      %v491 = vpop.f32.mrb[0].mxu0
      %v492 = vadd.f32 %v251, %v491
      %v493 = vpop.f32.mrb[0].mxu0
      %v494 = vpop.f32.mrb[0].mxu0
      %v495 = vadd.f32 %v251, %v494
      %v496 = vpop.f32.mrb[0].mxu0
      %497 = vmatprep.mubr.bf16.mxu0 0
      %498 = vmatmul.mubr.bf16.gmra.mrb[0].mxu0 %v370
      %v499 = vpop.f32.mrb[0].mxu0
      %v500 = vadd.f32 %v251, %v499
      %v501 = vpop.f32.mrb[0].mxu0
      %v502 = vpop.f32.mrb[0].mxu0
      %v503 = vadd.f32 %v251, %v502
      %v504 = vpop.f32.mrb[0].mxu0
      %505 = vmatprep.mubr.bf16.mxu0 0
      %506 = vmatmul.mubr.bf16.gmra.mrb[0].mxu0 %v373
      %v507 = vpop.f32.mrb[0].mxu0
      %v508 = vadd.f32 %v251, %v507
      %v509 = vpop.f32.mrb[0].mxu0
      %v510 = vpop.f32.mrb[0].mxu0
      %v511 = vadd.f32 %v251, %v510
      %v512 = vpop.f32.mrb[0].mxu0
      %513 = vmatprep.mubr.bf16.mxu0 0
      %514 = vmatmul.mubr.bf16.gmra.mrb[0].mxu0 %v376
      %v515 = vpop.f32.mrb[0].mxu0
      %v516 = vadd.f32 %v251, %v515
      %v517 = vpop.f32.mrb[0].mxu0
      %v518 = vpop.f32.mrb[0].mxu0
      %v519 = vadd.f32 %v251, %v518
      %v520 = vpop.f32.mrb[0].mxu0
      %521 = vmatprep.mubr.bf16.mxu0 0
      %522 = vmatmul.mubr.bf16.gmra.mrb[0].mxu0 %v379
      %v523 = vpop.f32.mrb[0].mxu0
      %v524 = vadd.f32 %v251, %v523
      %v525 = vpop.f32.mrb[0].mxu0
      %v526 = vpop.f32.mrb[0].mxu0
      %v527 = vadd.f32 %v251, %v526
      %v528 = vpop.f32.mrb[0].mxu0
      %529 = vmatprep.mubr.bf16.mxu0 0
      %530 = vmatmul.mubr.bf16.gmra.mrb[0].mxu0 %v382
      %v531 = vpop.f32.mrb[0].mxu0
      %v532 = vadd.f32 %v251, %v531
      %v533 = vpop.f32.mrb[0].mxu0
      %v534 = vpop.f32.mrb[0].mxu0
      %v535 = vadd.f32 %v251, %v534
      %v536 = vpop.f32.mrb[0].mxu0
      %537 = vmatprep.mubr.bf16.mxu0 0
      %538 = vmatmul.mubr.bf16.gmra.mrb[0].mxu0 %v385
      %v539 = vpop.f32.mrb[0].mxu0
      %v540 = vadd.f32 %v251, %v539
      %v541 = vpop.f32.mrb[0].mxu0
      %v542 = vpop.f32.mrb[0].mxu0
      %v543 = vadd.f32 %v251, %v542
      %v544 = vpop.f32.mrb[0].mxu0
      %545 = vmatprep.mubr.bf16.mxu0 0
      %546 = vmatmul.mubr.bf16.gmra.mrb[0].mxu0 %v388
      %v547 = vpop.f32.mrb[0].mxu0
      %v548 = vadd.f32 %v251, %v547
      %v549 = vpop.f32.mrb[0].mxu0
      %v550 = vpop.f32.mrb[0].mxu0
      %v551 = vadd.f32 %v251, %v550
      %v552 = vpop.f32.mrb[0].mxu0
      %553 = vmatprep.mubr.bf16.mxu0 0
      %554 = vmatmul.mubr.bf16.gmra.mrb[0].mxu0 %v391
      %v555 = vpop.f32.mrb[0].mxu0
      %v556 = vadd.f32 %v251, %v555
      %v557 = vpop.f32.mrb[0].mxu0
      %v558 = vpop.f32.mrb[0].mxu0
      %v559 = vadd.f32 %v251, %v558
      %v560 = vpop.f32.mrb[0].mxu0
      %561 = vmatprep.mubr.bf16.mxu0 0
      %562 = vmatmul.mubr.bf16.gmra.mrb[0].mxu0 %v394
      %v563 = vpop.f32.mrb[0].mxu0
      %v564 = vadd.f32 %v251, %v563
      %v565 = vpop.f32.mrb[0].mxu0
      %v566 = vpop.f32.mrb[0].mxu0
      %v567 = vadd.f32 %v251, %v566
      %v568 = vpop.f32.mrb[0].mxu0
      %569 = vmatprep.mubr.bf16.mxu0 0
      %570 = vmatmul.mubr.bf16.gmra.mrb[0].mxu0 %v397
      %v571 = vpop.f32.mrb[0].mxu0
      %v572 = vadd.f32 %v251, %v571
      %v573 = vpop.f32.mrb[0].mxu0
      %v574 = vpop.f32.mrb[0].mxu0
      %v575 = vadd.f32 %v251, %v574
      %v576 = vpop.f32.mrb[0].mxu0
      %577 = vmatprep.mubr.bf16.mxu0 0
      %578 = vmatmul.mubr.bf16.gmra.mrb[0].mxu0 %v400
      %v579 = vpop.f32.mrb[0].mxu0
      %v580 = vadd.f32 %v251, %v579
      %v581 = vpop.f32.mrb[0].mxu0
      %v582 = vpop.f32.mrb[0].mxu0
      %v583 = vadd.f32 %v251, %v582
      %v584 = vpop.f32.mrb[0].mxu0
      %585 = vmatprep.mubr.bf16.mxu0 0
      %586 = vmatmul.mubr.bf16.gmra.mrb[0].mxu0 %v403
      %v587 = vpop.f32.mrb[0].mxu0
      %v588 = vadd.f32 %v251, %v587
      %v589 = vpop.f32.mrb[0].mxu0
      %v590 = vpop.f32.mrb[0].mxu0
      %v591 = vadd.f32 %v251, %v590
      %v592 = vpop.f32.mrb[0].mxu0
      %593 = vdwg.mxu0
      %v594 = vxor.u32 %v444, 2147483648
      %v595 = vxor.u32 %v447, 2147483648
      %v596 = vxor.u32 %v452, 2147483648
      %v597 = vxor.u32 %v455, 2147483648
      %v598 = vxor.u32 %v460, 2147483648
      %v599 = vxor.u32 %v463, 2147483648
      %v600 = vxor.u32 %v468, 2147483648
      %v601 = vxor.u32 %v471, 2147483648
      %v602 = vxor.u32 %v476, 2147483648
      %v603 = vxor.u32 %v479, 2147483648
      %v604 = vxor.u32 %v484, 2147483648
      %v605 = vxor.u32 %v487, 2147483648
      %v606 = vxor.u32 %v492, 2147483648
      %v607 = vxor.u32 %v495, 2147483648
      %v608 = vxor.u32 %v500, 2147483648
      %v609 = vxor.u32 %v503, 2147483648
      %v610 = vxor.u32 %v508, 2147483648
      %v611 = vxor.u32 %v511, 2147483648
      %v612 = vxor.u32 %v516, 2147483648
      %v613 = vxor.u32 %v519, 2147483648
      %v614 = vxor.u32 %v524, 2147483648
      %v615 = vxor.u32 %v527, 2147483648
      %v616 = vxor.u32 %v532, 2147483648
      %v617 = vxor.u32 %v535, 2147483648
      %v618 = vxor.u32 %v540, 2147483648
      %v619 = vxor.u32 %v543, 2147483648
      %v620 = vxor.u32 %v548, 2147483648
      %v621 = vxor.u32 %v551, 2147483648
      %v622 = vxor.u32 %v556, 2147483648
      %v623 = vxor.u32 %v559, 2147483648
      %v624 = vxor.u32 %v564, 2147483648
      %v625 = vxor.u32 %v567, 2147483648
      %v626 = vxor.u32 %v572, 2147483648
      %v627 = vxor.u32 %v575, 2147483648
      %v628 = vxor.u32 %v580, 2147483648
      %v629 = vxor.u32 %v583, 2147483648
      %v630 = vxor.u32 %v588, 2147483648
      %v631 = vxor.u32 %v591, 2147483648
      %v632 = vmul.f32 %v594, 1.442695
      %v633 = vpow.pop %v632
      %v634 = vmul.f32 %v595, 1.442695
      %v635 = vpow.pop %v634
      %v636 = vmul.f32 %v596, 1.442695
      %v637 = vpow.pop %v636
      %v638 = vmul.f32 %v597, 1.442695
      %v639 = vpow.pop %v638
      %v640 = vmul.f32 %v598, 1.442695
      %v641 = vpow.pop %v640
      %v642 = vmul.f32 %v599, 1.442695
      %v643 = vpow.pop %v642
      %v644 = vmul.f32 %v600, 1.442695
      %v645 = vpow.pop %v644
      %v646 = vmul.f32 %v601, 1.442695
      %v647 = vpow.pop %v646
      %v648 = vmul.f32 %v602, 1.442695
      %v649 = vpow.pop %v648
      %v650 = vmul.f32 %v603, 1.442695
      %v651 = vpow.pop %v650
      %v652 = vmul.f32 %v604, 1.442695
      %v653 = vpow.pop %v652
      %v654 = vmul.f32 %v605, 1.442695
      %v655 = vpow.pop %v654
      %v656 = vmul.f32 %v606, 1.442695
      %v657 = vpow.pop %v656
      %v658 = vmul.f32 %v607, 1.442695
      %v659 = vpow.pop %v658
      %v660 = vmul.f32 %v608, 1.442695
      %v661 = vpow.pop %v660
      %v662 = vmul.f32 %v609, 1.442695
      %v663 = vpow.pop %v662
      %v664 = vmul.f32 %v610, 1.442695
      %v665 = vpow.pop %v664
      %v666 = vmul.f32 %v611, 1.442695
      %v667 = vpow.pop %v666
      %v668 = vmul.f32 %v612, 1.442695
      %v669 = vpow.pop %v668
      %v670 = vmul.f32 %v613, 1.442695
      %v671 = vpow.pop %v670
      %v672 = vmul.f32 %v614, 1.442695
      %v673 = vpow.pop %v672
      %v674 = vmul.f32 %v615, 1.442695
      %v675 = vpow.pop %v674
      %v676 = vmul.f32 %v616, 1.442695
      %v677 = vpow.pop %v676
      %v678 = vmul.f32 %v617, 1.442695
      %v679 = vpow.pop %v678
      %v680 = vmul.f32 %v618, 1.442695
      %v681 = vpow.pop %v680
      %v682 = vmul.f32 %v619, 1.442695
      %v683 = vpow.pop %v682
      %v684 = vmul.f32 %v620, 1.442695
      %v685 = vpow.pop %v684
      %v686 = vmul.f32 %v621, 1.442695
      %v687 = vpow.pop %v686
      %v688 = vmul.f32 %v622, 1.442695
      %v689 = vpow.pop %v688
      %v690 = vmul.f32 %v623, 1.442695
      %v691 = vpow.pop %v690
      %v692 = vmul.f32 %v624, 1.442695
      %v693 = vpow.pop %v692
      %v694 = vmul.f32 %v625, 1.442695
      %v695 = vpow.pop %v694
      %v696 = vmul.f32 %v626, 1.442695
      %v697 = vpow.pop %v696
      %v698 = vmul.f32 %v627, 1.442695
      %v699 = vpow.pop %v698
      %v700 = vmul.f32 %v628, 1.442695
      %v701 = vpow.pop %v700
      %v702 = vmul.f32 %v629, 1.442695
      %v703 = vpow.pop %v702
      %v704 = vmul.f32 %v630, 1.442695
      %v705 = vpow.pop %v704
      %v706 = vmul.f32 %v631, 1.442695
      %v707 = vpow.pop %v706
      %v708 = vadd.f32 %v633, 1.0
      %v709 = vadd.f32 %v635, 1.0
      %v710 = vadd.f32 %v637, 1.0
      %v711 = vadd.f32 %v639, 1.0
      %v712 = vadd.f32 %v641, 1.0
      %v713 = vadd.f32 %v643, 1.0
      %v714 = vadd.f32 %v645, 1.0
      %v715 = vadd.f32 %v647, 1.0
      %v716 = vadd.f32 %v649, 1.0
      %v717 = vadd.f32 %v651, 1.0
      %v718 = vadd.f32 %v653, 1.0
      %v719 = vadd.f32 %v655, 1.0
      %v720 = vadd.f32 %v657, 1.0
      %v721 = vadd.f32 %v659, 1.0
      %v722 = vadd.f32 %v661, 1.0
      %v723 = vadd.f32 %v663, 1.0
      %v724 = vadd.f32 %v665, 1.0
      %v725 = vadd.f32 %v667, 1.0
      %v726 = vadd.f32 %v669, 1.0
      %v727 = vadd.f32 %v671, 1.0
      %v728 = vadd.f32 %v673, 1.0
      %v729 = vadd.f32 %v675, 1.0
      %v730 = vadd.f32 %v677, 1.0
      %v731 = vadd.f32 %v679, 1.0
      %v732 = vadd.f32 %v681, 1.0
      %v733 = vadd.f32 %v683, 1.0
      %v734 = vadd.f32 %v685, 1.0
      %v735 = vadd.f32 %v687, 1.0
      %v736 = vadd.f32 %v689, 1.0
      %v737 = vadd.f32 %v691, 1.0
      %v738 = vadd.f32 %v693, 1.0
      %v739 = vadd.f32 %v695, 1.0
      %v740 = vadd.f32 %v697, 1.0
      %v741 = vadd.f32 %v699, 1.0
      %v742 = vadd.f32 %v701, 1.0
      %v743 = vadd.f32 %v703, 1.0
      %v744 = vadd.f32 %v705, 1.0
      %v745 = vadd.f32 %v707, 1.0
      %v746 = vrcp.pop %v708
      %v747 = vmul.f32 1.0, %v746
      %v748 = vrcp.pop %v709
      %v749 = vmul.f32 1.0, %v748
      %v750 = vrcp.pop %v710
      %v751 = vmul.f32 1.0, %v750
      %v752 = vrcp.pop %v711
      %v753 = vmul.f32 1.0, %v752
      %v754 = vrcp.pop %v712
      %v755 = vmul.f32 1.0, %v754
      %v756 = vrcp.pop %v713
      %v757 = vmul.f32 1.0, %v756
      %v758 = vrcp.pop %v714
      %v759 = vmul.f32 1.0, %v758
      %v760 = vrcp.pop %v715
      %v761 = vmul.f32 1.0, %v760
      %v762 = vrcp.pop %v716
      %v763 = vmul.f32 1.0, %v762
      %v764 = vrcp.pop %v717
      %v765 = vmul.f32 1.0, %v764
      %v766 = vrcp.pop %v718
      %v767 = vmul.f32 1.0, %v766
      %v768 = vrcp.pop %v719
      %v769 = vmul.f32 1.0, %v768
      %v770 = vrcp.pop %v720
      %v771 = vmul.f32 1.0, %v770
      %v772 = vrcp.pop %v721
      %v773 = vmul.f32 1.0, %v772
      %v774 = vrcp.pop %v722
      %v775 = vmul.f32 1.0, %v774
      %v776 = vrcp.pop %v723
      %v777 = vmul.f32 1.0, %v776
      %v778 = vrcp.pop %v724
      %v779 = vmul.f32 1.0, %v778
      %v780 = vrcp.pop %v725
      %v781 = vmul.f32 1.0, %v780
      %v782 = vrcp.pop %v726
      %v783 = vmul.f32 1.0, %v782
      %v784 = vrcp.pop %v727
      %v785 = vmul.f32 1.0, %v784
      %v786 = vrcp.pop %v728
      %v787 = vmul.f32 1.0, %v786
      %v788 = vrcp.pop %v729
      %v789 = vmul.f32 1.0, %v788
      %v790 = vrcp.pop %v730
      %v791 = vmul.f32 1.0, %v790
      %v792 = vrcp.pop %v731
      %v793 = vmul.f32 1.0, %v792
      %v794 = vrcp.pop %v732
      %v795 = vmul.f32 1.0, %v794
      %v796 = vrcp.pop %v733
      %v797 = vmul.f32 1.0, %v796
      %v798 = vrcp.pop %v734
      %v799 = vmul.f32 1.0, %v798
      %v800 = vrcp.pop %v735
      %v801 = vmul.f32 1.0, %v800
      %v802 = vrcp.pop %v736
      %v803 = vmul.f32 1.0, %v802
      %v804 = vrcp.pop %v737
      %v805 = vmul.f32 1.0, %v804
      %v806 = vrcp.pop %v738
      %v807 = vmul.f32 1.0, %v806
      %v808 = vrcp.pop %v739
      %v809 = vmul.f32 1.0, %v808
      %v810 = vrcp.pop %v740
      %v811 = vmul.f32 1.0, %v810
      %v812 = vrcp.pop %v741
      %v813 = vmul.f32 1.0, %v812
      %v814 = vrcp.pop %v742
      %v815 = vmul.f32 1.0, %v814
      %v816 = vrcp.pop %v743
      %v817 = vmul.f32 1.0, %v816
      %v818 = vrcp.pop %v744
      %v819 = vmul.f32 1.0, %v818
      %v820 = vrcp.pop %v745
      %v821 = vmul.f32 1.0, %v820
      %860 = vrot.lane.b32.xlu0 %v747, 96
      %v861 = vpop.permute.xlu0 %860
      %862 = vrot.lane.b32.xlu0 %v749, 96
      %v863 = vpop.permute.xlu0 %862
      %864 = vrot.lane.b32.xlu0 %v751, 96
      %v865 = vpop.permute.xlu0 %864
      %866 = vrot.lane.b32.xlu0 %v753, 96
      %v867 = vpop.permute.xlu0 %866
      %868 = vrot.lane.b32.xlu0 %v755, 96
      %v869 = vpop.permute.xlu0 %868
      %870 = vrot.lane.b32.xlu0 %v757, 96
      %v871 = vpop.permute.xlu0 %870
      %872 = vrot.lane.b32.xlu0 %v759, 96
      %v873 = vpop.permute.xlu0 %872
      %874 = vrot.lane.b32.xlu0 %v761, 96
      %v875 = vpop.permute.xlu0 %874
      %876 = vrot.lane.b32.xlu0 %v763, 96
      %v877 = vpop.permute.xlu0 %876
      %878 = vrot.lane.b32.xlu0 %v765, 96
      %v879 = vpop.permute.xlu0 %878
      %880 = vrot.lane.b32.xlu0 %v767, 96
      %v881 = vpop.permute.xlu0 %880
      %882 = vrot.lane.b32.xlu0 %v769, 96
      %v883 = vpop.permute.xlu0 %882
      %884 = vrot.lane.b32.xlu0 %v771, 96
      %v885 = vpop.permute.xlu0 %884
      %886 = vrot.lane.b32.xlu0 %v773, 96
      %v887 = vpop.permute.xlu0 %886
      %888 = vrot.lane.b32.xlu0 %v775, 96
      %v889 = vpop.permute.xlu0 %888
      %890 = vrot.lane.b32.xlu0 %v777, 96
      %v891 = vpop.permute.xlu0 %890
      %892 = vrot.lane.b32.xlu0 %v779, 96
      %v893 = vpop.permute.xlu0 %892
      %894 = vrot.lane.b32.xlu0 %v781, 96
      %v895 = vpop.permute.xlu0 %894
      %896 = vrot.lane.b32.xlu0 %v783, 96
      %v897 = vpop.permute.xlu0 %896
      %898 = vrot.lane.b32.xlu0 %v785, 96
      %v899 = vpop.permute.xlu0 %898
      %900 = vrot.lane.b32.xlu0 %v787, 96
      %v901 = vpop.permute.xlu0 %900
      %902 = vrot.lane.b32.xlu0 %v789, 96
      %v903 = vpop.permute.xlu0 %902
      %904 = vrot.lane.b32.xlu0 %v791, 96
      %v905 = vpop.permute.xlu0 %904
      %906 = vrot.lane.b32.xlu0 %v793, 96
      %v907 = vpop.permute.xlu0 %906
      %908 = vrot.lane.b32.xlu0 %v795, 96
      %v909 = vpop.permute.xlu0 %908
      %910 = vrot.lane.b32.xlu0 %v797, 96
      %v911 = vpop.permute.xlu0 %910
      %912 = vrot.lane.b32.xlu0 %v799, 96
      %v913 = vpop.permute.xlu0 %912
      %914 = vrot.lane.b32.xlu0 %v801, 96
      %v915 = vpop.permute.xlu0 %914
      %916 = vrot.lane.b32.xlu0 %v803, 96
      %v917 = vpop.permute.xlu0 %916
      %918 = vrot.lane.b32.xlu0 %v805, 96
      %v919 = vpop.permute.xlu0 %918
      %920 = vrot.lane.b32.xlu0 %v807, 96
      %v921 = vpop.permute.xlu0 %920
      %922 = vrot.lane.b32.xlu0 %v809, 96
      %v923 = vpop.permute.xlu0 %922
      %924 = vrot.lane.b32.xlu0 %v811, 96
      %v925 = vpop.permute.xlu0 %924
      %926 = vrot.lane.b32.xlu0 %v813, 96
      %v927 = vpop.permute.xlu0 %926
      %928 = vrot.lane.b32.xlu0 %v815, 96
      %v929 = vpop.permute.xlu0 %928
      %930 = vrot.lane.b32.xlu0 %v817, 96
      %v931 = vpop.permute.xlu0 %930
      %932 = vrot.lane.b32.xlu0 %v819, 96
      %v933 = vpop.permute.xlu0 %932
      %934 = vrot.lane.b32.xlu0 %v821, 96
      %v935 = vpop.permute.xlu0 %934
      %v974 = vmul.f32 %v444, %v861
      %v975 = vmul.f32 %v447, %v863
      %v976 = vmul.f32 %v452, %v865
      %v977 = vmul.f32 %v455, %v867
      %v978 = vmul.f32 %v460, %v869
      %v979 = vmul.f32 %v463, %v871
      %v980 = vmul.f32 %v468, %v873
      %v981 = vmul.f32 %v471, %v875
      %v982 = vmul.f32 %v476, %v877
      %v983 = vmul.f32 %v479, %v879
      %v984 = vmul.f32 %v484, %v881
      %v985 = vmul.f32 %v487, %v883
      %v986 = vmul.f32 %v492, %v885
      %v987 = vmul.f32 %v495, %v887
      %v988 = vmul.f32 %v500, %v889
      %v989 = vmul.f32 %v503, %v891
      %v990 = vmul.f32 %v508, %v893
      %v991 = vmul.f32 %v511, %v895
      %v992 = vmul.f32 %v516, %v897
      %v993 = vmul.f32 %v519, %v899
      %v994 = vmul.f32 %v524, %v901
      %v995 = vmul.f32 %v527, %v903
      %v996 = vmul.f32 %v532, %v905
      %v997 = vmul.f32 %v535, %v907
      %v998 = vmul.f32 %v540, %v909
      %v999 = vmul.f32 %v543, %v911
      %v1000 = vmul.f32 %v548, %v913
      %v1001 = vmul.f32 %v551, %v915
      %v1002 = vmul.f32 %v556, %v917
      %v1003 = vmul.f32 %v559, %v919
      %v1004 = vmul.f32 %v564, %v921
      %v1005 = vmul.f32 %v567, %v923
      %v1006 = vmul.f32 %v572, %v925
      %v1007 = vmul.f32 %v575, %v927
      %v1008 = vmul.f32 %v580, %v929
      %v1009 = vmul.f32 %v583, %v931
      %v1010 = vmul.f32 %v588, %v933
      %v1011 = vmul.f32 %v591, %v935
      %1050 = vrot.lane.b32.xlu0 %v444, 64
      %v1051 = vpop.permute.xlu0 %1050
      %1052 = vrot.lane.b32.xlu0 %v447, 64
      %v1053 = vpop.permute.xlu0 %1052
      %1054 = vrot.lane.b32.xlu0 %v452, 64
      %v1055 = vpop.permute.xlu0 %1054
      %1056 = vrot.lane.b32.xlu0 %v455, 64
      %v1057 = vpop.permute.xlu0 %1056
      %1058 = vrot.lane.b32.xlu0 %v460, 64
      %v1059 = vpop.permute.xlu0 %1058
      %1060 = vrot.lane.b32.xlu0 %v463, 64
      %v1061 = vpop.permute.xlu0 %1060
      %1062 = vrot.lane.b32.xlu0 %v468, 64
      %v1063 = vpop.permute.xlu0 %1062
      %1064 = vrot.lane.b32.xlu0 %v471, 64
      %v1065 = vpop.permute.xlu0 %1064
      %1066 = vrot.lane.b32.xlu0 %v476, 64
      %v1067 = vpop.permute.xlu0 %1066
      %1068 = vrot.lane.b32.xlu0 %v479, 64
      %v1069 = vpop.permute.xlu0 %1068
      %1070 = vrot.lane.b32.xlu0 %v484, 64
      %v1071 = vpop.permute.xlu0 %1070
      %1072 = vrot.lane.b32.xlu0 %v487, 64
      %v1073 = vpop.permute.xlu0 %1072
      %1074 = vrot.lane.b32.xlu0 %v492, 64
      %v1075 = vpop.permute.xlu0 %1074
      %1076 = vrot.lane.b32.xlu0 %v495, 64
      %v1077 = vpop.permute.xlu0 %1076
      %1078 = vrot.lane.b32.xlu0 %v500, 64
      %v1079 = vpop.permute.xlu0 %1078
      %1080 = vrot.lane.b32.xlu0 %v503, 64
      %v1081 = vpop.permute.xlu0 %1080
      %1082 = vrot.lane.b32.xlu0 %v508, 64
      %v1083 = vpop.permute.xlu0 %1082
      %1084 = vrot.lane.b32.xlu0 %v511, 64
      %v1085 = vpop.permute.xlu0 %1084
      %1086 = vrot.lane.b32.xlu0 %v516, 64
      %v1087 = vpop.permute.xlu0 %1086
      %1088 = vrot.lane.b32.xlu0 %v519, 64
      %v1089 = vpop.permute.xlu0 %1088
      %1090 = vrot.lane.b32.xlu0 %v524, 64
      %v1091 = vpop.permute.xlu0 %1090
      %1092 = vrot.lane.b32.xlu0 %v527, 64
      %v1093 = vpop.permute.xlu0 %1092
      %1094 = vrot.lane.b32.xlu0 %v532, 64
      %v1095 = vpop.permute.xlu0 %1094
      %1096 = vrot.lane.b32.xlu0 %v535, 64
      %v1097 = vpop.permute.xlu0 %1096
      %1098 = vrot.lane.b32.xlu0 %v540, 64
      %v1099 = vpop.permute.xlu0 %1098
      %1100 = vrot.lane.b32.xlu0 %v543, 64
      %v1101 = vpop.permute.xlu0 %1100
      %1102 = vrot.lane.b32.xlu0 %v548, 64
      %v1103 = vpop.permute.xlu0 %1102
      %1104 = vrot.lane.b32.xlu0 %v551, 64
      %v1105 = vpop.permute.xlu0 %1104
      %1106 = vrot.lane.b32.xlu0 %v556, 64
      %v1107 = vpop.permute.xlu0 %1106
      %1108 = vrot.lane.b32.xlu0 %v559, 64
      %v1109 = vpop.permute.xlu0 %1108
      %1110 = vrot.lane.b32.xlu0 %v564, 64
      %v1111 = vpop.permute.xlu0 %1110
      %1112 = vrot.lane.b32.xlu0 %v567, 64
      %v1113 = vpop.permute.xlu0 %1112
      %1114 = vrot.lane.b32.xlu0 %v572, 64
      %v1115 = vpop.permute.xlu0 %1114
      %1116 = vrot.lane.b32.xlu0 %v575, 64
      %v1117 = vpop.permute.xlu0 %1116
      %1118 = vrot.lane.b32.xlu0 %v580, 64
      %v1119 = vpop.permute.xlu0 %1118
      %1120 = vrot.lane.b32.xlu0 %v583, 64
      %v1121 = vpop.permute.xlu0 %1120
      %1122 = vrot.lane.b32.xlu0 %v588, 64
      %v1123 = vpop.permute.xlu0 %1122
      %1124 = vrot.lane.b32.xlu0 %v591, 64
      %v1125 = vpop.permute.xlu0 %1124
      %v1164 = vadd.f32 %v974, %v1051
      %v1165 = vadd.f32 %v975, %v1053
      %v1166 = vadd.f32 %v976, %v1055
      %v1167 = vadd.f32 %v977, %v1057
      %v1168 = vadd.f32 %v978, %v1059
      %v1169 = vadd.f32 %v979, %v1061
      %v1170 = vadd.f32 %v980, %v1063
      %v1171 = vadd.f32 %v981, %v1065
      %v1172 = vadd.f32 %v982, %v1067
      %v1173 = vadd.f32 %v983, %v1069
      %v1174 = vadd.f32 %v984, %v1071
      %v1175 = vadd.f32 %v985, %v1073
      %v1176 = vadd.f32 %v986, %v1075
      %v1177 = vadd.f32 %v987, %v1077
      %v1178 = vadd.f32 %v988, %v1079
      %v1179 = vadd.f32 %v989, %v1081
      %v1180 = vadd.f32 %v990, %v1083
      %v1181 = vadd.f32 %v991, %v1085
      %v1182 = vadd.f32 %v992, %v1087
      %v1183 = vadd.f32 %v993, %v1089
      %v1184 = vadd.f32 %v994, %v1091
      %v1185 = vadd.f32 %v995, %v1093
      %v1186 = vadd.f32 %v996, %v1095
      %v1187 = vadd.f32 %v997, %v1097
      %v1188 = vadd.f32 %v998, %v1099
      %v1189 = vadd.f32 %v999, %v1101
      %v1190 = vadd.f32 %v1000, %v1103
      %v1191 = vadd.f32 %v1001, %v1105
      %v1192 = vadd.f32 %v1002, %v1107
      %v1193 = vadd.f32 %v1003, %v1109
      %v1194 = vadd.f32 %v1004, %v1111
      %v1195 = vadd.f32 %v1005, %v1113
      %v1196 = vadd.f32 %v1006, %v1115
      %v1197 = vadd.f32 %v1007, %v1117
      %v1198 = vadd.f32 %v1008, %v1119
      %v1199 = vadd.f32 %v1009, %v1121
      %v1200 = vadd.f32 %v1010, %v1123
      %v1201 = vadd.f32 %v1011, %v1125
      %v1202 = vmax.f32 %v1164, 0.0
      %v1203 = vmax.f32 %v1165, 0.0
      %v1204 = vmax.f32 %v1166, 0.0
      %v1205 = vmax.f32 %v1167, 0.0
      %v1206 = vmax.f32 %v1168, 0.0
      %v1207 = vmax.f32 %v1169, 0.0
      %v1208 = vmax.f32 %v1170, 0.0
      %v1209 = vmax.f32 %v1171, 0.0
      %v1210 = vmax.f32 %v1172, 0.0
      %v1211 = vmax.f32 %v1173, 0.0
      %v1212 = vmax.f32 %v1174, 0.0
      %v1213 = vmax.f32 %v1175, 0.0
      %v1214 = vmax.f32 %v1176, 0.0
      %v1215 = vmax.f32 %v1177, 0.0
      %v1216 = vmax.f32 %v1178, 0.0
      %v1217 = vmax.f32 %v1179, 0.0
      %v1218 = vmax.f32 %v1180, 0.0
      %v1219 = vmax.f32 %v1181, 0.0
      %v1220 = vmax.f32 %v1182, 0.0
      %v1221 = vmax.f32 %v1183, 0.0
      %v1222 = vmax.f32 %v1184, 0.0
      %v1223 = vmax.f32 %v1185, 0.0
      %v1224 = vmax.f32 %v1186, 0.0
      %v1225 = vmax.f32 %v1187, 0.0
      %v1226 = vmax.f32 %v1188, 0.0
      %v1227 = vmax.f32 %v1189, 0.0
      %v1228 = vmax.f32 %v1190, 0.0
      %v1229 = vmax.f32 %v1191, 0.0
      %v1230 = vmax.f32 %v1192, 0.0
      %v1231 = vmax.f32 %v1193, 0.0
      %v1232 = vmax.f32 %v1194, 0.0
      %v1233 = vmax.f32 %v1195, 0.0
      %v1234 = vmax.f32 %v1196, 0.0
      %v1235 = vmax.f32 %v1197, 0.0
      %v1236 = vmax.f32 %v1198, 0.0
      %v1237 = vmax.f32 %v1199, 0.0
      %v1238 = vmax.f32 %v1200, 0.0
      %v1239 = vmax.f32 %v1201, 0.0
      %v1240 = vpack.c.bf16 %v1203, %v1202
      %v1241 = vpack.c.bf16 %v1205, %v1204
      %v1242 = vpack.c.bf16 %v1207, %v1206
      %v1243 = vpack.c.bf16 %v1209, %v1208
      %v1244 = vpack.c.bf16 %v1211, %v1210
      %v1245 = vpack.c.bf16 %v1213, %v1212
      %v1246 = vpack.c.bf16 %v1215, %v1214
      %v1247 = vpack.c.bf16 %v1217, %v1216
      %v1248 = vpack.c.bf16 %v1219, %v1218
      %v1249 = vpack.c.bf16 %v1221, %v1220
      %v1250 = vpack.c.bf16 %v1223, %v1222
      %v1251 = vpack.c.bf16 %v1225, %v1224
      %v1252 = vpack.c.bf16 %v1227, %v1226
      %v1253 = vpack.c.bf16 %v1229, %v1228
      %v1254 = vpack.c.bf16 %v1231, %v1230
      %v1255 = vpack.c.bf16 %v1233, %v1232
      %v1256 = vpack.c.bf16 %v1235, %v1234
      %v1257 = vpack.c.bf16 %v1237, %v1236
      %v1258 = vpack.c.bf16 %v1239, %v1238
      %v1259 = vlaneseq
      %v1260 = vshrl.u32 %v1259, 7
      %v1261 = vsub.s32 0, %v1260
      %v1262 = vrot.slane %v205, %v1261
      %v1267 = vunpack.c.l.b16 %v198
      %v1268 = vunpack.c.l.b16 %v199
      %v1269 = vunpack.c.l.b16 %v200
      %v1270 = vunpack.c.l.b16 %v201
      %v1271 = vpack.c.b16 %v1268, %v1267
      %v1272 = vpack.c.b16 %v1270, %v1269
      %vm1275 = vcmask 261120
      %v1277 = vsel %vm1275, %v1240, 0
      %v1280 = vsel %vm1275, %v1241, 0
      %v1283 = vsel %vm1275, %v1242, 0
      %v1286 = vsel %vm1275, %v1243, 0
      %v1289 = vsel %vm1275, %v1244, 0
      %v1292 = vsel %vm1275, %v1245, 0
      %v1295 = vsel %vm1275, %v1246, 0
      %v1298 = vsel %vm1275, %v1247, 0
      %v1301 = vsel %vm1275, %v1248, 0
      %v1304 = vsel %vm1275, %v1249, 0
      %v1307 = vsel %vm1275, %v1250, 0
      %v1310 = vsel %vm1275, %v1251, 0
      %v1313 = vsel %vm1275, %v1252, 0
      %v1316 = vsel %vm1275, %v1253, 0
      %v1319 = vsel %vm1275, %v1254, 0
      %v1322 = vsel %vm1275, %v1255, 0
      %v1325 = vsel %vm1275, %v1256, 0
      %v1328 = vsel %vm1275, %v1257, 0
      %v1331 = vsel %vm1275, %v1258, 0
      %1333 = vmatprep.subr.bf16.mxu0 0
      %1334 = vmatpush1.bf16.msra.mxu0 %v1271
      %1335 = vmatprep.subr.bf16.mxu0 0
      %1336 = vmatpush1.bf16.msra.mxu0 %v1272
      %1337 = vmatprep.subr.bf16.mxu0 0
      %1338 = vmatpush1.bf16.msra.mxu0 0
      %1339 = vmatprep.subr.bf16.mxu0 0
      %1340 = vmatpush1.bf16.msra.mxu0 0
      %1341 = vmatprep.subr.bf16.mxu0 0
      %1342 = vmatpush1.bf16.msra.mxu0 0
      %1343 = vmatprep.subr.bf16.mxu0 0
      %1344 = vmatpush1.bf16.msra.mxu0 0
      %1345 = vmatprep.subr.bf16.mxu0 0
      %1346 = vmatpush1.bf16.msra.mxu0 0
      %1347 = vmatprep.subr.bf16.mxu0 0
      %1348 = vmatpush1.bf16.msra.mxu0 0
      %1349 = vmatprep.subr.bf16.mxu0 0
      %1350 = vmatpush1.bf16.msra.mxu0 0
      %1351 = vmatprep.subr.bf16.mxu0 0
      %1352 = vmatpush1.bf16.msra.mxu0 0
      %1353 = vmatprep.subr.bf16.mxu0 0
      %1354 = vmatpush1.bf16.msra.mxu0 0
      %1355 = vmatprep.subr.bf16.mxu0 0
      %1356 = vmatpush1.bf16.msra.mxu0 0
      %1357 = vmatprep.subr.bf16.mxu0 0
      %1358 = vmatpush1.bf16.msra.mxu0 0
      %1359 = vmatprep.subr.bf16.mxu0 0
      %1360 = vmatpush1.bf16.msra.mxu0 0
      %1361 = vmatprep.subr.bf16.mxu0 0
      %1362 = vmatpush1.bf16.msra.mxu0 0
      %1363 = vmatprep.subr.bf16.mxu0 0
      %1364 = vmatpush1.bf16.msra.mxu0 0
      %1365 = vmatprep.mubr.bf16.mxu0 0
      %1366 = vmatmul.mubr.bf16.gmra.mrb[0].mxu0 %v1277
      %v1367 = vpop.f32.mrb[0].mxu0
      %v1368 = vadd.f32 %v1262, %v1367
      %v1369 = vpop.f32.mrb[0].mxu0
      %v1370 = vpop.f32.mrb[0].mxu0
      %v1371 = vadd.f32 %v1262, %v1370
      %v1372 = vpop.f32.mrb[0].mxu0
      %1373 = vmatprep.mubr.bf16.mxu0 0
      %1374 = vmatmul.mubr.bf16.gmra.mrb[0].mxu0 %v1280
      %v1375 = vpop.f32.mrb[0].mxu0
      %v1376 = vadd.f32 %v1262, %v1375
      %v1377 = vpop.f32.mrb[0].mxu0
      %v1378 = vpop.f32.mrb[0].mxu0
      %v1379 = vadd.f32 %v1262, %v1378
      %v1380 = vpop.f32.mrb[0].mxu0
      %1381 = vmatprep.mubr.bf16.mxu0 0
      %1382 = vmatmul.mubr.bf16.gmra.mrb[0].mxu0 %v1283
      %v1383 = vpop.f32.mrb[0].mxu0
      %v1384 = vadd.f32 %v1262, %v1383
      %v1385 = vpop.f32.mrb[0].mxu0
      %v1386 = vpop.f32.mrb[0].mxu0
      %v1387 = vadd.f32 %v1262, %v1386
      %v1388 = vpop.f32.mrb[0].mxu0
      %1389 = vmatprep.mubr.bf16.mxu0 0
      %1390 = vmatmul.mubr.bf16.gmra.mrb[0].mxu0 %v1286
      %v1391 = vpop.f32.mrb[0].mxu0
      %v1392 = vadd.f32 %v1262, %v1391
      %v1393 = vpop.f32.mrb[0].mxu0
      %v1394 = vpop.f32.mrb[0].mxu0
      %v1395 = vadd.f32 %v1262, %v1394
      %v1396 = vpop.f32.mrb[0].mxu0
      %1397 = vmatprep.mubr.bf16.mxu0 0
      %1398 = vmatmul.mubr.bf16.gmra.mrb[0].mxu0 %v1289
      %v1399 = vpop.f32.mrb[0].mxu0
      %v1400 = vadd.f32 %v1262, %v1399
      %v1401 = vpop.f32.mrb[0].mxu0
      %v1402 = vpop.f32.mrb[0].mxu0
      %v1403 = vadd.f32 %v1262, %v1402
      %v1404 = vpop.f32.mrb[0].mxu0
      %1405 = vmatprep.mubr.bf16.mxu0 0
      %1406 = vmatmul.mubr.bf16.gmra.mrb[0].mxu0 %v1292
      %v1407 = vpop.f32.mrb[0].mxu0
      %v1408 = vadd.f32 %v1262, %v1407
      %v1409 = vpop.f32.mrb[0].mxu0
      %v1410 = vpop.f32.mrb[0].mxu0
      %v1411 = vadd.f32 %v1262, %v1410
      %v1412 = vpop.f32.mrb[0].mxu0
      %1413 = vmatprep.mubr.bf16.mxu0 0
      %1414 = vmatmul.mubr.bf16.gmra.mrb[0].mxu0 %v1295
      %v1415 = vpop.f32.mrb[0].mxu0
      %v1416 = vadd.f32 %v1262, %v1415
      %v1417 = vpop.f32.mrb[0].mxu0
      %v1418 = vpop.f32.mrb[0].mxu0
      %v1419 = vadd.f32 %v1262, %v1418
      %v1420 = vpop.f32.mrb[0].mxu0
      %1421 = vmatprep.mubr.bf16.mxu0 0
      %1422 = vmatmul.mubr.bf16.gmra.mrb[0].mxu0 %v1298
      %v1423 = vpop.f32.mrb[0].mxu0
      %v1424 = vadd.f32 %v1262, %v1423
      %v1425 = vpop.f32.mrb[0].mxu0
      %v1426 = vpop.f32.mrb[0].mxu0
      %v1427 = vadd.f32 %v1262, %v1426
      %v1428 = vpop.f32.mrb[0].mxu0
      %1429 = vmatprep.mubr.bf16.mxu0 0
      %1430 = vmatmul.mubr.bf16.gmra.mrb[0].mxu0 %v1301
      %v1431 = vpop.f32.mrb[0].mxu0
      %v1432 = vadd.f32 %v1262, %v1431
      %v1433 = vpop.f32.mrb[0].mxu0
      %v1434 = vpop.f32.mrb[0].mxu0
      %v1435 = vadd.f32 %v1262, %v1434
      %v1436 = vpop.f32.mrb[0].mxu0
      %1437 = vmatprep.mubr.bf16.mxu0 0
      %1438 = vmatmul.mubr.bf16.gmra.mrb[0].mxu0 %v1304
      %v1439 = vpop.f32.mrb[0].mxu0
      %v1440 = vadd.f32 %v1262, %v1439
      %v1441 = vpop.f32.mrb[0].mxu0
      %v1442 = vpop.f32.mrb[0].mxu0
      %v1443 = vadd.f32 %v1262, %v1442
      %v1444 = vpop.f32.mrb[0].mxu0
      %1445 = vmatprep.mubr.bf16.mxu0 0
      %1446 = vmatmul.mubr.bf16.gmra.mrb[0].mxu0 %v1307
      %v1447 = vpop.f32.mrb[0].mxu0
      %v1448 = vadd.f32 %v1262, %v1447
      %v1449 = vpop.f32.mrb[0].mxu0
      %v1450 = vpop.f32.mrb[0].mxu0
      %v1451 = vadd.f32 %v1262, %v1450
      %v1452 = vpop.f32.mrb[0].mxu0
      %1453 = vmatprep.mubr.bf16.mxu0 0
      %1454 = vmatmul.mubr.bf16.gmra.mrb[0].mxu0 %v1310
      %v1455 = vpop.f32.mrb[0].mxu0
      %v1456 = vadd.f32 %v1262, %v1455
      %v1457 = vpop.f32.mrb[0].mxu0
      %v1458 = vpop.f32.mrb[0].mxu0
      %v1459 = vadd.f32 %v1262, %v1458
      %v1460 = vpop.f32.mrb[0].mxu0
      %1461 = vmatprep.mubr.bf16.mxu0 0
      %1462 = vmatmul.mubr.bf16.gmra.mrb[0].mxu0 %v1313
      %v1463 = vpop.f32.mrb[0].mxu0
      %v1464 = vadd.f32 %v1262, %v1463
      %v1465 = vpop.f32.mrb[0].mxu0
      %v1466 = vpop.f32.mrb[0].mxu0
      %v1467 = vadd.f32 %v1262, %v1466
      %v1468 = vpop.f32.mrb[0].mxu0
      %1469 = vmatprep.mubr.bf16.mxu0 0
      %1470 = vmatmul.mubr.bf16.gmra.mrb[0].mxu0 %v1316
      %v1471 = vpop.f32.mrb[0].mxu0
      %v1472 = vadd.f32 %v1262, %v1471
      %v1473 = vpop.f32.mrb[0].mxu0
      %v1474 = vpop.f32.mrb[0].mxu0
      %v1475 = vadd.f32 %v1262, %v1474
      %v1476 = vpop.f32.mrb[0].mxu0
      %1477 = vmatprep.mubr.bf16.mxu0 0
      %1478 = vmatmul.mubr.bf16.gmra.mrb[0].mxu0 %v1319
      %v1479 = vpop.f32.mrb[0].mxu0
      %v1480 = vadd.f32 %v1262, %v1479
      %v1481 = vpop.f32.mrb[0].mxu0
      %v1482 = vpop.f32.mrb[0].mxu0
      %v1483 = vadd.f32 %v1262, %v1482
      %v1484 = vpop.f32.mrb[0].mxu0
      %1485 = vmatprep.mubr.bf16.mxu0 0
      %1486 = vmatmul.mubr.bf16.gmra.mrb[0].mxu0 %v1322
      %v1487 = vpop.f32.mrb[0].mxu0
      %v1488 = vadd.f32 %v1262, %v1487
      %v1489 = vpop.f32.mrb[0].mxu0
      %v1490 = vpop.f32.mrb[0].mxu0
      %v1491 = vadd.f32 %v1262, %v1490
      %v1492 = vpop.f32.mrb[0].mxu0
      %1493 = vmatprep.mubr.bf16.mxu0 0
      %1494 = vmatmul.mubr.bf16.gmra.mrb[0].mxu0 %v1325
      %v1495 = vpop.f32.mrb[0].mxu0
      %v1496 = vadd.f32 %v1262, %v1495
      %v1497 = vpop.f32.mrb[0].mxu0
      %v1498 = vpop.f32.mrb[0].mxu0
      %v1499 = vadd.f32 %v1262, %v1498
      %v1500 = vpop.f32.mrb[0].mxu0
      %1501 = vmatprep.mubr.bf16.mxu0 0
      %1502 = vmatmul.mubr.bf16.gmra.mrb[0].mxu0 %v1328
      %v1503 = vpop.f32.mrb[0].mxu0
      %v1504 = vadd.f32 %v1262, %v1503
      %v1505 = vpop.f32.mrb[0].mxu0
      %v1506 = vpop.f32.mrb[0].mxu0
      %v1507 = vadd.f32 %v1262, %v1506
      %v1508 = vpop.f32.mrb[0].mxu0
      %1509 = vmatprep.mubr.bf16.mxu0 0
      %1510 = vmatmul.mubr.bf16.gmra.mrb[0].mxu0 %v1331
      %v1511 = vpop.f32.mrb[0].mxu0
      %v1512 = vadd.f32 %v1262, %v1511
      %v1513 = vpop.f32.mrb[0].mxu0
      %v1514 = vpop.f32.mrb[0].mxu0
      %v1515 = vadd.f32 %v1262, %v1514
      %v1516 = vpop.f32.mrb[0].mxu0
      %1517 = vdwg.mxu0
      %v1518 = vmax.f32 %v1368, 0.0
      %v1519 = vmax.f32 %v1371, 0.0
      %v1520 = vmax.f32 %v1376, 0.0
      %v1521 = vmax.f32 %v1379, 0.0
      %v1522 = vmax.f32 %v1384, 0.0
      %v1523 = vmax.f32 %v1387, 0.0
      %v1524 = vmax.f32 %v1392, 0.0
      %v1525 = vmax.f32 %v1395, 0.0
      %v1526 = vmax.f32 %v1400, 0.0
      %v1527 = vmax.f32 %v1403, 0.0
      %v1528 = vmax.f32 %v1408, 0.0
      %v1529 = vmax.f32 %v1411, 0.0
      %v1530 = vmax.f32 %v1416, 0.0
      %v1531 = vmax.f32 %v1419, 0.0
      %v1532 = vmax.f32 %v1424, 0.0
      %v1533 = vmax.f32 %v1427, 0.0
      %v1534 = vmax.f32 %v1432, 0.0
      %v1535 = vmax.f32 %v1435, 0.0
      %v1536 = vmax.f32 %v1440, 0.0
      %v1537 = vmax.f32 %v1443, 0.0
      %v1538 = vmax.f32 %v1448, 0.0
      %v1539 = vmax.f32 %v1451, 0.0
      %v1540 = vmax.f32 %v1456, 0.0
      %v1541 = vmax.f32 %v1459, 0.0
      %v1542 = vmax.f32 %v1464, 0.0
      %v1543 = vmax.f32 %v1467, 0.0
      %v1544 = vmax.f32 %v1472, 0.0
      %v1545 = vmax.f32 %v1475, 0.0
      %v1546 = vmax.f32 %v1480, 0.0
      %v1547 = vmax.f32 %v1483, 0.0
      %v1548 = vmax.f32 %v1488, 0.0
      %v1549 = vmax.f32 %v1491, 0.0
      %v1550 = vmax.f32 %v1496, 0.0
      %v1551 = vmax.f32 %v1499, 0.0
      %v1552 = vmax.f32 %v1504, 0.0
      %v1553 = vmax.f32 %v1507, 0.0
      %v1554 = vmax.f32 %v1512, 0.0
      %v1555 = vmax.f32 %v1515, 0.0
      %v1556 = vpack.c.bf16 %v1519, %v1518
      %v1557 = vpack.c.bf16 %v1521, %v1520
      %v1558 = vpack.c.bf16 %v1523, %v1522
      %v1559 = vpack.c.bf16 %v1525, %v1524
      %v1560 = vpack.c.bf16 %v1527, %v1526
      %v1561 = vpack.c.bf16 %v1529, %v1528
      %v1562 = vpack.c.bf16 %v1531, %v1530
      %v1563 = vpack.c.bf16 %v1533, %v1532
      %v1564 = vpack.c.bf16 %v1535, %v1534
      %v1565 = vpack.c.bf16 %v1537, %v1536
      %v1566 = vpack.c.bf16 %v1539, %v1538
      %v1567 = vpack.c.bf16 %v1541, %v1540
      %v1568 = vpack.c.bf16 %v1543, %v1542
      %v1569 = vpack.c.bf16 %v1545, %v1544
      %v1570 = vpack.c.bf16 %v1547, %v1546
      %v1571 = vpack.c.bf16 %v1549, %v1548
      %v1572 = vpack.c.bf16 %v1551, %v1550
      %v1573 = vpack.c.bf16 %v1553, %v1552
      %v1574 = vpack.c.bf16 %v1555, %v1554
      %v1575 = vld [vmem:[%s1 + $0x18] sm:$0xf]
      %v1576 = vld [vmem:[%s1 + $0x1c] sm:$0xf]
      %v1577 = vld [vmem:[%s1 + $0x20] sm:$0xf]
      %v1578 = vld [vmem:[%s1 + $0x24] sm:$0xf]
      %v1579 = vld [vmem:[%s1 + $0x28] sm:$0xf]
      %v1580 = vld [vmem:[%s1 + $0x2c] sm:$0xf]
      %v1581 = vld [vmem:[%s1 + $0x30] sm:$0xf]
      %v1582 = vld [vmem:[%s1 + $0x34] sm:$0xf]
      %v1587 = vunpack.c.l.b16 %v1579
      %v1588 = vunpack.c.l.b16 %v1580
      %v1589 = vunpack.c.l.b16 %v1581
      %v1590 = vunpack.c.l.b16 %v1582
      %v1591 = vpack.c.b16 %v1588, %v1587
      %v1592 = vpack.c.b16 %v1590, %v1589
      %v1596 = vsel %vm1275, %v1557, 0
      %v1599 = vsel %vm1275, %v1558, 0
      %v1602 = vsel %vm1275, %v1559, 0
      %v1605 = vsel %vm1275, %v1560, 0
      %v1608 = vsel %vm1275, %v1561, 0
      %v1611 = vsel %vm1275, %v1562, 0
      %v1614 = vsel %vm1275, %v1563, 0
      %v1617 = vsel %vm1275, %v1564, 0
      %v1620 = vsel %vm1275, %v1565, 0
      %v1623 = vsel %vm1275, %v1566, 0
      %v1626 = vsel %vm1275, %v1567, 0
      %v1629 = vsel %vm1275, %v1568, 0
      %v1632 = vsel %vm1275, %v1569, 0
      %v1635 = vsel %vm1275, %v1570, 0
      %v1638 = vsel %vm1275, %v1571, 0
      %v1641 = vsel %vm1275, %v1572, 0
      %1643 = vmatprep.subr.bf16.mxu0 0
      %1644 = vmatpush1.bf16.msra.mxu0 %v1591
      %1645 = vmatprep.subr.bf16.mxu0 0
      %1646 = vmatpush1.bf16.msra.mxu0 %v1592
      %1647 = vmatprep.subr.bf16.mxu0 0
      %1648 = vmatpush1.bf16.msra.mxu0 0
      %1649 = vmatprep.subr.bf16.mxu0 0
      %1650 = vmatpush1.bf16.msra.mxu0 0
      %1651 = vmatprep.subr.bf16.mxu0 0
      %1652 = vmatpush1.bf16.msra.mxu0 0
      %1653 = vmatprep.subr.bf16.mxu0 0
      %1654 = vmatpush1.bf16.msra.mxu0 0
      %1655 = vmatprep.subr.bf16.mxu0 0
      %1656 = vmatpush1.bf16.msra.mxu0 0
      %1657 = vmatprep.subr.bf16.mxu0 0
      %1658 = vmatpush1.bf16.msra.mxu0 0
      %1659 = vmatprep.subr.bf16.mxu0 0
      %1660 = vmatpush1.bf16.msra.mxu0 0
      %1661 = vmatprep.subr.bf16.mxu0 0
      %1662 = vmatpush1.bf16.msra.mxu0 0
      %1663 = vmatprep.subr.bf16.mxu0 0
      %1664 = vmatpush1.bf16.msra.mxu0 0
      %1665 = vmatprep.subr.bf16.mxu0 0
      %1666 = vmatpush1.bf16.msra.mxu0 0
      %1667 = vmatprep.subr.bf16.mxu0 0
      %1668 = vmatpush1.bf16.msra.mxu0 0
      %1669 = vmatprep.subr.bf16.mxu0 0
      %1670 = vmatpush1.bf16.msra.mxu0 0
      %1671 = vmatprep.subr.bf16.mxu0 0
      %1672 = vmatpush1.bf16.msra.mxu0 0
      %1673 = vmatprep.subr.bf16.mxu0 0
      %1674 = vmatpush1.bf16.msra.mxu0 0
      %1675 = vmatprep.mubr.bf16.mxu0 0
      %1676 = vmatmul.mubr.bf16.gmra.mrb[0].mxu0 %v1596
      %v1677 = vpop.f32.mrb[0].mxu0
      %v1678 = vadd.f32 0.0, %v1677
      %v1679 = vpop.f32.mrb[0].mxu0
      %v1680 = vpop.f32.mrb[0].mxu0
      %v1681 = vadd.f32 0.0, %v1680
      %v1682 = vpop.f32.mrb[0].mxu0
      %1683 = vmatprep.mubr.bf16.mxu0 0
      %1684 = vmatmul.mubr.bf16.gmra.mrb[0].mxu0 %v1599
      %v1685 = vpop.f32.mrb[0].mxu0
      %v1686 = vadd.f32 0.0, %v1685
      %v1687 = vpop.f32.mrb[0].mxu0
      %v1688 = vpop.f32.mrb[0].mxu0
      %v1689 = vadd.f32 0.0, %v1688
      %v1690 = vpop.f32.mrb[0].mxu0
      %1691 = vmatprep.mubr.bf16.mxu0 0
      %1692 = vmatmul.mubr.bf16.gmra.mrb[0].mxu0 %v1602
      %v1693 = vpop.f32.mrb[0].mxu0
      %v1694 = vadd.f32 0.0, %v1693
      %v1695 = vpop.f32.mrb[0].mxu0
      %v1696 = vpop.f32.mrb[0].mxu0
      %v1697 = vadd.f32 0.0, %v1696
      %v1698 = vpop.f32.mrb[0].mxu0
      %1699 = vmatprep.mubr.bf16.mxu0 0
      %1700 = vmatmul.mubr.bf16.gmra.mrb[0].mxu0 %v1605
      %v1701 = vpop.f32.mrb[0].mxu0
      %v1702 = vadd.f32 0.0, %v1701
      %v1703 = vpop.f32.mrb[0].mxu0
      %v1704 = vpop.f32.mrb[0].mxu0
      %v1705 = vadd.f32 0.0, %v1704
      %v1706 = vpop.f32.mrb[0].mxu0
      %1707 = vmatprep.mubr.bf16.mxu0 0
      %1708 = vmatmul.mubr.bf16.gmra.mrb[0].mxu0 %v1608
      %v1709 = vpop.f32.mrb[0].mxu0
      %v1710 = vadd.f32 0.0, %v1709
      %v1711 = vpop.f32.mrb[0].mxu0
      %v1712 = vpop.f32.mrb[0].mxu0
      %v1713 = vadd.f32 0.0, %v1712
      %v1714 = vpop.f32.mrb[0].mxu0
      %1715 = vmatprep.mubr.bf16.mxu0 0
      %1716 = vmatmul.mubr.bf16.gmra.mrb[0].mxu0 %v1611
      %v1717 = vpop.f32.mrb[0].mxu0
      %v1718 = vadd.f32 0.0, %v1717
      %v1719 = vpop.f32.mrb[0].mxu0
      %v1720 = vpop.f32.mrb[0].mxu0
      %v1721 = vadd.f32 0.0, %v1720
      %v1722 = vpop.f32.mrb[0].mxu0
      %1723 = vmatprep.mubr.bf16.mxu0 0
      %1724 = vmatmul.mubr.bf16.gmra.mrb[0].mxu0 %v1614
      %v1725 = vpop.f32.mrb[0].mxu0
      %v1726 = vadd.f32 0.0, %v1725
      %v1727 = vpop.f32.mrb[0].mxu0
      %v1728 = vpop.f32.mrb[0].mxu0
      %v1729 = vadd.f32 0.0, %v1728
      %v1730 = vpop.f32.mrb[0].mxu0
      %1731 = vmatprep.mubr.bf16.mxu0 0
      %1732 = vmatmul.mubr.bf16.gmra.mrb[0].mxu0 %v1617
      %v1733 = vpop.f32.mrb[0].mxu0
      %v1734 = vadd.f32 0.0, %v1733
      %v1735 = vpop.f32.mrb[0].mxu0
      %v1736 = vpop.f32.mrb[0].mxu0
      %v1737 = vadd.f32 0.0, %v1736
      %v1738 = vpop.f32.mrb[0].mxu0
      %1739 = vmatprep.mubr.bf16.mxu0 0
      %1740 = vmatmul.mubr.bf16.gmra.mrb[0].mxu0 %v1620
      %v1741 = vpop.f32.mrb[0].mxu0
      %v1742 = vadd.f32 0.0, %v1741
      %v1743 = vpop.f32.mrb[0].mxu0
      %v1744 = vpop.f32.mrb[0].mxu0
      %v1745 = vadd.f32 0.0, %v1744
      %v1746 = vpop.f32.mrb[0].mxu0
      %1747 = vmatprep.mubr.bf16.mxu0 0
      %1748 = vmatmul.mubr.bf16.gmra.mrb[0].mxu0 %v1623
      %v1749 = vpop.f32.mrb[0].mxu0
      %v1750 = vadd.f32 0.0, %v1749
      %v1751 = vpop.f32.mrb[0].mxu0
      %v1752 = vpop.f32.mrb[0].mxu0
      %v1753 = vadd.f32 0.0, %v1752
      %v1754 = vpop.f32.mrb[0].mxu0
      %1755 = vmatprep.mubr.bf16.mxu0 0
      %1756 = vmatmul.mubr.bf16.gmra.mrb[0].mxu0 %v1626
      %v1757 = vpop.f32.mrb[0].mxu0
      %v1758 = vadd.f32 0.0, %v1757
      %v1759 = vpop.f32.mrb[0].mxu0
      %v1760 = vpop.f32.mrb[0].mxu0
      %v1761 = vadd.f32 0.0, %v1760
      %v1762 = vpop.f32.mrb[0].mxu0
      %1763 = vmatprep.mubr.bf16.mxu0 0
      %1764 = vmatmul.mubr.bf16.gmra.mrb[0].mxu0 %v1629
      %v1765 = vpop.f32.mrb[0].mxu0
      %v1766 = vadd.f32 0.0, %v1765
      %v1767 = vpop.f32.mrb[0].mxu0
      %v1768 = vpop.f32.mrb[0].mxu0
      %v1769 = vadd.f32 0.0, %v1768
      %v1770 = vpop.f32.mrb[0].mxu0
      %1771 = vmatprep.mubr.bf16.mxu0 0
      %1772 = vmatmul.mubr.bf16.gmra.mrb[0].mxu0 %v1632
      %v1773 = vpop.f32.mrb[0].mxu0
      %v1774 = vadd.f32 0.0, %v1773
      %v1775 = vpop.f32.mrb[0].mxu0
      %v1776 = vpop.f32.mrb[0].mxu0
      %v1777 = vadd.f32 0.0, %v1776
      %v1778 = vpop.f32.mrb[0].mxu0
      %1779 = vmatprep.mubr.bf16.mxu0 0
      %1780 = vmatmul.mubr.bf16.gmra.mrb[0].mxu0 %v1635
      %v1781 = vpop.f32.mrb[0].mxu0
      %v1782 = vadd.f32 0.0, %v1781
      %v1783 = vpop.f32.mrb[0].mxu0
      %v1784 = vpop.f32.mrb[0].mxu0
      %v1785 = vadd.f32 0.0, %v1784
      %v1786 = vpop.f32.mrb[0].mxu0
      %1787 = vmatprep.mubr.bf16.mxu0 0
      %1788 = vmatmul.mubr.bf16.gmra.mrb[0].mxu0 %v1638
      %v1789 = vpop.f32.mrb[0].mxu0
      %v1790 = vadd.f32 0.0, %v1789
      %v1791 = vpop.f32.mrb[0].mxu0
      %v1792 = vpop.f32.mrb[0].mxu0
      %v1793 = vadd.f32 0.0, %v1792
      %v1794 = vpop.f32.mrb[0].mxu0
      %1795 = vmatprep.mubr.bf16.mxu0 0
      %1796 = vmatmul.mubr.bf16.gmra.mrb[0].mxu0 %v1641
      %v1797 = vpop.f32.mrb[0].mxu0
      %v1798 = vadd.f32 0.0, %v1797
      %v1799 = vpop.f32.mrb[0].mxu0
      %v1800 = vpop.f32.mrb[0].mxu0
      %v1801 = vadd.f32 0.0, %v1800
      %v1802 = vpop.f32.mrb[0].mxu0
      %1803 = vdwg.mxu0
      %v1808 = vunpack.c.l.b16 %v1575
      %v1809 = vunpack.c.l.b16 %v1576
      %v1810 = vunpack.c.l.b16 %v1577
      %v1811 = vunpack.c.l.b16 %v1578
      %v1812 = vpack.c.b16 %v1809, %v1808
      %v1813 = vpack.c.b16 %v1811, %v1810
      %v1817 = vsel %vm1275, %v1556, 0
      %1819 = vmatprep.subr.bf16.mxu0 0
      %1820 = vmatpush1.bf16.msra.mxu0 %v1812
      %1821 = vmatprep.subr.bf16.mxu0 0
      %1822 = vmatpush1.bf16.msra.mxu0 %v1813
      %1823 = vmatprep.subr.bf16.mxu0 0
      %1824 = vmatpush1.bf16.msra.mxu0 0
      %1825 = vmatprep.subr.bf16.mxu0 0
      %1826 = vmatpush1.bf16.msra.mxu0 0
      %1827 = vmatprep.subr.bf16.mxu0 0
      %1828 = vmatpush1.bf16.msra.mxu0 0
      %1829 = vmatprep.subr.bf16.mxu0 0
      %1830 = vmatpush1.bf16.msra.mxu0 0
      %1831 = vmatprep.subr.bf16.mxu0 0
      %1832 = vmatpush1.bf16.msra.mxu0 0
      %1833 = vmatprep.subr.bf16.mxu0 0
      %1834 = vmatpush1.bf16.msra.mxu0 0
      %1835 = vmatprep.subr.bf16.mxu0 0
      %1836 = vmatpush1.bf16.msra.mxu0 0
      %1837 = vmatprep.subr.bf16.mxu0 0
      %1838 = vmatpush1.bf16.msra.mxu0 0
      %1839 = vmatprep.subr.bf16.mxu0 0
      %1840 = vmatpush1.bf16.msra.mxu0 0
      %1841 = vmatprep.subr.bf16.mxu0 0
      %1842 = vmatpush1.bf16.msra.mxu0 0
      %1843 = vmatprep.subr.bf16.mxu0 0
      %1844 = vmatpush1.bf16.msra.mxu0 0
      %1845 = vmatprep.subr.bf16.mxu0 0
      %1846 = vmatpush1.bf16.msra.mxu0 0
      %1847 = vmatprep.subr.bf16.mxu0 0
      %1848 = vmatpush1.bf16.msra.mxu0 0
      %1849 = vmatprep.subr.bf16.mxu0 0
      %1850 = vmatpush1.bf16.msra.mxu0 0
      %1851 = vmatprep.mubr.bf16.mxu0 0
      %1852 = vmatmul.mubr.bf16.gmra.mrb[0].mxu0 %v1817
      %v1853 = vpop.f32.mrb[0].mxu0
      %v1854 = vadd.f32 %v1678, %v1853
      %v1855 = vpop.f32.mrb[0].mxu0
      %v1856 = vpop.f32.mrb[0].mxu0
      %v1857 = vadd.f32 %v1681, %v1856
      %v1858 = vpop.f32.mrb[0].mxu0
      %1859 = vmatprep.mubr.bf16.mxu0 0
      %1860 = vmatmul.mubr.bf16.gmra.mrb[0].mxu0 %v1596
      %v1861 = vpop.f32.mrb[0].mxu0
      %v1862 = vadd.f32 %v1686, %v1861
      %v1863 = vpop.f32.mrb[0].mxu0
      %v1864 = vpop.f32.mrb[0].mxu0
      %v1865 = vadd.f32 %v1689, %v1864
      %v1866 = vpop.f32.mrb[0].mxu0
      %1867 = vmatprep.mubr.bf16.mxu0 0
      %1868 = vmatmul.mubr.bf16.gmra.mrb[0].mxu0 %v1599
      %v1869 = vpop.f32.mrb[0].mxu0
      %v1870 = vadd.f32 %v1694, %v1869
      %v1871 = vpop.f32.mrb[0].mxu0
      %v1872 = vpop.f32.mrb[0].mxu0
      %v1873 = vadd.f32 %v1697, %v1872
      %v1874 = vpop.f32.mrb[0].mxu0
      %1875 = vmatprep.mubr.bf16.mxu0 0
      %1876 = vmatmul.mubr.bf16.gmra.mrb[0].mxu0 %v1602
      %v1877 = vpop.f32.mrb[0].mxu0
      %v1878 = vadd.f32 %v1702, %v1877
      %v1879 = vpop.f32.mrb[0].mxu0
      %v1880 = vpop.f32.mrb[0].mxu0
      %v1881 = vadd.f32 %v1705, %v1880
      %v1882 = vpop.f32.mrb[0].mxu0
      %1883 = vmatprep.mubr.bf16.mxu0 0
      %1884 = vmatmul.mubr.bf16.gmra.mrb[0].mxu0 %v1605
      %v1885 = vpop.f32.mrb[0].mxu0
      %v1886 = vadd.f32 %v1710, %v1885
      %v1887 = vpop.f32.mrb[0].mxu0
      %v1888 = vpop.f32.mrb[0].mxu0
      %v1889 = vadd.f32 %v1713, %v1888
      %v1890 = vpop.f32.mrb[0].mxu0
      %1891 = vmatprep.mubr.bf16.mxu0 0
      %1892 = vmatmul.mubr.bf16.gmra.mrb[0].mxu0 %v1608
      %v1893 = vpop.f32.mrb[0].mxu0
      %v1894 = vadd.f32 %v1718, %v1893
      %v1895 = vpop.f32.mrb[0].mxu0
      %v1896 = vpop.f32.mrb[0].mxu0
      %v1897 = vadd.f32 %v1721, %v1896
      %v1898 = vpop.f32.mrb[0].mxu0
      %1899 = vmatprep.mubr.bf16.mxu0 0
      %1900 = vmatmul.mubr.bf16.gmra.mrb[0].mxu0 %v1611
      %v1901 = vpop.f32.mrb[0].mxu0
      %v1902 = vadd.f32 %v1726, %v1901
      %v1903 = vpop.f32.mrb[0].mxu0
      %v1904 = vpop.f32.mrb[0].mxu0
      %v1905 = vadd.f32 %v1729, %v1904
      %v1906 = vpop.f32.mrb[0].mxu0
      %1907 = vmatprep.mubr.bf16.mxu0 0
      %1908 = vmatmul.mubr.bf16.gmra.mrb[0].mxu0 %v1614
      %v1909 = vpop.f32.mrb[0].mxu0
      %v1910 = vadd.f32 %v1734, %v1909
      %v1911 = vpop.f32.mrb[0].mxu0
      %v1912 = vpop.f32.mrb[0].mxu0
      %v1913 = vadd.f32 %v1737, %v1912
      %v1914 = vpop.f32.mrb[0].mxu0
      %1915 = vmatprep.mubr.bf16.mxu0 0
      %1916 = vmatmul.mubr.bf16.gmra.mrb[0].mxu0 %v1617
      %v1917 = vpop.f32.mrb[0].mxu0
      %v1918 = vadd.f32 %v1742, %v1917
      %v1919 = vpop.f32.mrb[0].mxu0
      %v1920 = vpop.f32.mrb[0].mxu0
      %v1921 = vadd.f32 %v1745, %v1920
      %v1922 = vpop.f32.mrb[0].mxu0
      %1923 = vmatprep.mubr.bf16.mxu0 0
      %1924 = vmatmul.mubr.bf16.gmra.mrb[0].mxu0 %v1620
      %v1925 = vpop.f32.mrb[0].mxu0
      %v1926 = vadd.f32 %v1750, %v1925
      %v1927 = vpop.f32.mrb[0].mxu0
      %v1928 = vpop.f32.mrb[0].mxu0
      %v1929 = vadd.f32 %v1753, %v1928
      %v1930 = vpop.f32.mrb[0].mxu0
      %1931 = vmatprep.mubr.bf16.mxu0 0
      %1932 = vmatmul.mubr.bf16.gmra.mrb[0].mxu0 %v1623
      %v1933 = vpop.f32.mrb[0].mxu0
      %v1934 = vadd.f32 %v1758, %v1933
      %v1935 = vpop.f32.mrb[0].mxu0
      %v1936 = vpop.f32.mrb[0].mxu0
      %v1937 = vadd.f32 %v1761, %v1936
      %v1938 = vpop.f32.mrb[0].mxu0
      %1939 = vmatprep.mubr.bf16.mxu0 0
      %1940 = vmatmul.mubr.bf16.gmra.mrb[0].mxu0 %v1626
      %v1941 = vpop.f32.mrb[0].mxu0
      %v1942 = vadd.f32 %v1766, %v1941
      %v1943 = vpop.f32.mrb[0].mxu0
      %v1944 = vpop.f32.mrb[0].mxu0
      %v1945 = vadd.f32 %v1769, %v1944
      %v1946 = vpop.f32.mrb[0].mxu0
      %1947 = vmatprep.mubr.bf16.mxu0 0
      %1948 = vmatmul.mubr.bf16.gmra.mrb[0].mxu0 %v1629
      %v1949 = vpop.f32.mrb[0].mxu0
      %v1950 = vadd.f32 %v1774, %v1949
      %v1951 = vpop.f32.mrb[0].mxu0
      %v1952 = vpop.f32.mrb[0].mxu0
      %v1953 = vadd.f32 %v1777, %v1952
      %v1954 = vpop.f32.mrb[0].mxu0
      %1955 = vmatprep.mubr.bf16.mxu0 0
      %1956 = vmatmul.mubr.bf16.gmra.mrb[0].mxu0 %v1632
      %v1957 = vpop.f32.mrb[0].mxu0
      %v1958 = vadd.f32 %v1782, %v1957
      %v1959 = vpop.f32.mrb[0].mxu0
      %v1960 = vpop.f32.mrb[0].mxu0
      %v1961 = vadd.f32 %v1785, %v1960
      %v1962 = vpop.f32.mrb[0].mxu0
      %1963 = vmatprep.mubr.bf16.mxu0 0
      %1964 = vmatmul.mubr.bf16.gmra.mrb[0].mxu0 %v1635
      %v1965 = vpop.f32.mrb[0].mxu0
      %v1966 = vadd.f32 %v1790, %v1965
      %v1967 = vpop.f32.mrb[0].mxu0
      %v1968 = vpop.f32.mrb[0].mxu0
      %v1969 = vadd.f32 %v1793, %v1968
      %v1970 = vpop.f32.mrb[0].mxu0
      %1971 = vmatprep.mubr.bf16.mxu0 0
      %1972 = vmatmul.mubr.bf16.gmra.mrb[0].mxu0 %v1638
      %v1973 = vpop.f32.mrb[0].mxu0
      %v1974 = vadd.f32 %v1798, %v1973
      %v1975 = vpop.f32.mrb[0].mxu0
      %v1976 = vpop.f32.mrb[0].mxu0
      %v1977 = vadd.f32 %v1801, %v1976
      %v1978 = vpop.f32.mrb[0].mxu0
      %1979 = vdwg.mxu0
      %v1980 = vld [vmem:[%s1 + $0x38] sm:$0xf]
      %v1981 = vld [vmem:[%s1 + $0x3c] sm:$0xf]
      %v1982 = vld [vmem:[%s1 + $0x40] sm:$0xf]
      %v1983 = vld [vmem:[%s1 + $0x44] sm:$0xf]
      %v1988 = vunpack.c.l.b16 %v1980
      %v1989 = vunpack.c.l.b16 %v1981
      %v1990 = vunpack.c.l.b16 %v1982
      %v1991 = vunpack.c.l.b16 %v1983
      %v1992 = vpack.c.b16 %v1989, %v1988
      %v1993 = vpack.c.b16 %v1991, %v1990
      %v1997 = vsel %vm1275, %v1573, 0
      %1999 = vmatprep.subr.bf16.mxu0 0
      %2000 = vmatpush1.bf16.msra.mxu0 %v1992
      %2001 = vmatprep.subr.bf16.mxu0 0
      %2002 = vmatpush1.bf16.msra.mxu0 %v1993
      %2003 = vmatprep.subr.bf16.mxu0 0
      %2004 = vmatpush1.bf16.msra.mxu0 0
      %2005 = vmatprep.subr.bf16.mxu0 0
      %2006 = vmatpush1.bf16.msra.mxu0 0
      %2007 = vmatprep.subr.bf16.mxu0 0
      %2008 = vmatpush1.bf16.msra.mxu0 0
      %2009 = vmatprep.subr.bf16.mxu0 0
      %2010 = vmatpush1.bf16.msra.mxu0 0
      %2011 = vmatprep.subr.bf16.mxu0 0
      %2012 = vmatpush1.bf16.msra.mxu0 0
      %2013 = vmatprep.subr.bf16.mxu0 0
      %2014 = vmatpush1.bf16.msra.mxu0 0
      %2015 = vmatprep.subr.bf16.mxu0 0
      %2016 = vmatpush1.bf16.msra.mxu0 0
      %2017 = vmatprep.subr.bf16.mxu0 0
      %2018 = vmatpush1.bf16.msra.mxu0 0
      %2019 = vmatprep.subr.bf16.mxu0 0
      %2020 = vmatpush1.bf16.msra.mxu0 0
      %2021 = vmatprep.subr.bf16.mxu0 0
      %2022 = vmatpush1.bf16.msra.mxu0 0
      %2023 = vmatprep.subr.bf16.mxu0 0
      %2024 = vmatpush1.bf16.msra.mxu0 0
      %2025 = vmatprep.subr.bf16.mxu0 0
      %2026 = vmatpush1.bf16.msra.mxu0 0
      %2027 = vmatprep.subr.bf16.mxu0 0
      %2028 = vmatpush1.bf16.msra.mxu0 0
      %2029 = vmatprep.subr.bf16.mxu0 0
      %2030 = vmatpush1.bf16.msra.mxu0 0
      %2031 = vmatprep.mubr.bf16.mxu0 0
      %2032 = vmatmul.mubr.bf16.gmra.mrb[0].mxu0 %v1599
      %v2033 = vpop.f32.mrb[0].mxu0
      %v2034 = vadd.f32 0.0, %v2033
      %v2035 = vpop.f32.mrb[0].mxu0
      %v2036 = vpop.f32.mrb[0].mxu0
      %v2037 = vadd.f32 0.0, %v2036
      %v2038 = vpop.f32.mrb[0].mxu0
      %2039 = vmatprep.mubr.bf16.mxu0 0
      %2040 = vmatmul.mubr.bf16.gmra.mrb[0].mxu0 %v1602
      %v2041 = vpop.f32.mrb[0].mxu0
      %v2042 = vadd.f32 0.0, %v2041
      %v2043 = vpop.f32.mrb[0].mxu0
      %v2044 = vpop.f32.mrb[0].mxu0
      %v2045 = vadd.f32 0.0, %v2044
      %v2046 = vpop.f32.mrb[0].mxu0
      %2047 = vmatprep.mubr.bf16.mxu0 0
      %2048 = vmatmul.mubr.bf16.gmra.mrb[0].mxu0 %v1605
      %v2049 = vpop.f32.mrb[0].mxu0
      %v2050 = vadd.f32 0.0, %v2049
      %v2051 = vpop.f32.mrb[0].mxu0
      %v2052 = vpop.f32.mrb[0].mxu0
      %v2053 = vadd.f32 0.0, %v2052
      %v2054 = vpop.f32.mrb[0].mxu0
      %2055 = vmatprep.mubr.bf16.mxu0 0
      %2056 = vmatmul.mubr.bf16.gmra.mrb[0].mxu0 %v1608
      %v2057 = vpop.f32.mrb[0].mxu0
      %v2058 = vadd.f32 0.0, %v2057
      %v2059 = vpop.f32.mrb[0].mxu0
      %v2060 = vpop.f32.mrb[0].mxu0
      %v2061 = vadd.f32 0.0, %v2060
      %v2062 = vpop.f32.mrb[0].mxu0
      %2063 = vmatprep.mubr.bf16.mxu0 0
      %2064 = vmatmul.mubr.bf16.gmra.mrb[0].mxu0 %v1611
      %v2065 = vpop.f32.mrb[0].mxu0
      %v2066 = vadd.f32 0.0, %v2065
      %v2067 = vpop.f32.mrb[0].mxu0
      %v2068 = vpop.f32.mrb[0].mxu0
      %v2069 = vadd.f32 0.0, %v2068
      %v2070 = vpop.f32.mrb[0].mxu0
      %2071 = vmatprep.mubr.bf16.mxu0 0
      %2072 = vmatmul.mubr.bf16.gmra.mrb[0].mxu0 %v1614
      %v2073 = vpop.f32.mrb[0].mxu0
      %v2074 = vadd.f32 0.0, %v2073
      %v2075 = vpop.f32.mrb[0].mxu0
      %v2076 = vpop.f32.mrb[0].mxu0
      %v2077 = vadd.f32 0.0, %v2076
      %v2078 = vpop.f32.mrb[0].mxu0
      %2079 = vmatprep.mubr.bf16.mxu0 0
      %2080 = vmatmul.mubr.bf16.gmra.mrb[0].mxu0 %v1617
      %v2081 = vpop.f32.mrb[0].mxu0
      %v2082 = vadd.f32 0.0, %v2081
      %v2083 = vpop.f32.mrb[0].mxu0
      %v2084 = vpop.f32.mrb[0].mxu0
      %v2085 = vadd.f32 0.0, %v2084
      %v2086 = vpop.f32.mrb[0].mxu0
      %2087 = vmatprep.mubr.bf16.mxu0 0
      %2088 = vmatmul.mubr.bf16.gmra.mrb[0].mxu0 %v1620
      %v2089 = vpop.f32.mrb[0].mxu0
      %v2090 = vadd.f32 0.0, %v2089
      %v2091 = vpop.f32.mrb[0].mxu0
      %v2092 = vpop.f32.mrb[0].mxu0
      %v2093 = vadd.f32 0.0, %v2092
      %v2094 = vpop.f32.mrb[0].mxu0
      %2095 = vmatprep.mubr.bf16.mxu0 0
      %2096 = vmatmul.mubr.bf16.gmra.mrb[0].mxu0 %v1623
      %v2097 = vpop.f32.mrb[0].mxu0
      %v2098 = vadd.f32 0.0, %v2097
      %v2099 = vpop.f32.mrb[0].mxu0
      %v2100 = vpop.f32.mrb[0].mxu0
      %v2101 = vadd.f32 0.0, %v2100
      %v2102 = vpop.f32.mrb[0].mxu0
      %2103 = vmatprep.mubr.bf16.mxu0 0
      %2104 = vmatmul.mubr.bf16.gmra.mrb[0].mxu0 %v1626
      %v2105 = vpop.f32.mrb[0].mxu0
      %v2106 = vadd.f32 0.0, %v2105
      %v2107 = vpop.f32.mrb[0].mxu0
      %v2108 = vpop.f32.mrb[0].mxu0
      %v2109 = vadd.f32 0.0, %v2108
      %v2110 = vpop.f32.mrb[0].mxu0
      %2111 = vmatprep.mubr.bf16.mxu0 0
      %2112 = vmatmul.mubr.bf16.gmra.mrb[0].mxu0 %v1629
      %v2113 = vpop.f32.mrb[0].mxu0
      %v2114 = vadd.f32 0.0, %v2113
      %v2115 = vpop.f32.mrb[0].mxu0
      %v2116 = vpop.f32.mrb[0].mxu0
      %v2117 = vadd.f32 0.0, %v2116
      %v2118 = vpop.f32.mrb[0].mxu0
      %2119 = vmatprep.mubr.bf16.mxu0 0
      %2120 = vmatmul.mubr.bf16.gmra.mrb[0].mxu0 %v1632
      %v2121 = vpop.f32.mrb[0].mxu0
      %v2122 = vadd.f32 0.0, %v2121
      %v2123 = vpop.f32.mrb[0].mxu0
      %v2124 = vpop.f32.mrb[0].mxu0
      %v2125 = vadd.f32 0.0, %v2124
      %v2126 = vpop.f32.mrb[0].mxu0
      %2127 = vmatprep.mubr.bf16.mxu0 0
      %2128 = vmatmul.mubr.bf16.gmra.mrb[0].mxu0 %v1635
      %v2129 = vpop.f32.mrb[0].mxu0
      %v2130 = vadd.f32 0.0, %v2129
      %v2131 = vpop.f32.mrb[0].mxu0
      %v2132 = vpop.f32.mrb[0].mxu0
      %v2133 = vadd.f32 0.0, %v2132
      %v2134 = vpop.f32.mrb[0].mxu0
      %2135 = vmatprep.mubr.bf16.mxu0 0
      %2136 = vmatmul.mubr.bf16.gmra.mrb[0].mxu0 %v1638
      %v2137 = vpop.f32.mrb[0].mxu0
      %v2138 = vadd.f32 0.0, %v2137
      %v2139 = vpop.f32.mrb[0].mxu0
      %v2140 = vpop.f32.mrb[0].mxu0
      %v2141 = vadd.f32 0.0, %v2140
      %v2142 = vpop.f32.mrb[0].mxu0
      %2143 = vmatprep.mubr.bf16.mxu0 0
      %2144 = vmatmul.mubr.bf16.gmra.mrb[0].mxu0 %v1641
      %v2145 = vpop.f32.mrb[0].mxu0
      %v2146 = vadd.f32 0.0, %v2145
      %v2147 = vpop.f32.mrb[0].mxu0
      %v2148 = vpop.f32.mrb[0].mxu0
      %v2149 = vadd.f32 0.0, %v2148
      %v2150 = vpop.f32.mrb[0].mxu0
      %2151 = vmatprep.mubr.bf16.mxu0 0
      %2152 = vmatmul.mubr.bf16.gmra.mrb[0].mxu0 %v1997
      %v2153 = vpop.f32.mrb[0].mxu0
      %v2154 = vadd.f32 0.0, %v2153
      %v2155 = vpop.f32.mrb[0].mxu0
      %v2156 = vpop.f32.mrb[0].mxu0
      %v2157 = vadd.f32 0.0, %v2156
      %v2158 = vpop.f32.mrb[0].mxu0
      %2159 = vdwg.mxu0
      %v2160 = vadd.f32 %v1854, %v2034
      %v2161 = vadd.f32 %v1857, %v2037
      %v2162 = vadd.f32 %v1862, %v2042
      %v2163 = vadd.f32 %v1865, %v2045
      %v2164 = vadd.f32 %v1870, %v2050
      %v2165 = vadd.f32 %v1873, %v2053
      %v2166 = vadd.f32 %v1878, %v2058
      %v2167 = vadd.f32 %v1881, %v2061
      %v2168 = vadd.f32 %v1886, %v2066
      %v2169 = vadd.f32 %v1889, %v2069
      %v2170 = vadd.f32 %v1894, %v2074
      %v2171 = vadd.f32 %v1897, %v2077
      %v2172 = vadd.f32 %v1902, %v2082
      %v2173 = vadd.f32 %v1905, %v2085
      %v2174 = vadd.f32 %v1910, %v2090
      %v2175 = vadd.f32 %v1913, %v2093
      %v2176 = vadd.f32 %v1918, %v2098
      %v2177 = vadd.f32 %v1921, %v2101
      %v2178 = vadd.f32 %v1926, %v2106
      %v2179 = vadd.f32 %v1929, %v2109
      %v2180 = vadd.f32 %v1934, %v2114
      %v2181 = vadd.f32 %v1937, %v2117
      %v2182 = vadd.f32 %v1942, %v2122
      %v2183 = vadd.f32 %v1945, %v2125
      %v2184 = vadd.f32 %v1950, %v2130
      %v2185 = vadd.f32 %v1953, %v2133
      %v2186 = vadd.f32 %v1958, %v2138
      %v2187 = vadd.f32 %v1961, %v2141
      %v2188 = vadd.f32 %v1966, %v2146
      %v2189 = vadd.f32 %v1969, %v2149
      %v2190 = vadd.f32 %v1974, %v2154
      %v2191 = vadd.f32 %v1977, %v2157
      %v2192 = vld [vmem:[%s1 + $0x48] sm:$0xf]
      %v2193 = vld [vmem:[%s1 + $0x4c] sm:$0xf]
      %v2194 = vld [vmem:[%s1 + $0x50] sm:$0xf]
      %v2195 = vld [vmem:[%s1 + $0x54] sm:$0xf]
      %v2200 = vunpack.c.l.b16 %v2192
      %v2201 = vunpack.c.l.b16 %v2193
      %v2202 = vunpack.c.l.b16 %v2194
      %v2203 = vunpack.c.l.b16 %v2195
      %v2204 = vpack.c.b16 %v2201, %v2200
      %v2205 = vpack.c.b16 %v2203, %v2202
      %v2209 = vsel %vm1275, %v1574, 0
      %2211 = vmatprep.subr.bf16.mxu0 0
      %2212 = vmatpush1.bf16.msra.mxu0 %v2204
      %2213 = vmatprep.subr.bf16.mxu0 0
      %2214 = vmatpush1.bf16.msra.mxu0 %v2205
      %2215 = vmatprep.subr.bf16.mxu0 0
      %2216 = vmatpush1.bf16.msra.mxu0 0
      %2217 = vmatprep.subr.bf16.mxu0 0
      %2218 = vmatpush1.bf16.msra.mxu0 0
      %2219 = vmatprep.subr.bf16.mxu0 0
      %2220 = vmatpush1.bf16.msra.mxu0 0
      %2221 = vmatprep.subr.bf16.mxu0 0
      %2222 = vmatpush1.bf16.msra.mxu0 0
      %2223 = vmatprep.subr.bf16.mxu0 0
      %2224 = vmatpush1.bf16.msra.mxu0 0
      %2225 = vmatprep.subr.bf16.mxu0 0
      %2226 = vmatpush1.bf16.msra.mxu0 0
      %2227 = vmatprep.subr.bf16.mxu0 0
      %2228 = vmatpush1.bf16.msra.mxu0 0
      %2229 = vmatprep.subr.bf16.mxu0 0
      %2230 = vmatpush1.bf16.msra.mxu0 0
      %2231 = vmatprep.subr.bf16.mxu0 0
      %2232 = vmatpush1.bf16.msra.mxu0 0
      %2233 = vmatprep.subr.bf16.mxu0 0
      %2234 = vmatpush1.bf16.msra.mxu0 0
      %2235 = vmatprep.subr.bf16.mxu0 0
      %2236 = vmatpush1.bf16.msra.mxu0 0
      %2237 = vmatprep.subr.bf16.mxu0 0
      %2238 = vmatpush1.bf16.msra.mxu0 0
      %2239 = vmatprep.subr.bf16.mxu0 0
      %2240 = vmatpush1.bf16.msra.mxu0 0
      %2241 = vmatprep.subr.bf16.mxu0 0
      %2242 = vmatpush1.bf16.msra.mxu0 0
      %2243 = vmatprep.mubr.bf16.mxu0 0
      %2244 = vmatmul.mubr.bf16.gmra.mrb[0].mxu0 %v1602
      %v2245 = vpop.f32.mrb[0].mxu0
      %v2246 = vadd.f32 0.0, %v2245
      %v2247 = vpop.f32.mrb[0].mxu0
      %v2248 = vpop.f32.mrb[0].mxu0
      %v2249 = vadd.f32 0.0, %v2248
      %v2250 = vpop.f32.mrb[0].mxu0
      %2251 = vmatprep.mubr.bf16.mxu0 0
      %2252 = vmatmul.mubr.bf16.gmra.mrb[0].mxu0 %v1605
      %v2253 = vpop.f32.mrb[0].mxu0
      %v2254 = vadd.f32 0.0, %v2253
      %v2255 = vpop.f32.mrb[0].mxu0
      %v2256 = vpop.f32.mrb[0].mxu0
      %v2257 = vadd.f32 0.0, %v2256
      %v2258 = vpop.f32.mrb[0].mxu0
      %2259 = vmatprep.mubr.bf16.mxu0 0
      %2260 = vmatmul.mubr.bf16.gmra.mrb[0].mxu0 %v1608
      %v2261 = vpop.f32.mrb[0].mxu0
      %v2262 = vadd.f32 0.0, %v2261
      %v2263 = vpop.f32.mrb[0].mxu0
      %v2264 = vpop.f32.mrb[0].mxu0
      %v2265 = vadd.f32 0.0, %v2264
      %v2266 = vpop.f32.mrb[0].mxu0
      %2267 = vmatprep.mubr.bf16.mxu0 0
      %2268 = vmatmul.mubr.bf16.gmra.mrb[0].mxu0 %v1611
      %v2269 = vpop.f32.mrb[0].mxu0
      %v2270 = vadd.f32 0.0, %v2269
      %v2271 = vpop.f32.mrb[0].mxu0
      %v2272 = vpop.f32.mrb[0].mxu0
      %v2273 = vadd.f32 0.0, %v2272
      %v2274 = vpop.f32.mrb[0].mxu0
      %2275 = vmatprep.mubr.bf16.mxu0 0
      %2276 = vmatmul.mubr.bf16.gmra.mrb[0].mxu0 %v1614
      %v2277 = vpop.f32.mrb[0].mxu0
      %v2278 = vadd.f32 0.0, %v2277
      %v2279 = vpop.f32.mrb[0].mxu0
      %v2280 = vpop.f32.mrb[0].mxu0
      %v2281 = vadd.f32 0.0, %v2280
      %v2282 = vpop.f32.mrb[0].mxu0
      %2283 = vmatprep.mubr.bf16.mxu0 0
      %2284 = vmatmul.mubr.bf16.gmra.mrb[0].mxu0 %v1617
      %v2285 = vpop.f32.mrb[0].mxu0
      %v2286 = vadd.f32 0.0, %v2285
      %v2287 = vpop.f32.mrb[0].mxu0
      %v2288 = vpop.f32.mrb[0].mxu0
      %v2289 = vadd.f32 0.0, %v2288
      %v2290 = vpop.f32.mrb[0].mxu0
      %2291 = vmatprep.mubr.bf16.mxu0 0
      %2292 = vmatmul.mubr.bf16.gmra.mrb[0].mxu0 %v1620
      %v2293 = vpop.f32.mrb[0].mxu0
      %v2294 = vadd.f32 0.0, %v2293
      %v2295 = vpop.f32.mrb[0].mxu0
      %v2296 = vpop.f32.mrb[0].mxu0
      %v2297 = vadd.f32 0.0, %v2296
      %v2298 = vpop.f32.mrb[0].mxu0
      %2299 = vmatprep.mubr.bf16.mxu0 0
      %2300 = vmatmul.mubr.bf16.gmra.mrb[0].mxu0 %v1623
      %v2301 = vpop.f32.mrb[0].mxu0
      %v2302 = vadd.f32 0.0, %v2301
      %v2303 = vpop.f32.mrb[0].mxu0
      %v2304 = vpop.f32.mrb[0].mxu0
      %v2305 = vadd.f32 0.0, %v2304
      %v2306 = vpop.f32.mrb[0].mxu0
      %2307 = vmatprep.mubr.bf16.mxu0 0
      %2308 = vmatmul.mubr.bf16.gmra.mrb[0].mxu0 %v1626
      %v2309 = vpop.f32.mrb[0].mxu0
      %v2310 = vadd.f32 0.0, %v2309
      %v2311 = vpop.f32.mrb[0].mxu0
      %v2312 = vpop.f32.mrb[0].mxu0
      %v2313 = vadd.f32 0.0, %v2312
      %v2314 = vpop.f32.mrb[0].mxu0
      %2315 = vmatprep.mubr.bf16.mxu0 0
      %2316 = vmatmul.mubr.bf16.gmra.mrb[0].mxu0 %v1629
      %v2317 = vpop.f32.mrb[0].mxu0
      %v2318 = vadd.f32 0.0, %v2317
      %v2319 = vpop.f32.mrb[0].mxu0
      %v2320 = vpop.f32.mrb[0].mxu0
      %v2321 = vadd.f32 0.0, %v2320
      %v2322 = vpop.f32.mrb[0].mxu0
      %2323 = vmatprep.mubr.bf16.mxu0 0
      %2324 = vmatmul.mubr.bf16.gmra.mrb[0].mxu0 %v1632
      %v2325 = vpop.f32.mrb[0].mxu0
      %v2326 = vadd.f32 0.0, %v2325
      %v2327 = vpop.f32.mrb[0].mxu0
      %v2328 = vpop.f32.mrb[0].mxu0
      %v2329 = vadd.f32 0.0, %v2328
      %v2330 = vpop.f32.mrb[0].mxu0
      %2331 = vmatprep.mubr.bf16.mxu0 0
      %2332 = vmatmul.mubr.bf16.gmra.mrb[0].mxu0 %v1635
      %v2333 = vpop.f32.mrb[0].mxu0
      %v2334 = vadd.f32 0.0, %v2333
      %v2335 = vpop.f32.mrb[0].mxu0
      %v2336 = vpop.f32.mrb[0].mxu0
      %v2337 = vadd.f32 0.0, %v2336
      %v2338 = vpop.f32.mrb[0].mxu0
      %2339 = vmatprep.mubr.bf16.mxu0 0
      %2340 = vmatmul.mubr.bf16.gmra.mrb[0].mxu0 %v1638
      %v2341 = vpop.f32.mrb[0].mxu0
      %v2342 = vadd.f32 0.0, %v2341
      %v2343 = vpop.f32.mrb[0].mxu0
      %v2344 = vpop.f32.mrb[0].mxu0
      %v2345 = vadd.f32 0.0, %v2344
      %v2346 = vpop.f32.mrb[0].mxu0
      %2347 = vmatprep.mubr.bf16.mxu0 0
      %2348 = vmatmul.mubr.bf16.gmra.mrb[0].mxu0 %v1641
      %v2349 = vpop.f32.mrb[0].mxu0
      %v2350 = vadd.f32 0.0, %v2349
      %v2351 = vpop.f32.mrb[0].mxu0
      %v2352 = vpop.f32.mrb[0].mxu0
      %v2353 = vadd.f32 0.0, %v2352
      %v2354 = vpop.f32.mrb[0].mxu0
      %2355 = vmatprep.mubr.bf16.mxu0 0
      %2356 = vmatmul.mubr.bf16.gmra.mrb[0].mxu0 %v1997
      %v2357 = vpop.f32.mrb[0].mxu0
      %v2358 = vadd.f32 0.0, %v2357
      %v2359 = vpop.f32.mrb[0].mxu0
      %v2360 = vpop.f32.mrb[0].mxu0
      %v2361 = vadd.f32 0.0, %v2360
      %v2362 = vpop.f32.mrb[0].mxu0
      %2363 = vmatprep.mubr.bf16.mxu0 0
      %2364 = vmatmul.mubr.bf16.gmra.mrb[0].mxu0 %v2209
      %v2365 = vpop.f32.mrb[0].mxu0
      %v2366 = vadd.f32 0.0, %v2365
      %v2367 = vpop.f32.mrb[0].mxu0
      %v2368 = vpop.f32.mrb[0].mxu0
      %v2369 = vadd.f32 0.0, %v2368
      %v2370 = vpop.f32.mrb[0].mxu0
      %2371 = vdwg.mxu0
      %v2372 = vadd.f32 %v2160, %v2246
      %v2373 = vadd.f32 %v2161, %v2249
      %v2374 = vadd.f32 %v2162, %v2254
      %v2375 = vadd.f32 %v2163, %v2257
      %v2376 = vadd.f32 %v2164, %v2262
      %v2377 = vadd.f32 %v2165, %v2265
      %v2378 = vadd.f32 %v2166, %v2270
      %v2379 = vadd.f32 %v2167, %v2273
      %v2380 = vadd.f32 %v2168, %v2278
      %v2381 = vadd.f32 %v2169, %v2281
      %v2382 = vadd.f32 %v2170, %v2286
      %v2383 = vadd.f32 %v2171, %v2289
      %v2384 = vadd.f32 %v2172, %v2294
      %v2385 = vadd.f32 %v2173, %v2297
      %v2386 = vadd.f32 %v2174, %v2302
      %v2387 = vadd.f32 %v2175, %v2305
      %v2388 = vadd.f32 %v2176, %v2310
      %v2389 = vadd.f32 %v2177, %v2313
      %v2390 = vadd.f32 %v2178, %v2318
      %v2391 = vadd.f32 %v2179, %v2321
      %v2392 = vadd.f32 %v2180, %v2326
      %v2393 = vadd.f32 %v2181, %v2329
      %v2394 = vadd.f32 %v2182, %v2334
      %v2395 = vadd.f32 %v2183, %v2337
      %v2396 = vadd.f32 %v2184, %v2342
      %v2397 = vadd.f32 %v2185, %v2345
      %v2398 = vadd.f32 %v2186, %v2350
      %v2399 = vadd.f32 %v2187, %v2353
      %v2400 = vadd.f32 %v2188, %v2358
      %v2401 = vadd.f32 %v2189, %v2361
      %v2402 = vadd.f32 %v2190, %v2366
      %v2403 = vadd.f32 %v2191, %v2369
      %v2404 = vlaneseq
      %v2405 = vshrl.u32 %v2404, 7
      %v2406 = vsub.s32 0, %v2405
      %v2407 = vrot.slane %v206, %v2406
      %v2408 = vadd.f32 %v2372, %v2407
      %v2409 = vadd.f32 %v2373, %v2407
      %v2410 = vadd.f32 %v2374, %v2407
      %v2411 = vadd.f32 %v2375, %v2407
      %v2412 = vadd.f32 %v2376, %v2407
      %v2413 = vadd.f32 %v2377, %v2407
      %v2414 = vadd.f32 %v2378, %v2407
      %v2415 = vadd.f32 %v2379, %v2407
      %v2416 = vadd.f32 %v2380, %v2407
      %v2417 = vadd.f32 %v2381, %v2407
      %v2418 = vadd.f32 %v2382, %v2407
      %v2419 = vadd.f32 %v2383, %v2407
      %v2420 = vadd.f32 %v2384, %v2407
      %v2421 = vadd.f32 %v2385, %v2407
      %v2422 = vadd.f32 %v2386, %v2407
      %v2423 = vadd.f32 %v2387, %v2407
      %v2424 = vadd.f32 %v2388, %v2407
      %v2425 = vadd.f32 %v2389, %v2407
      %v2426 = vadd.f32 %v2390, %v2407
      %v2427 = vadd.f32 %v2391, %v2407
      %v2428 = vadd.f32 %v2392, %v2407
      %v2429 = vadd.f32 %v2393, %v2407
      %v2430 = vadd.f32 %v2394, %v2407
      %v2431 = vadd.f32 %v2395, %v2407
      %v2432 = vadd.f32 %v2396, %v2407
      %v2433 = vadd.f32 %v2397, %v2407
      %v2434 = vadd.f32 %v2398, %v2407
      %v2435 = vadd.f32 %v2399, %v2407
      %v2436 = vadd.f32 %v2400, %v2407
      %v2437 = vadd.f32 %v2401, %v2407
      %v2438 = vadd.f32 %v2402, %v2407
      %v2439 = vadd.f32 %v2403, %v2407
      %v2440 = vxor.u32 %v2408, 2147483648
      %v2441 = vxor.u32 %v2409, 2147483648
      %v2442 = vxor.u32 %v2410, 2147483648
      %v2443 = vxor.u32 %v2411, 2147483648
      %v2444 = vxor.u32 %v2412, 2147483648
      %v2445 = vxor.u32 %v2413, 2147483648
      %v2446 = vxor.u32 %v2414, 2147483648
      %v2447 = vxor.u32 %v2415, 2147483648
      %v2448 = vxor.u32 %v2416, 2147483648
      %v2449 = vxor.u32 %v2417, 2147483648
      %v2450 = vxor.u32 %v2418, 2147483648
      %v2451 = vxor.u32 %v2419, 2147483648
      %v2452 = vxor.u32 %v2420, 2147483648
      %v2453 = vxor.u32 %v2421, 2147483648
      %v2454 = vxor.u32 %v2422, 2147483648
      %v2455 = vxor.u32 %v2423, 2147483648
      %v2456 = vxor.u32 %v2424, 2147483648
      %v2457 = vxor.u32 %v2425, 2147483648
      %v2458 = vxor.u32 %v2426, 2147483648
      %v2459 = vxor.u32 %v2427, 2147483648
      %v2460 = vxor.u32 %v2428, 2147483648
      %v2461 = vxor.u32 %v2429, 2147483648
      %v2462 = vxor.u32 %v2430, 2147483648
      %v2463 = vxor.u32 %v2431, 2147483648
      %v2464 = vxor.u32 %v2432, 2147483648
      %v2465 = vxor.u32 %v2433, 2147483648
      %v2466 = vxor.u32 %v2434, 2147483648
      %v2467 = vxor.u32 %v2435, 2147483648
      %v2468 = vxor.u32 %v2436, 2147483648
      %v2469 = vxor.u32 %v2437, 2147483648
      %v2470 = vxor.u32 %v2438, 2147483648
      %v2471 = vxor.u32 %v2439, 2147483648
      %v2472 = vmul.f32 %v2440, 1.442695
      %v2473 = vpow.pop %v2472
      %v2474 = vmul.f32 %v2441, 1.442695
      %v2475 = vpow.pop %v2474
      %v2476 = vmul.f32 %v2442, 1.442695
      %v2477 = vpow.pop %v2476
      %v2478 = vmul.f32 %v2443, 1.442695
      %v2479 = vpow.pop %v2478
      %v2480 = vmul.f32 %v2444, 1.442695
      %v2481 = vpow.pop %v2480
      %v2482 = vmul.f32 %v2445, 1.442695
      %v2483 = vpow.pop %v2482
      %v2484 = vmul.f32 %v2446, 1.442695
      %v2485 = vpow.pop %v2484
      %v2486 = vmul.f32 %v2447, 1.442695
      %v2487 = vpow.pop %v2486
      %v2488 = vmul.f32 %v2448, 1.442695
      %v2489 = vpow.pop %v2488
      %v2490 = vmul.f32 %v2449, 1.442695
      %v2491 = vpow.pop %v2490
      %v2492 = vmul.f32 %v2450, 1.442695
      %v2493 = vpow.pop %v2492
      %v2494 = vmul.f32 %v2451, 1.442695
      %v2495 = vpow.pop %v2494
      %v2496 = vmul.f32 %v2452, 1.442695
      %v2497 = vpow.pop %v2496
      %v2498 = vmul.f32 %v2453, 1.442695
      %v2499 = vpow.pop %v2498
      %v2500 = vmul.f32 %v2454, 1.442695
      %v2501 = vpow.pop %v2500
      %v2502 = vmul.f32 %v2455, 1.442695
      %v2503 = vpow.pop %v2502
      %v2504 = vmul.f32 %v2456, 1.442695
      %v2505 = vpow.pop %v2504
      %v2506 = vmul.f32 %v2457, 1.442695
      %v2507 = vpow.pop %v2506
      %v2508 = vmul.f32 %v2458, 1.442695
      %v2509 = vpow.pop %v2508
      %v2510 = vmul.f32 %v2459, 1.442695
      %v2511 = vpow.pop %v2510
      %v2512 = vmul.f32 %v2460, 1.442695
      %v2513 = vpow.pop %v2512
      %v2514 = vmul.f32 %v2461, 1.442695
      %v2515 = vpow.pop %v2514
      %v2516 = vmul.f32 %v2462, 1.442695
      %v2517 = vpow.pop %v2516
      %v2518 = vmul.f32 %v2463, 1.442695
      %v2519 = vpow.pop %v2518
      %v2520 = vmul.f32 %v2464, 1.442695
      %v2521 = vpow.pop %v2520
      %v2522 = vmul.f32 %v2465, 1.442695
      %v2523 = vpow.pop %v2522
      %v2524 = vmul.f32 %v2466, 1.442695
      %v2525 = vpow.pop %v2524
      %v2526 = vmul.f32 %v2467, 1.442695
      %v2527 = vpow.pop %v2526
      %v2528 = vmul.f32 %v2468, 1.442695
      %v2529 = vpow.pop %v2528
      %v2530 = vmul.f32 %v2469, 1.442695
      %v2531 = vpow.pop %v2530
      %v2532 = vmul.f32 %v2470, 1.442695
      %v2533 = vpow.pop %v2532
      %v2534 = vmul.f32 %v2471, 1.442695
      %v2535 = vpow.pop %v2534
      %v2536 = vadd.f32 %v2473, 1.0
      %v2537 = vadd.f32 %v2475, 1.0
      %v2538 = vadd.f32 %v2477, 1.0
      %v2539 = vadd.f32 %v2479, 1.0
      %v2540 = vadd.f32 %v2481, 1.0
      %v2541 = vadd.f32 %v2483, 1.0
      %v2542 = vadd.f32 %v2485, 1.0
      %v2543 = vadd.f32 %v2487, 1.0
      %v2544 = vadd.f32 %v2489, 1.0
      %v2545 = vadd.f32 %v2491, 1.0
      %v2546 = vadd.f32 %v2493, 1.0
      %v2547 = vadd.f32 %v2495, 1.0
      %v2548 = vadd.f32 %v2497, 1.0
      %v2549 = vadd.f32 %v2499, 1.0
      %v2550 = vadd.f32 %v2501, 1.0
      %v2551 = vadd.f32 %v2503, 1.0
      %v2552 = vadd.f32 %v2505, 1.0
      %v2553 = vadd.f32 %v2507, 1.0
      %v2554 = vadd.f32 %v2509, 1.0
      %v2555 = vadd.f32 %v2511, 1.0
      %v2556 = vadd.f32 %v2513, 1.0
      %v2557 = vadd.f32 %v2515, 1.0
      %v2558 = vadd.f32 %v2517, 1.0
      %v2559 = vadd.f32 %v2519, 1.0
      %v2560 = vadd.f32 %v2521, 1.0
      %v2561 = vadd.f32 %v2523, 1.0
      %v2562 = vadd.f32 %v2525, 1.0
      %v2563 = vadd.f32 %v2527, 1.0
      %v2564 = vadd.f32 %v2529, 1.0
      %v2565 = vadd.f32 %v2531, 1.0
      %v2566 = vadd.f32 %v2533, 1.0
      %v2567 = vadd.f32 %v2535, 1.0
      %v2568 = vrcp.pop %v2536
      %v2569 = vmul.f32 1.0, %v2568
      %v2570 = vrcp.pop %v2537
      %v2571 = vmul.f32 1.0, %v2570
      %v2572 = vrcp.pop %v2538
      %v2573 = vmul.f32 1.0, %v2572
      %v2574 = vrcp.pop %v2539
      %v2575 = vmul.f32 1.0, %v2574
      %v2576 = vrcp.pop %v2540
      %v2577 = vmul.f32 1.0, %v2576
      %v2578 = vrcp.pop %v2541
      %v2579 = vmul.f32 1.0, %v2578
      %v2580 = vrcp.pop %v2542
      %v2581 = vmul.f32 1.0, %v2580
      %v2582 = vrcp.pop %v2543
      %v2583 = vmul.f32 1.0, %v2582
      %v2584 = vrcp.pop %v2544
      %v2585 = vmul.f32 1.0, %v2584
      %v2586 = vrcp.pop %v2545
      %v2587 = vmul.f32 1.0, %v2586
      %v2588 = vrcp.pop %v2546
      %v2589 = vmul.f32 1.0, %v2588
      %v2590 = vrcp.pop %v2547
      %v2591 = vmul.f32 1.0, %v2590
      %v2592 = vrcp.pop %v2548
      %v2593 = vmul.f32 1.0, %v2592
      %v2594 = vrcp.pop %v2549
      %v2595 = vmul.f32 1.0, %v2594
      %v2596 = vrcp.pop %v2550
      %v2597 = vmul.f32 1.0, %v2596
      %v2598 = vrcp.pop %v2551
      %v2599 = vmul.f32 1.0, %v2598
      %v2600 = vrcp.pop %v2552
      %v2601 = vmul.f32 1.0, %v2600
      %v2602 = vrcp.pop %v2553
      %v2603 = vmul.f32 1.0, %v2602
      %v2604 = vrcp.pop %v2554
      %v2605 = vmul.f32 1.0, %v2604
      %v2606 = vrcp.pop %v2555
      %v2607 = vmul.f32 1.0, %v2606
      %v2608 = vrcp.pop %v2556
      %v2609 = vmul.f32 1.0, %v2608
      %v2610 = vrcp.pop %v2557
      %v2611 = vmul.f32 1.0, %v2610
      %v2612 = vrcp.pop %v2558
      %v2613 = vmul.f32 1.0, %v2612
      %v2614 = vrcp.pop %v2559
      %v2615 = vmul.f32 1.0, %v2614
      %v2616 = vrcp.pop %v2560
      %v2617 = vmul.f32 1.0, %v2616
      %v2618 = vrcp.pop %v2561
      %v2619 = vmul.f32 1.0, %v2618
      %v2620 = vrcp.pop %v2562
      %v2621 = vmul.f32 1.0, %v2620
      %v2622 = vrcp.pop %v2563
      %v2623 = vmul.f32 1.0, %v2622
      %v2624 = vrcp.pop %v2564
      %v2625 = vmul.f32 1.0, %v2624
      %v2626 = vrcp.pop %v2565
      %v2627 = vmul.f32 1.0, %v2626
      %v2628 = vrcp.pop %v2566
      %v2629 = vmul.f32 1.0, %v2628
      %v2630 = vrcp.pop %v2567
      %v2631 = vmul.f32 1.0, %v2630
      %2664 = vrot.lane.b32.xlu0 %v2569, 96
      %v2665 = vpop.permute.xlu0 %2664
      %2666 = vrot.lane.b32.xlu0 %v2571, 96
      %v2667 = vpop.permute.xlu0 %2666
      %2668 = vrot.lane.b32.xlu0 %v2573, 96
      %v2669 = vpop.permute.xlu0 %2668
      %2670 = vrot.lane.b32.xlu0 %v2575, 96
      %v2671 = vpop.permute.xlu0 %2670
      %2672 = vrot.lane.b32.xlu0 %v2577, 96
      %v2673 = vpop.permute.xlu0 %2672
      %2674 = vrot.lane.b32.xlu0 %v2579, 96
      %v2675 = vpop.permute.xlu0 %2674
      %2676 = vrot.lane.b32.xlu0 %v2581, 96
      %v2677 = vpop.permute.xlu0 %2676
      %2678 = vrot.lane.b32.xlu0 %v2583, 96
      %v2679 = vpop.permute.xlu0 %2678
      %2680 = vrot.lane.b32.xlu0 %v2585, 96
      %v2681 = vpop.permute.xlu0 %2680
      %2682 = vrot.lane.b32.xlu0 %v2587, 96
      %v2683 = vpop.permute.xlu0 %2682
      %2684 = vrot.lane.b32.xlu0 %v2589, 96
      %v2685 = vpop.permute.xlu0 %2684
      %2686 = vrot.lane.b32.xlu0 %v2591, 96
      %v2687 = vpop.permute.xlu0 %2686
      %2688 = vrot.lane.b32.xlu0 %v2593, 96
      %v2689 = vpop.permute.xlu0 %2688
      %2690 = vrot.lane.b32.xlu0 %v2595, 96
      %v2691 = vpop.permute.xlu0 %2690
      %2692 = vrot.lane.b32.xlu0 %v2597, 96
      %v2693 = vpop.permute.xlu0 %2692
      %2694 = vrot.lane.b32.xlu0 %v2599, 96
      %v2695 = vpop.permute.xlu0 %2694
      %2696 = vrot.lane.b32.xlu0 %v2601, 96
      %v2697 = vpop.permute.xlu0 %2696
      %2698 = vrot.lane.b32.xlu0 %v2603, 96
      %v2699 = vpop.permute.xlu0 %2698
      %2700 = vrot.lane.b32.xlu0 %v2605, 96
      %v2701 = vpop.permute.xlu0 %2700
      %2702 = vrot.lane.b32.xlu0 %v2607, 96
      %v2703 = vpop.permute.xlu0 %2702
      %2704 = vrot.lane.b32.xlu0 %v2609, 96
      %v2705 = vpop.permute.xlu0 %2704
      %2706 = vrot.lane.b32.xlu0 %v2611, 96
      %v2707 = vpop.permute.xlu0 %2706
      %2708 = vrot.lane.b32.xlu0 %v2613, 96
      %v2709 = vpop.permute.xlu0 %2708
      %2710 = vrot.lane.b32.xlu0 %v2615, 96
      %v2711 = vpop.permute.xlu0 %2710
      %2712 = vrot.lane.b32.xlu0 %v2617, 96
      %v2713 = vpop.permute.xlu0 %2712
      %2714 = vrot.lane.b32.xlu0 %v2619, 96
      %v2715 = vpop.permute.xlu0 %2714
      %2716 = vrot.lane.b32.xlu0 %v2621, 96
      %v2717 = vpop.permute.xlu0 %2716
      %2718 = vrot.lane.b32.xlu0 %v2623, 96
      %v2719 = vpop.permute.xlu0 %2718
      %2720 = vrot.lane.b32.xlu0 %v2625, 96
      %v2721 = vpop.permute.xlu0 %2720
      %2722 = vrot.lane.b32.xlu0 %v2627, 96
      %v2723 = vpop.permute.xlu0 %2722
      %2724 = vrot.lane.b32.xlu0 %v2629, 96
      %v2725 = vpop.permute.xlu0 %2724
      %2726 = vrot.lane.b32.xlu0 %v2631, 96
      %v2727 = vpop.permute.xlu0 %2726
      %v2760 = vmul.f32 %v2408, %v2665
      %v2761 = vmul.f32 %v2409, %v2667
      %v2762 = vmul.f32 %v2410, %v2669
      %v2763 = vmul.f32 %v2411, %v2671
      %v2764 = vmul.f32 %v2412, %v2673
      %v2765 = vmul.f32 %v2413, %v2675
      %v2766 = vmul.f32 %v2414, %v2677
      %v2767 = vmul.f32 %v2415, %v2679
      %v2768 = vmul.f32 %v2416, %v2681
      %v2769 = vmul.f32 %v2417, %v2683
      %v2770 = vmul.f32 %v2418, %v2685
      %v2771 = vmul.f32 %v2419, %v2687
      %v2772 = vmul.f32 %v2420, %v2689
      %v2773 = vmul.f32 %v2421, %v2691
      %v2774 = vmul.f32 %v2422, %v2693
      %v2775 = vmul.f32 %v2423, %v2695
      %v2776 = vmul.f32 %v2424, %v2697
      %v2777 = vmul.f32 %v2425, %v2699
      %v2778 = vmul.f32 %v2426, %v2701
      %v2779 = vmul.f32 %v2427, %v2703
      %v2780 = vmul.f32 %v2428, %v2705
      %v2781 = vmul.f32 %v2429, %v2707
      %v2782 = vmul.f32 %v2430, %v2709
      %v2783 = vmul.f32 %v2431, %v2711
      %v2784 = vmul.f32 %v2432, %v2713
      %v2785 = vmul.f32 %v2433, %v2715
      %v2786 = vmul.f32 %v2434, %v2717
      %v2787 = vmul.f32 %v2435, %v2719
      %v2788 = vmul.f32 %v2436, %v2721
      %v2789 = vmul.f32 %v2437, %v2723
      %v2790 = vmul.f32 %v2438, %v2725
      %v2791 = vmul.f32 %v2439, %v2727
      %2824 = vrot.lane.b32.xlu0 %v2408, 64
      %v2825 = vpop.permute.xlu0 %2824
      %2826 = vrot.lane.b32.xlu0 %v2409, 64
      %v2827 = vpop.permute.xlu0 %2826
      %2828 = vrot.lane.b32.xlu0 %v2410, 64
      %v2829 = vpop.permute.xlu0 %2828
      %2830 = vrot.lane.b32.xlu0 %v2411, 64
      %v2831 = vpop.permute.xlu0 %2830
      %2832 = vrot.lane.b32.xlu0 %v2412, 64
      %v2833 = vpop.permute.xlu0 %2832
      %2834 = vrot.lane.b32.xlu0 %v2413, 64
      %v2835 = vpop.permute.xlu0 %2834
      %2836 = vrot.lane.b32.xlu0 %v2414, 64
      %v2837 = vpop.permute.xlu0 %2836
      %2838 = vrot.lane.b32.xlu0 %v2415, 64
      %v2839 = vpop.permute.xlu0 %2838
      %2840 = vrot.lane.b32.xlu0 %v2416, 64
      %v2841 = vpop.permute.xlu0 %2840
      %2842 = vrot.lane.b32.xlu0 %v2417, 64
      %v2843 = vpop.permute.xlu0 %2842
      %2844 = vrot.lane.b32.xlu0 %v2418, 64
      %v2845 = vpop.permute.xlu0 %2844
      %2846 = vrot.lane.b32.xlu0 %v2419, 64
      %v2847 = vpop.permute.xlu0 %2846
      %2848 = vrot.lane.b32.xlu0 %v2420, 64
      %v2849 = vpop.permute.xlu0 %2848
      %2850 = vrot.lane.b32.xlu0 %v2421, 64
      %v2851 = vpop.permute.xlu0 %2850
      %2852 = vrot.lane.b32.xlu0 %v2422, 64
      %v2853 = vpop.permute.xlu0 %2852
      %2854 = vrot.lane.b32.xlu0 %v2423, 64
      %v2855 = vpop.permute.xlu0 %2854
      %2856 = vrot.lane.b32.xlu0 %v2424, 64
      %v2857 = vpop.permute.xlu0 %2856
      %2858 = vrot.lane.b32.xlu0 %v2425, 64
      %v2859 = vpop.permute.xlu0 %2858
      %2860 = vrot.lane.b32.xlu0 %v2426, 64
      %v2861 = vpop.permute.xlu0 %2860
      %2862 = vrot.lane.b32.xlu0 %v2427, 64
      %v2863 = vpop.permute.xlu0 %2862
      %2864 = vrot.lane.b32.xlu0 %v2428, 64
      %v2865 = vpop.permute.xlu0 %2864
      %2866 = vrot.lane.b32.xlu0 %v2429, 64
      %v2867 = vpop.permute.xlu0 %2866
      %2868 = vrot.lane.b32.xlu0 %v2430, 64
      %v2869 = vpop.permute.xlu0 %2868
      %2870 = vrot.lane.b32.xlu0 %v2431, 64
      %v2871 = vpop.permute.xlu0 %2870
      %2872 = vrot.lane.b32.xlu0 %v2432, 64
      %v2873 = vpop.permute.xlu0 %2872
      %2874 = vrot.lane.b32.xlu0 %v2433, 64
      %v2875 = vpop.permute.xlu0 %2874
      %2876 = vrot.lane.b32.xlu0 %v2434, 64
      %v2877 = vpop.permute.xlu0 %2876
      %2878 = vrot.lane.b32.xlu0 %v2435, 64
      %v2879 = vpop.permute.xlu0 %2878
      %2880 = vrot.lane.b32.xlu0 %v2436, 64
      %v2881 = vpop.permute.xlu0 %2880
      %2882 = vrot.lane.b32.xlu0 %v2437, 64
      %v2883 = vpop.permute.xlu0 %2882
      %2884 = vrot.lane.b32.xlu0 %v2438, 64
      %v2885 = vpop.permute.xlu0 %2884
      %2886 = vrot.lane.b32.xlu0 %v2439, 64
      %v2887 = vpop.permute.xlu0 %2886
      %v2920 = vadd.f32 %v2760, %v2825
      %v2921 = vadd.f32 %v2761, %v2827
      %v2922 = vadd.f32 %v2762, %v2829
      %v2923 = vadd.f32 %v2763, %v2831
      %v2924 = vadd.f32 %v2764, %v2833
      %v2925 = vadd.f32 %v2765, %v2835
      %v2926 = vadd.f32 %v2766, %v2837
      %v2927 = vadd.f32 %v2767, %v2839
      %v2928 = vadd.f32 %v2768, %v2841
      %v2929 = vadd.f32 %v2769, %v2843
      %v2930 = vadd.f32 %v2770, %v2845
      %v2931 = vadd.f32 %v2771, %v2847
      %v2932 = vadd.f32 %v2772, %v2849
      %v2933 = vadd.f32 %v2773, %v2851
      %v2934 = vadd.f32 %v2774, %v2853
      %v2935 = vadd.f32 %v2775, %v2855
      %v2936 = vadd.f32 %v2776, %v2857
      %v2937 = vadd.f32 %v2777, %v2859
      %v2938 = vadd.f32 %v2778, %v2861
      %v2939 = vadd.f32 %v2779, %v2863
      %v2940 = vadd.f32 %v2780, %v2865
      %v2941 = vadd.f32 %v2781, %v2867
      %v2942 = vadd.f32 %v2782, %v2869
      %v2943 = vadd.f32 %v2783, %v2871
      %v2944 = vadd.f32 %v2784, %v2873
      %v2945 = vadd.f32 %v2785, %v2875
      %v2946 = vadd.f32 %v2786, %v2877
      %v2947 = vadd.f32 %v2787, %v2879
      %v2948 = vadd.f32 %v2788, %v2881
      %v2949 = vadd.f32 %v2789, %v2883
      %v2950 = vadd.f32 %v2790, %v2885
      %v2951 = vadd.f32 %v2791, %v2887
      %v2952 = vmax.f32 %v2920, 0.0
      %v2953 = vmax.f32 %v2921, 0.0
      %v2954 = vmax.f32 %v2922, 0.0
      %v2955 = vmax.f32 %v2923, 0.0
      %v2956 = vmax.f32 %v2924, 0.0
      %v2957 = vmax.f32 %v2925, 0.0
      %v2958 = vmax.f32 %v2926, 0.0
      %v2959 = vmax.f32 %v2927, 0.0
      %v2960 = vmax.f32 %v2928, 0.0
      %v2961 = vmax.f32 %v2929, 0.0
      %v2962 = vmax.f32 %v2930, 0.0
      %v2963 = vmax.f32 %v2931, 0.0
      %v2964 = vmax.f32 %v2932, 0.0
      %v2965 = vmax.f32 %v2933, 0.0
      %v2966 = vmax.f32 %v2934, 0.0
      %v2967 = vmax.f32 %v2935, 0.0
      %v2968 = vmax.f32 %v2936, 0.0
      %v2969 = vmax.f32 %v2937, 0.0
      %v2970 = vmax.f32 %v2938, 0.0
      %v2971 = vmax.f32 %v2939, 0.0
      %v2972 = vmax.f32 %v2940, 0.0
      %v2973 = vmax.f32 %v2941, 0.0
      %v2974 = vmax.f32 %v2942, 0.0
      %v2975 = vmax.f32 %v2943, 0.0
      %v2976 = vmax.f32 %v2944, 0.0
      %v2977 = vmax.f32 %v2945, 0.0
      %v2978 = vmax.f32 %v2946, 0.0
      %v2979 = vmax.f32 %v2947, 0.0
      %v2980 = vmax.f32 %v2948, 0.0
      %v2981 = vmax.f32 %v2949, 0.0
      %v2982 = vmax.f32 %v2950, 0.0
      %v2983 = vmax.f32 %v2951, 0.0
      %v2984 = vmul.f32 %v2952, %v202
      %v2985 = vmul.f32 %v2953, %v203
      %v2986 = vmul.f32 %v2954, %v202
      %v2987 = vmul.f32 %v2955, %v203
      %v2988 = vmul.f32 %v2956, %v202
      %v2989 = vmul.f32 %v2957, %v203
      %v2990 = vmul.f32 %v2958, %v202
      %v2991 = vmul.f32 %v2959, %v203
      %v2992 = vmul.f32 %v2960, %v202
      %v2993 = vmul.f32 %v2961, %v203
      %v2994 = vmul.f32 %v2962, %v202
      %v2995 = vmul.f32 %v2963, %v203
      %v2996 = vmul.f32 %v2964, %v202
      %v2997 = vmul.f32 %v2965, %v203
      %v2998 = vmul.f32 %v2966, %v202
      %v2999 = vmul.f32 %v2967, %v203
      %v3000 = vmul.f32 %v2968, %v202
      %v3001 = vmul.f32 %v2969, %v203
      %v3002 = vmul.f32 %v2970, %v202
      %v3003 = vmul.f32 %v2971, %v203
      %v3004 = vmul.f32 %v2972, %v202
      %v3005 = vmul.f32 %v2973, %v203
      %v3006 = vmul.f32 %v2974, %v202
      %v3007 = vmul.f32 %v2975, %v203
      %v3008 = vmul.f32 %v2976, %v202
      %v3009 = vmul.f32 %v2977, %v203
      %v3010 = vmul.f32 %v2978, %v202
      %v3011 = vmul.f32 %v2979, %v203
      %v3012 = vmul.f32 %v2980, %v202
      %v3013 = vmul.f32 %v2981, %v203
      %v3014 = vmul.f32 %v2982, %v202
      %v3015 = vmul.f32 %v2983, %v203
      %3018 = vrot.lane.b32.xlu0 %v202, 96
      %v3019 = vpop.permute.xlu0 %3018
      %3020 = vrot.lane.b32.xlu0 %v203, 96
      %v3021 = vpop.permute.xlu0 %3020
      %v3024 = vadd.f32 %v2984, %v3019
      %v3025 = vadd.f32 %v2985, %v3021
      %v3026 = vadd.f32 %v2986, %v3019
      %v3027 = vadd.f32 %v2987, %v3021
      %v3028 = vadd.f32 %v2988, %v3019
      %v3029 = vadd.f32 %v2989, %v3021
      %v3030 = vadd.f32 %v2990, %v3019
      %v3031 = vadd.f32 %v2991, %v3021
      %v3032 = vadd.f32 %v2992, %v3019
      %v3033 = vadd.f32 %v2993, %v3021
      %v3034 = vadd.f32 %v2994, %v3019
      %v3035 = vadd.f32 %v2995, %v3021
      %v3036 = vadd.f32 %v2996, %v3019
      %v3037 = vadd.f32 %v2997, %v3021
      %v3038 = vadd.f32 %v2998, %v3019
      %v3039 = vadd.f32 %v2999, %v3021
      %v3040 = vadd.f32 %v3000, %v3019
      %v3041 = vadd.f32 %v3001, %v3021
      %v3042 = vadd.f32 %v3002, %v3019
      %v3043 = vadd.f32 %v3003, %v3021
      %v3044 = vadd.f32 %v3004, %v3019
      %v3045 = vadd.f32 %v3005, %v3021
      %v3046 = vadd.f32 %v3006, %v3019
      %v3047 = vadd.f32 %v3007, %v3021
      %v3048 = vadd.f32 %v3008, %v3019
      %v3049 = vadd.f32 %v3009, %v3021
      %v3050 = vadd.f32 %v3010, %v3019
      %v3051 = vadd.f32 %v3011, %v3021
      %v3052 = vadd.f32 %v3012, %v3019
      %v3053 = vadd.f32 %v3013, %v3021
      %v3054 = vadd.f32 %v3014, %v3019
      %v3055 = vadd.f32 %v3015, %v3021
      %v3056 = vmax.f32 %v3024, 0.0
      %v3057 = vmax.f32 %v3025, 0.0
      %v3058 = vmax.f32 %v3026, 0.0
      %v3059 = vmax.f32 %v3027, 0.0
      %v3060 = vmax.f32 %v3028, 0.0
      %v3061 = vmax.f32 %v3029, 0.0
      %v3062 = vmax.f32 %v3030, 0.0
      %v3063 = vmax.f32 %v3031, 0.0
      %v3064 = vmax.f32 %v3032, 0.0
      %v3065 = vmax.f32 %v3033, 0.0
      %v3066 = vmax.f32 %v3034, 0.0
      %v3067 = vmax.f32 %v3035, 0.0
      %v3068 = vmax.f32 %v3036, 0.0
      %v3069 = vmax.f32 %v3037, 0.0
      %v3070 = vmax.f32 %v3038, 0.0
      %v3071 = vmax.f32 %v3039, 0.0
      %v3072 = vmax.f32 %v3040, 0.0
      %v3073 = vmax.f32 %v3041, 0.0
      %v3074 = vmax.f32 %v3042, 0.0
      %v3075 = vmax.f32 %v3043, 0.0
      %v3076 = vmax.f32 %v3044, 0.0
      %v3077 = vmax.f32 %v3045, 0.0
      %v3078 = vmax.f32 %v3046, 0.0
      %v3079 = vmax.f32 %v3047, 0.0
      %v3080 = vmax.f32 %v3048, 0.0
      %v3081 = vmax.f32 %v3049, 0.0
      %v3082 = vmax.f32 %v3050, 0.0
      %v3083 = vmax.f32 %v3051, 0.0
      %v3084 = vmax.f32 %v3052, 0.0
      %v3085 = vmax.f32 %v3053, 0.0
      %v3086 = vmax.f32 %v3054, 0.0
      %v3087 = vmax.f32 %v3055, 0.0
      %v3088 = vpack.c.bf16 %v3057, %v3056
      %v3089 = vpack.c.bf16 %v3059, %v3058
      %v3090 = vpack.c.bf16 %v3061, %v3060
      %v3091 = vpack.c.bf16 %v3063, %v3062
      %v3092 = vpack.c.bf16 %v3065, %v3064
      %v3093 = vpack.c.bf16 %v3067, %v3066
      %v3094 = vpack.c.bf16 %v3069, %v3068
      %v3095 = vpack.c.bf16 %v3071, %v3070
      %v3096 = vpack.c.bf16 %v3073, %v3072
      %v3097 = vpack.c.bf16 %v3075, %v3074
      %v3098 = vpack.c.bf16 %v3077, %v3076
      %v3099 = vpack.c.bf16 %v3079, %v3078
      %v3100 = vpack.c.bf16 %v3081, %v3080
      %v3101 = vpack.c.bf16 %v3083, %v3082
      %v3102 = vpack.c.bf16 %v3085, %v3084
      %v3103 = vpack.c.bf16 %v3087, %v3086
      %v3104 = vld [vmem:[%s2] sm:$0xf]
      %v3105 = vld [vmem:[%s2 + $0x4] sm:$0xf]
      %v3106 = vld [vmem:[%s2 + $0x8] sm:$0xf]
      %v3107 = vld [vmem:[%s2 + $0xc] sm:$0xf]
      %v3108 = vld [vmem:[%s2 + $0x10] sm:$0xf]
      %v3109 = vld [vmem:[%s2 + $0x14] sm:$0xf]
      %v3110 = vld [vmem:[%s2 + $0x18] sm:$0xf]
      %v3111 = vld [vmem:[%s2 + $0x1c] sm:$0xf]
      %v3116 = vunpack.c.l.b16 %v3108
      %v3117 = vunpack.c.l.b16 %v3109
      %v3118 = vunpack.c.l.b16 %v3110
      %v3119 = vunpack.c.l.b16 %v3111
      %v3120 = vpack.c.b16 %v3117, %v3116
      %v3121 = vpack.c.b16 %v3119, %v3118
      %v3125 = vsel %vm1275, %v3089, 0
      %3127 = vmatprep.subr.bf16.mxu0 0
      %3128 = vmatpush1.bf16.msra.mxu0 %v3120
      %3129 = vmatprep.subr.bf16.mxu0 0
      %3130 = vmatpush1.bf16.msra.mxu0 %v3121
      %3131 = vmatprep.subr.bf16.mxu0 0
      %3132 = vmatpush1.bf16.msra.mxu0 0
      %3133 = vmatprep.subr.bf16.mxu0 0
      %3134 = vmatpush1.bf16.msra.mxu0 0
      %3135 = vmatprep.subr.bf16.mxu0 0
      %3136 = vmatpush1.bf16.msra.mxu0 0
      %3137 = vmatprep.subr.bf16.mxu0 0
      %3138 = vmatpush1.bf16.msra.mxu0 0
      %3139 = vmatprep.subr.bf16.mxu0 0
      %3140 = vmatpush1.bf16.msra.mxu0 0
      %3141 = vmatprep.subr.bf16.mxu0 0
      %3142 = vmatpush1.bf16.msra.mxu0 0
      %3143 = vmatprep.subr.bf16.mxu0 0
      %3144 = vmatpush1.bf16.msra.mxu0 0
      %3145 = vmatprep.subr.bf16.mxu0 0
      %3146 = vmatpush1.bf16.msra.mxu0 0
      %3147 = vmatprep.subr.bf16.mxu0 0
      %3148 = vmatpush1.bf16.msra.mxu0 0
      %3149 = vmatprep.subr.bf16.mxu0 0
      %3150 = vmatpush1.bf16.msra.mxu0 0
      %3151 = vmatprep.subr.bf16.mxu0 0
      %3152 = vmatpush1.bf16.msra.mxu0 0
      %3153 = vmatprep.subr.bf16.mxu0 0
      %3154 = vmatpush1.bf16.msra.mxu0 0
      %3155 = vmatprep.subr.bf16.mxu0 0
      %3156 = vmatpush1.bf16.msra.mxu0 0
      %3157 = vmatprep.subr.bf16.mxu0 0
      %3158 = vmatpush1.bf16.msra.mxu0 0
      %3159 = vmatprep.mubr.bf16.mxu0 0
      %3160 = vmatmul.mubr.bf16.gmra.mrb[0].mxu0 %v3125
      %v3161 = vpop.f32.mrb[0].mxu0
      %v3162 = vadd.f32 0.0, %v3161
      %v3163 = vpop.f32.mrb[0].mxu0
      %v3164 = vpop.f32.mrb[0].mxu0
      %v3165 = vadd.f32 0.0, %v3164
      %v3166 = vpop.f32.mrb[0].mxu0
      %3167 = vdwg.mxu0
      %v3172 = vunpack.c.l.b16 %v3104
      %v3173 = vunpack.c.l.b16 %v3105
      %v3174 = vunpack.c.l.b16 %v3106
      %v3175 = vunpack.c.l.b16 %v3107
      %v3176 = vpack.c.b16 %v3173, %v3172
      %v3177 = vpack.c.b16 %v3175, %v3174
      %v3181 = vsel %vm1275, %v3088, 0
      %3183 = vmatprep.subr.bf16.mxu0 0
      %3184 = vmatpush1.bf16.msra.mxu0 %v3176
      %3185 = vmatprep.subr.bf16.mxu0 0
      %3186 = vmatpush1.bf16.msra.mxu0 %v3177
      %3187 = vmatprep.subr.bf16.mxu0 0
      %3188 = vmatpush1.bf16.msra.mxu0 0
      %3189 = vmatprep.subr.bf16.mxu0 0
      %3190 = vmatpush1.bf16.msra.mxu0 0
      %3191 = vmatprep.subr.bf16.mxu0 0
      %3192 = vmatpush1.bf16.msra.mxu0 0
      %3193 = vmatprep.subr.bf16.mxu0 0
      %3194 = vmatpush1.bf16.msra.mxu0 0
      %3195 = vmatprep.subr.bf16.mxu0 0
      %3196 = vmatpush1.bf16.msra.mxu0 0
      %3197 = vmatprep.subr.bf16.mxu0 0
      %3198 = vmatpush1.bf16.msra.mxu0 0
      %3199 = vmatprep.subr.bf16.mxu0 0
      %3200 = vmatpush1.bf16.msra.mxu0 0
      %3201 = vmatprep.subr.bf16.mxu0 0
      %3202 = vmatpush1.bf16.msra.mxu0 0
      %3203 = vmatprep.subr.bf16.mxu0 0
      %3204 = vmatpush1.bf16.msra.mxu0 0
      %3205 = vmatprep.subr.bf16.mxu0 0
      %3206 = vmatpush1.bf16.msra.mxu0 0
      %3207 = vmatprep.subr.bf16.mxu0 0
      %3208 = vmatpush1.bf16.msra.mxu0 0
      %3209 = vmatprep.subr.bf16.mxu0 0
      %3210 = vmatpush1.bf16.msra.mxu0 0
      %3211 = vmatprep.subr.bf16.mxu0 0
      %3212 = vmatpush1.bf16.msra.mxu0 0
      %3213 = vmatprep.subr.bf16.mxu0 0
      %3214 = vmatpush1.bf16.msra.mxu0 0
      %3215 = vmatprep.mubr.bf16.mxu0 0
      %3216 = vmatmul.mubr.bf16.gmra.mrb[0].mxu0 %v3181
      %v3217 = vpop.f32.mrb[0].mxu0
      %v3218 = vadd.f32 %v3162, %v3217
      %v3219 = vpop.f32.mrb[0].mxu0
      %v3220 = vpop.f32.mrb[0].mxu0
      %v3221 = vadd.f32 %v3165, %v3220
      %v3222 = vpop.f32.mrb[0].mxu0
      %3223 = vdwg.mxu0
      %v3224 = vld [vmem:[%s2 + $0x20] sm:$0xf]
      %v3225 = vld [vmem:[%s2 + $0x24] sm:$0xf]
      %v3226 = vld [vmem:[%s2 + $0x28] sm:$0xf]
      %v3227 = vld [vmem:[%s2 + $0x2c] sm:$0xf]
      %v3232 = vunpack.c.l.b16 %v3224
      %v3233 = vunpack.c.l.b16 %v3225
      %v3234 = vunpack.c.l.b16 %v3226
      %v3235 = vunpack.c.l.b16 %v3227
      %v3236 = vpack.c.b16 %v3233, %v3232
      %v3237 = vpack.c.b16 %v3235, %v3234
      %v3241 = vsel %vm1275, %v3090, 0
      %3243 = vmatprep.subr.bf16.mxu0 0
      %3244 = vmatpush1.bf16.msra.mxu0 %v3236
      %3245 = vmatprep.subr.bf16.mxu0 0
      %3246 = vmatpush1.bf16.msra.mxu0 %v3237
      %3247 = vmatprep.subr.bf16.mxu0 0
      %3248 = vmatpush1.bf16.msra.mxu0 0
      %3249 = vmatprep.subr.bf16.mxu0 0
      %3250 = vmatpush1.bf16.msra.mxu0 0
      %3251 = vmatprep.subr.bf16.mxu0 0
      %3252 = vmatpush1.bf16.msra.mxu0 0
      %3253 = vmatprep.subr.bf16.mxu0 0
      %3254 = vmatpush1.bf16.msra.mxu0 0
      %3255 = vmatprep.subr.bf16.mxu0 0
      %3256 = vmatpush1.bf16.msra.mxu0 0
      %3257 = vmatprep.subr.bf16.mxu0 0
      %3258 = vmatpush1.bf16.msra.mxu0 0
      %3259 = vmatprep.subr.bf16.mxu0 0
      %3260 = vmatpush1.bf16.msra.mxu0 0
      %3261 = vmatprep.subr.bf16.mxu0 0
      %3262 = vmatpush1.bf16.msra.mxu0 0
      %3263 = vmatprep.subr.bf16.mxu0 0
      %3264 = vmatpush1.bf16.msra.mxu0 0
      %3265 = vmatprep.subr.bf16.mxu0 0
      %3266 = vmatpush1.bf16.msra.mxu0 0
      %3267 = vmatprep.subr.bf16.mxu0 0
      %3268 = vmatpush1.bf16.msra.mxu0 0
      %3269 = vmatprep.subr.bf16.mxu0 0
      %3270 = vmatpush1.bf16.msra.mxu0 0
      %3271 = vmatprep.subr.bf16.mxu0 0
      %3272 = vmatpush1.bf16.msra.mxu0 0
      %3273 = vmatprep.subr.bf16.mxu0 0
      %3274 = vmatpush1.bf16.msra.mxu0 0
      %3275 = vmatprep.mubr.bf16.mxu0 0
      %3276 = vmatmul.mubr.bf16.gmra.mrb[0].mxu0 %v3241
      %v3277 = vpop.f32.mrb[0].mxu0
      %v3278 = vadd.f32 0.0, %v3277
      %v3279 = vpop.f32.mrb[0].mxu0
      %v3280 = vpop.f32.mrb[0].mxu0
      %v3281 = vadd.f32 0.0, %v3280
      %v3282 = vpop.f32.mrb[0].mxu0
      %3283 = vdwg.mxu0
      %v3284 = vadd.f32 %v3218, %v3278
      %v3285 = vadd.f32 %v3221, %v3281
      %v3286 = vld [vmem:[%s2 + $0x30] sm:$0xf]
      %v3287 = vld [vmem:[%s2 + $0x34] sm:$0xf]
      %v3288 = vld [vmem:[%s2 + $0x38] sm:$0xf]
      %v3289 = vld [vmem:[%s2 + $0x3c] sm:$0xf]
      %v3294 = vunpack.c.l.b16 %v3286
      %v3295 = vunpack.c.l.b16 %v3287
      %v3296 = vunpack.c.l.b16 %v3288
      %v3297 = vunpack.c.l.b16 %v3289
      %v3298 = vpack.c.b16 %v3295, %v3294
      %v3299 = vpack.c.b16 %v3297, %v3296
      %v3303 = vsel %vm1275, %v3091, 0
      %3305 = vmatprep.subr.bf16.mxu0 0
      %3306 = vmatpush1.bf16.msra.mxu0 %v3298
      %3307 = vmatprep.subr.bf16.mxu0 0
      %3308 = vmatpush1.bf16.msra.mxu0 %v3299
      %3309 = vmatprep.subr.bf16.mxu0 0
      %3310 = vmatpush1.bf16.msra.mxu0 0
      %3311 = vmatprep.subr.bf16.mxu0 0
      %3312 = vmatpush1.bf16.msra.mxu0 0
      %3313 = vmatprep.subr.bf16.mxu0 0
      %3314 = vmatpush1.bf16.msra.mxu0 0
      %3315 = vmatprep.subr.bf16.mxu0 0
      %3316 = vmatpush1.bf16.msra.mxu0 0
      %3317 = vmatprep.subr.bf16.mxu0 0
      %3318 = vmatpush1.bf16.msra.mxu0 0
      %3319 = vmatprep.subr.bf16.mxu0 0
      %3320 = vmatpush1.bf16.msra.mxu0 0
      %3321 = vmatprep.subr.bf16.mxu0 0
      %3322 = vmatpush1.bf16.msra.mxu0 0
      %3323 = vmatprep.subr.bf16.mxu0 0
      %3324 = vmatpush1.bf16.msra.mxu0 0
      %3325 = vmatprep.subr.bf16.mxu0 0
      %3326 = vmatpush1.bf16.msra.mxu0 0
      %3327 = vmatprep.subr.bf16.mxu0 0
      %3328 = vmatpush1.bf16.msra.mxu0 0
      %3329 = vmatprep.subr.bf16.mxu0 0
      %3330 = vmatpush1.bf16.msra.mxu0 0
      %3331 = vmatprep.subr.bf16.mxu0 0
      %3332 = vmatpush1.bf16.msra.mxu0 0
      %3333 = vmatprep.subr.bf16.mxu0 0
      %3334 = vmatpush1.bf16.msra.mxu0 0
      %3335 = vmatprep.subr.bf16.mxu0 0
      %3336 = vmatpush1.bf16.msra.mxu0 0
      %3337 = vmatprep.mubr.bf16.mxu0 0
      %3338 = vmatmul.mubr.bf16.gmra.mrb[0].mxu0 %v3303
      %v3339 = vpop.f32.mrb[0].mxu0
      %v3340 = vadd.f32 0.0, %v3339
      %v3341 = vpop.f32.mrb[0].mxu0
      %v3342 = vpop.f32.mrb[0].mxu0
      %v3343 = vadd.f32 0.0, %v3342
      %v3344 = vpop.f32.mrb[0].mxu0
      %3345 = vdwg.mxu0
      %v3346 = vadd.f32 %v3284, %v3340
      %v3347 = vadd.f32 %v3285, %v3343
      %v3348 = vld [vmem:[%s2 + $0x40] sm:$0xf]
      %v3349 = vld [vmem:[%s2 + $0x44] sm:$0xf]
      %v3350 = vld [vmem:[%s2 + $0x48] sm:$0xf]
      %v3351 = vld [vmem:[%s2 + $0x4c] sm:$0xf]
      %v3356 = vunpack.c.l.b16 %v3348
      %v3357 = vunpack.c.l.b16 %v3349
      %v3358 = vunpack.c.l.b16 %v3350
      %v3359 = vunpack.c.l.b16 %v3351
      %v3360 = vpack.c.b16 %v3357, %v3356
      %v3361 = vpack.c.b16 %v3359, %v3358
      %v3365 = vsel %vm1275, %v3092, 0
      %3367 = vmatprep.subr.bf16.mxu0 0
      %3368 = vmatpush1.bf16.msra.mxu0 %v3360
      %3369 = vmatprep.subr.bf16.mxu0 0
      %3370 = vmatpush1.bf16.msra.mxu0 %v3361
      %3371 = vmatprep.subr.bf16.mxu0 0
      %3372 = vmatpush1.bf16.msra.mxu0 0
      %3373 = vmatprep.subr.bf16.mxu0 0
      %3374 = vmatpush1.bf16.msra.mxu0 0
      %3375 = vmatprep.subr.bf16.mxu0 0
      %3376 = vmatpush1.bf16.msra.mxu0 0
      %3377 = vmatprep.subr.bf16.mxu0 0
      %3378 = vmatpush1.bf16.msra.mxu0 0
      %3379 = vmatprep.subr.bf16.mxu0 0
      %3380 = vmatpush1.bf16.msra.mxu0 0
      %3381 = vmatprep.subr.bf16.mxu0 0
      %3382 = vmatpush1.bf16.msra.mxu0 0
      %3383 = vmatprep.subr.bf16.mxu0 0
      %3384 = vmatpush1.bf16.msra.mxu0 0
      %3385 = vmatprep.subr.bf16.mxu0 0
      %3386 = vmatpush1.bf16.msra.mxu0 0
      %3387 = vmatprep.subr.bf16.mxu0 0
      %3388 = vmatpush1.bf16.msra.mxu0 0
      %3389 = vmatprep.subr.bf16.mxu0 0
      %3390 = vmatpush1.bf16.msra.mxu0 0
      %3391 = vmatprep.subr.bf16.mxu0 0
      %3392 = vmatpush1.bf16.msra.mxu0 0
      %3393 = vmatprep.subr.bf16.mxu0 0
      %3394 = vmatpush1.bf16.msra.mxu0 0
      %3395 = vmatprep.subr.bf16.mxu0 0
      %3396 = vmatpush1.bf16.msra.mxu0 0
      %3397 = vmatprep.subr.bf16.mxu0 0
      %3398 = vmatpush1.bf16.msra.mxu0 0
      %3399 = vmatprep.mubr.bf16.mxu0 0
      %3400 = vmatmul.mubr.bf16.gmra.mrb[0].mxu0 %v3365
      %v3401 = vpop.f32.mrb[0].mxu0
      %v3402 = vadd.f32 0.0, %v3401
      %v3403 = vpop.f32.mrb[0].mxu0
      %v3404 = vpop.f32.mrb[0].mxu0
      %v3405 = vadd.f32 0.0, %v3404
      %v3406 = vpop.f32.mrb[0].mxu0
      %3407 = vdwg.mxu0
      %v3408 = vadd.f32 %v3346, %v3402
      %v3409 = vadd.f32 %v3347, %v3405
      %v3410 = vld [vmem:[%s2 + $0x50] sm:$0xf]
      %v3411 = vld [vmem:[%s2 + $0x54] sm:$0xf]
      %v3412 = vld [vmem:[%s2 + $0x58] sm:$0xf]
      %v3413 = vld [vmem:[%s2 + $0x5c] sm:$0xf]
      %v3418 = vunpack.c.l.b16 %v3410
      %v3419 = vunpack.c.l.b16 %v3411
      %v3420 = vunpack.c.l.b16 %v3412
      %v3421 = vunpack.c.l.b16 %v3413
      %v3422 = vpack.c.b16 %v3419, %v3418
      %v3423 = vpack.c.b16 %v3421, %v3420
      %v3427 = vsel %vm1275, %v3093, 0
      %3429 = vmatprep.subr.bf16.mxu0 0
      %3430 = vmatpush1.bf16.msra.mxu0 %v3422
      %3431 = vmatprep.subr.bf16.mxu0 0
      %3432 = vmatpush1.bf16.msra.mxu0 %v3423
      %3433 = vmatprep.subr.bf16.mxu0 0
      %3434 = vmatpush1.bf16.msra.mxu0 0
      %3435 = vmatprep.subr.bf16.mxu0 0
      %3436 = vmatpush1.bf16.msra.mxu0 0
      %3437 = vmatprep.subr.bf16.mxu0 0
      %3438 = vmatpush1.bf16.msra.mxu0 0
      %3439 = vmatprep.subr.bf16.mxu0 0
      %3440 = vmatpush1.bf16.msra.mxu0 0
      %3441 = vmatprep.subr.bf16.mxu0 0
      %3442 = vmatpush1.bf16.msra.mxu0 0
      %3443 = vmatprep.subr.bf16.mxu0 0
      %3444 = vmatpush1.bf16.msra.mxu0 0
      %3445 = vmatprep.subr.bf16.mxu0 0
      %3446 = vmatpush1.bf16.msra.mxu0 0
      %3447 = vmatprep.subr.bf16.mxu0 0
      %3448 = vmatpush1.bf16.msra.mxu0 0
      %3449 = vmatprep.subr.bf16.mxu0 0
      %3450 = vmatpush1.bf16.msra.mxu0 0
      %3451 = vmatprep.subr.bf16.mxu0 0
      %3452 = vmatpush1.bf16.msra.mxu0 0
      %3453 = vmatprep.subr.bf16.mxu0 0
      %3454 = vmatpush1.bf16.msra.mxu0 0
      %3455 = vmatprep.subr.bf16.mxu0 0
      %3456 = vmatpush1.bf16.msra.mxu0 0
      %3457 = vmatprep.subr.bf16.mxu0 0
      %3458 = vmatpush1.bf16.msra.mxu0 0
      %3459 = vmatprep.subr.bf16.mxu0 0
      %3460 = vmatpush1.bf16.msra.mxu0 0
      %3461 = vmatprep.mubr.bf16.mxu0 0
      %3462 = vmatmul.mubr.bf16.gmra.mrb[0].mxu0 %v3427
      %v3463 = vpop.f32.mrb[0].mxu0
      %v3464 = vadd.f32 0.0, %v3463
      %v3465 = vpop.f32.mrb[0].mxu0
      %v3466 = vpop.f32.mrb[0].mxu0
      %v3467 = vadd.f32 0.0, %v3466
      %v3468 = vpop.f32.mrb[0].mxu0
      %3469 = vdwg.mxu0
      %v3470 = vadd.f32 %v3408, %v3464
      %v3471 = vadd.f32 %v3409, %v3467
      %v3472 = vld [vmem:[%s2 + $0x60] sm:$0xf]
      %v3473 = vld [vmem:[%s2 + $0x64] sm:$0xf]
      %v3474 = vld [vmem:[%s2 + $0x68] sm:$0xf]
      %v3475 = vld [vmem:[%s2 + $0x6c] sm:$0xf]
      %v3480 = vunpack.c.l.b16 %v3472
      %v3481 = vunpack.c.l.b16 %v3473
      %v3482 = vunpack.c.l.b16 %v3474
      %v3483 = vunpack.c.l.b16 %v3475
      %v3484 = vpack.c.b16 %v3481, %v3480
      %v3485 = vpack.c.b16 %v3483, %v3482
      %v3489 = vsel %vm1275, %v3094, 0
      %3491 = vmatprep.subr.bf16.mxu0 0
      %3492 = vmatpush1.bf16.msra.mxu0 %v3484
      %3493 = vmatprep.subr.bf16.mxu0 0
      %3494 = vmatpush1.bf16.msra.mxu0 %v3485
      %3495 = vmatprep.subr.bf16.mxu0 0
      %3496 = vmatpush1.bf16.msra.mxu0 0
      %3497 = vmatprep.subr.bf16.mxu0 0
      %3498 = vmatpush1.bf16.msra.mxu0 0
      %3499 = vmatprep.subr.bf16.mxu0 0
      %3500 = vmatpush1.bf16.msra.mxu0 0
      %3501 = vmatprep.subr.bf16.mxu0 0
      %3502 = vmatpush1.bf16.msra.mxu0 0
      %3503 = vmatprep.subr.bf16.mxu0 0
      %3504 = vmatpush1.bf16.msra.mxu0 0
      %3505 = vmatprep.subr.bf16.mxu0 0
      %3506 = vmatpush1.bf16.msra.mxu0 0
      %3507 = vmatprep.subr.bf16.mxu0 0
      %3508 = vmatpush1.bf16.msra.mxu0 0
      %3509 = vmatprep.subr.bf16.mxu0 0
      %3510 = vmatpush1.bf16.msra.mxu0 0
      %3511 = vmatprep.subr.bf16.mxu0 0
      %3512 = vmatpush1.bf16.msra.mxu0 0
      %3513 = vmatprep.subr.bf16.mxu0 0
      %3514 = vmatpush1.bf16.msra.mxu0 0
      %3515 = vmatprep.subr.bf16.mxu0 0
      %3516 = vmatpush1.bf16.msra.mxu0 0
      %3517 = vmatprep.subr.bf16.mxu0 0
      %3518 = vmatpush1.bf16.msra.mxu0 0
      %3519 = vmatprep.subr.bf16.mxu0 0
      %3520 = vmatpush1.bf16.msra.mxu0 0
      %3521 = vmatprep.subr.bf16.mxu0 0
      %3522 = vmatpush1.bf16.msra.mxu0 0
      %3523 = vmatprep.mubr.bf16.mxu0 0
      %3524 = vmatmul.mubr.bf16.gmra.mrb[0].mxu0 %v3489
      %v3525 = vpop.f32.mrb[0].mxu0
      %v3526 = vadd.f32 0.0, %v3525
      %v3527 = vpop.f32.mrb[0].mxu0
      %v3528 = vpop.f32.mrb[0].mxu0
      %v3529 = vadd.f32 0.0, %v3528
      %v3530 = vpop.f32.mrb[0].mxu0
      %3531 = vdwg.mxu0
      %v3532 = vadd.f32 %v3470, %v3526
      %v3533 = vadd.f32 %v3471, %v3529
      %v3534 = vld [vmem:[%s2 + $0x70] sm:$0xf]
      %v3535 = vld [vmem:[%s2 + $0x74] sm:$0xf]
      %v3536 = vld [vmem:[%s2 + $0x78] sm:$0xf]
      %v3537 = vld [vmem:[%s2 + $0x7c] sm:$0xf]
      %v3542 = vunpack.c.l.b16 %v3534
      %v3543 = vunpack.c.l.b16 %v3535
      %v3544 = vunpack.c.l.b16 %v3536
      %v3545 = vunpack.c.l.b16 %v3537
      %v3546 = vpack.c.b16 %v3543, %v3542
      %v3547 = vpack.c.b16 %v3545, %v3544
      %v3551 = vsel %vm1275, %v3095, 0
      %3553 = vmatprep.subr.bf16.mxu0 0
      %3554 = vmatpush1.bf16.msra.mxu0 %v3546
      %3555 = vmatprep.subr.bf16.mxu0 0
      %3556 = vmatpush1.bf16.msra.mxu0 %v3547
      %3557 = vmatprep.subr.bf16.mxu0 0
      %3558 = vmatpush1.bf16.msra.mxu0 0
      %3559 = vmatprep.subr.bf16.mxu0 0
      %3560 = vmatpush1.bf16.msra.mxu0 0
      %3561 = vmatprep.subr.bf16.mxu0 0
      %3562 = vmatpush1.bf16.msra.mxu0 0
      %3563 = vmatprep.subr.bf16.mxu0 0
      %3564 = vmatpush1.bf16.msra.mxu0 0
      %3565 = vmatprep.subr.bf16.mxu0 0
      %3566 = vmatpush1.bf16.msra.mxu0 0
      %3567 = vmatprep.subr.bf16.mxu0 0
      %3568 = vmatpush1.bf16.msra.mxu0 0
      %3569 = vmatprep.subr.bf16.mxu0 0
      %3570 = vmatpush1.bf16.msra.mxu0 0
      %3571 = vmatprep.subr.bf16.mxu0 0
      %3572 = vmatpush1.bf16.msra.mxu0 0
      %3573 = vmatprep.subr.bf16.mxu0 0
      %3574 = vmatpush1.bf16.msra.mxu0 0
      %3575 = vmatprep.subr.bf16.mxu0 0
      %3576 = vmatpush1.bf16.msra.mxu0 0
      %3577 = vmatprep.subr.bf16.mxu0 0
      %3578 = vmatpush1.bf16.msra.mxu0 0
      %3579 = vmatprep.subr.bf16.mxu0 0
      %3580 = vmatpush1.bf16.msra.mxu0 0
      %3581 = vmatprep.subr.bf16.mxu0 0
      %3582 = vmatpush1.bf16.msra.mxu0 0
      %3583 = vmatprep.subr.bf16.mxu0 0
      %3584 = vmatpush1.bf16.msra.mxu0 0
      %3585 = vmatprep.mubr.bf16.mxu0 0
      %3586 = vmatmul.mubr.bf16.gmra.mrb[0].mxu0 %v3551
      %v3587 = vpop.f32.mrb[0].mxu0
      %v3588 = vadd.f32 0.0, %v3587
      %v3589 = vpop.f32.mrb[0].mxu0
      %v3590 = vpop.f32.mrb[0].mxu0
      %v3591 = vadd.f32 0.0, %v3590
      %v3592 = vpop.f32.mrb[0].mxu0
      %3593 = vdwg.mxu0
      %v3594 = vadd.f32 %v3532, %v3588
      %v3595 = vadd.f32 %v3533, %v3591
      %v3596 = vld [vmem:[%s2 + $0x80] sm:$0xf]
      %v3597 = vld [vmem:[%s2 + $0x84] sm:$0xf]
      %v3598 = vld [vmem:[%s2 + $0x88] sm:$0xf]
      %v3599 = vld [vmem:[%s2 + $0x8c] sm:$0xf]
      %v3604 = vunpack.c.l.b16 %v3596
      %v3605 = vunpack.c.l.b16 %v3597
      %v3606 = vunpack.c.l.b16 %v3598
      %v3607 = vunpack.c.l.b16 %v3599
      %v3608 = vpack.c.b16 %v3605, %v3604
      %v3609 = vpack.c.b16 %v3607, %v3606
      %v3613 = vsel %vm1275, %v3096, 0
      %3615 = vmatprep.subr.bf16.mxu0 0
      %3616 = vmatpush1.bf16.msra.mxu0 %v3608
      %3617 = vmatprep.subr.bf16.mxu0 0
      %3618 = vmatpush1.bf16.msra.mxu0 %v3609
      %3619 = vmatprep.subr.bf16.mxu0 0
      %3620 = vmatpush1.bf16.msra.mxu0 0
      %3621 = vmatprep.subr.bf16.mxu0 0
      %3622 = vmatpush1.bf16.msra.mxu0 0
      %3623 = vmatprep.subr.bf16.mxu0 0
      %3624 = vmatpush1.bf16.msra.mxu0 0
      %3625 = vmatprep.subr.bf16.mxu0 0
      %3626 = vmatpush1.bf16.msra.mxu0 0
      %3627 = vmatprep.subr.bf16.mxu0 0
      %3628 = vmatpush1.bf16.msra.mxu0 0
      %3629 = vmatprep.subr.bf16.mxu0 0
      %3630 = vmatpush1.bf16.msra.mxu0 0
      %3631 = vmatprep.subr.bf16.mxu0 0
      %3632 = vmatpush1.bf16.msra.mxu0 0
      %3633 = vmatprep.subr.bf16.mxu0 0
      %3634 = vmatpush1.bf16.msra.mxu0 0
      %3635 = vmatprep.subr.bf16.mxu0 0
      %3636 = vmatpush1.bf16.msra.mxu0 0
      %3637 = vmatprep.subr.bf16.mxu0 0
      %3638 = vmatpush1.bf16.msra.mxu0 0
      %3639 = vmatprep.subr.bf16.mxu0 0
      %3640 = vmatpush1.bf16.msra.mxu0 0
      %3641 = vmatprep.subr.bf16.mxu0 0
      %3642 = vmatpush1.bf16.msra.mxu0 0
      %3643 = vmatprep.subr.bf16.mxu0 0
      %3644 = vmatpush1.bf16.msra.mxu0 0
      %3645 = vmatprep.subr.bf16.mxu0 0
      %3646 = vmatpush1.bf16.msra.mxu0 0
      %3647 = vmatprep.mubr.bf16.mxu0 0
      %3648 = vmatmul.mubr.bf16.gmra.mrb[0].mxu0 %v3613
      %v3649 = vpop.f32.mrb[0].mxu0
      %v3650 = vadd.f32 0.0, %v3649
      %v3651 = vpop.f32.mrb[0].mxu0
      %v3652 = vpop.f32.mrb[0].mxu0
      %v3653 = vadd.f32 0.0, %v3652
      %v3654 = vpop.f32.mrb[0].mxu0
      %3655 = vdwg.mxu0
      %v3656 = vadd.f32 %v3594, %v3650
      %v3657 = vadd.f32 %v3595, %v3653
      %v3658 = vld [vmem:[%s2 + $0x90] sm:$0xf]
      %v3659 = vld [vmem:[%s2 + $0x94] sm:$0xf]
      %v3660 = vld [vmem:[%s2 + $0x98] sm:$0xf]
      %v3661 = vld [vmem:[%s2 + $0x9c] sm:$0xf]
      %v3666 = vunpack.c.l.b16 %v3658
      %v3667 = vunpack.c.l.b16 %v3659
      %v3668 = vunpack.c.l.b16 %v3660
      %v3669 = vunpack.c.l.b16 %v3661
      %v3670 = vpack.c.b16 %v3667, %v3666
      %v3671 = vpack.c.b16 %v3669, %v3668
      %v3675 = vsel %vm1275, %v3097, 0
      %3677 = vmatprep.subr.bf16.mxu0 0
      %3678 = vmatpush1.bf16.msra.mxu0 %v3670
      %3679 = vmatprep.subr.bf16.mxu0 0
      %3680 = vmatpush1.bf16.msra.mxu0 %v3671
      %3681 = vmatprep.subr.bf16.mxu0 0
      %3682 = vmatpush1.bf16.msra.mxu0 0
      %3683 = vmatprep.subr.bf16.mxu0 0
      %3684 = vmatpush1.bf16.msra.mxu0 0
      %3685 = vmatprep.subr.bf16.mxu0 0
      %3686 = vmatpush1.bf16.msra.mxu0 0
      %3687 = vmatprep.subr.bf16.mxu0 0
      %3688 = vmatpush1.bf16.msra.mxu0 0
      %3689 = vmatprep.subr.bf16.mxu0 0
      %3690 = vmatpush1.bf16.msra.mxu0 0
      %3691 = vmatprep.subr.bf16.mxu0 0
      %3692 = vmatpush1.bf16.msra.mxu0 0
      %3693 = vmatprep.subr.bf16.mxu0 0
      %3694 = vmatpush1.bf16.msra.mxu0 0
      %3695 = vmatprep.subr.bf16.mxu0 0
      %3696 = vmatpush1.bf16.msra.mxu0 0
      %3697 = vmatprep.subr.bf16.mxu0 0
      %3698 = vmatpush1.bf16.msra.mxu0 0
      %3699 = vmatprep.subr.bf16.mxu0 0
      %3700 = vmatpush1.bf16.msra.mxu0 0
      %3701 = vmatprep.subr.bf16.mxu0 0
      %3702 = vmatpush1.bf16.msra.mxu0 0
      %3703 = vmatprep.subr.bf16.mxu0 0
      %3704 = vmatpush1.bf16.msra.mxu0 0
      %3705 = vmatprep.subr.bf16.mxu0 0
      %3706 = vmatpush1.bf16.msra.mxu0 0
      %3707 = vmatprep.subr.bf16.mxu0 0
      %3708 = vmatpush1.bf16.msra.mxu0 0
      %3709 = vmatprep.mubr.bf16.mxu0 0
      %3710 = vmatmul.mubr.bf16.gmra.mrb[0].mxu0 %v3675
      %v3711 = vpop.f32.mrb[0].mxu0
      %v3712 = vadd.f32 0.0, %v3711
      %v3713 = vpop.f32.mrb[0].mxu0
      %v3714 = vpop.f32.mrb[0].mxu0
      %v3715 = vadd.f32 0.0, %v3714
      %v3716 = vpop.f32.mrb[0].mxu0
      %3717 = vdwg.mxu0
      %v3718 = vadd.f32 %v3656, %v3712
      %v3719 = vadd.f32 %v3657, %v3715
      %v3720 = vld [vmem:[%s2 + $0xa0] sm:$0xf]
      %v3721 = vld [vmem:[%s2 + $0xa4] sm:$0xf]
      %v3722 = vld [vmem:[%s2 + $0xa8] sm:$0xf]
      %v3723 = vld [vmem:[%s2 + $0xac] sm:$0xf]
      %v3728 = vunpack.c.l.b16 %v3720
      %v3729 = vunpack.c.l.b16 %v3721
      %v3730 = vunpack.c.l.b16 %v3722
      %v3731 = vunpack.c.l.b16 %v3723
      %v3732 = vpack.c.b16 %v3729, %v3728
      %v3733 = vpack.c.b16 %v3731, %v3730
      %v3737 = vsel %vm1275, %v3098, 0
      %3739 = vmatprep.subr.bf16.mxu0 0
      %3740 = vmatpush1.bf16.msra.mxu0 %v3732
      %3741 = vmatprep.subr.bf16.mxu0 0
      %3742 = vmatpush1.bf16.msra.mxu0 %v3733
      %3743 = vmatprep.subr.bf16.mxu0 0
      %3744 = vmatpush1.bf16.msra.mxu0 0
      %3745 = vmatprep.subr.bf16.mxu0 0
      %3746 = vmatpush1.bf16.msra.mxu0 0
      %3747 = vmatprep.subr.bf16.mxu0 0
      %3748 = vmatpush1.bf16.msra.mxu0 0
      %3749 = vmatprep.subr.bf16.mxu0 0
      %3750 = vmatpush1.bf16.msra.mxu0 0
      %3751 = vmatprep.subr.bf16.mxu0 0
      %3752 = vmatpush1.bf16.msra.mxu0 0
      %3753 = vmatprep.subr.bf16.mxu0 0
      %3754 = vmatpush1.bf16.msra.mxu0 0
      %3755 = vmatprep.subr.bf16.mxu0 0
      %3756 = vmatpush1.bf16.msra.mxu0 0
      %3757 = vmatprep.subr.bf16.mxu0 0
      %3758 = vmatpush1.bf16.msra.mxu0 0
      %3759 = vmatprep.subr.bf16.mxu0 0
      %3760 = vmatpush1.bf16.msra.mxu0 0
      %3761 = vmatprep.subr.bf16.mxu0 0
      %3762 = vmatpush1.bf16.msra.mxu0 0
      %3763 = vmatprep.subr.bf16.mxu0 0
      %3764 = vmatpush1.bf16.msra.mxu0 0
      %3765 = vmatprep.subr.bf16.mxu0 0
      %3766 = vmatpush1.bf16.msra.mxu0 0
      %3767 = vmatprep.subr.bf16.mxu0 0
      %3768 = vmatpush1.bf16.msra.mxu0 0
      %3769 = vmatprep.subr.bf16.mxu0 0
      %3770 = vmatpush1.bf16.msra.mxu0 0
      %3771 = vmatprep.mubr.bf16.mxu0 0
      %3772 = vmatmul.mubr.bf16.gmra.mrb[0].mxu0 %v3737
      %v3773 = vpop.f32.mrb[0].mxu0
      %v3774 = vadd.f32 0.0, %v3773
      %v3775 = vpop.f32.mrb[0].mxu0
      %v3776 = vpop.f32.mrb[0].mxu0
      %v3777 = vadd.f32 0.0, %v3776
      %v3778 = vpop.f32.mrb[0].mxu0
      %3779 = vdwg.mxu0
      %v3780 = vadd.f32 %v3718, %v3774
      %v3781 = vadd.f32 %v3719, %v3777
      %v3782 = vld [vmem:[%s2 + $0xb0] sm:$0xf]
      %v3783 = vld [vmem:[%s2 + $0xb4] sm:$0xf]
      %v3784 = vld [vmem:[%s2 + $0xb8] sm:$0xf]
      %v3785 = vld [vmem:[%s2 + $0xbc] sm:$0xf]
      %v3790 = vunpack.c.l.b16 %v3782
      %v3791 = vunpack.c.l.b16 %v3783
      %v3792 = vunpack.c.l.b16 %v3784
      %v3793 = vunpack.c.l.b16 %v3785
      %v3794 = vpack.c.b16 %v3791, %v3790
      %v3795 = vpack.c.b16 %v3793, %v3792
      %v3799 = vsel %vm1275, %v3099, 0
      %3801 = vmatprep.subr.bf16.mxu0 0
      %3802 = vmatpush1.bf16.msra.mxu0 %v3794
      %3803 = vmatprep.subr.bf16.mxu0 0
      %3804 = vmatpush1.bf16.msra.mxu0 %v3795
      %3805 = vmatprep.subr.bf16.mxu0 0
      %3806 = vmatpush1.bf16.msra.mxu0 0
      %3807 = vmatprep.subr.bf16.mxu0 0
      %3808 = vmatpush1.bf16.msra.mxu0 0
      %3809 = vmatprep.subr.bf16.mxu0 0
      %3810 = vmatpush1.bf16.msra.mxu0 0
      %3811 = vmatprep.subr.bf16.mxu0 0
      %3812 = vmatpush1.bf16.msra.mxu0 0
      %3813 = vmatprep.subr.bf16.mxu0 0
      %3814 = vmatpush1.bf16.msra.mxu0 0
      %3815 = vmatprep.subr.bf16.mxu0 0
      %3816 = vmatpush1.bf16.msra.mxu0 0
      %3817 = vmatprep.subr.bf16.mxu0 0
      %3818 = vmatpush1.bf16.msra.mxu0 0
      %3819 = vmatprep.subr.bf16.mxu0 0
      %3820 = vmatpush1.bf16.msra.mxu0 0
      %3821 = vmatprep.subr.bf16.mxu0 0
      %3822 = vmatpush1.bf16.msra.mxu0 0
      %3823 = vmatprep.subr.bf16.mxu0 0
      %3824 = vmatpush1.bf16.msra.mxu0 0
      %3825 = vmatprep.subr.bf16.mxu0 0
      %3826 = vmatpush1.bf16.msra.mxu0 0
      %3827 = vmatprep.subr.bf16.mxu0 0
      %3828 = vmatpush1.bf16.msra.mxu0 0
      %3829 = vmatprep.subr.bf16.mxu0 0
      %3830 = vmatpush1.bf16.msra.mxu0 0
      %3831 = vmatprep.subr.bf16.mxu0 0
      %3832 = vmatpush1.bf16.msra.mxu0 0
      %3833 = vmatprep.mubr.bf16.mxu0 0
      %3834 = vmatmul.mubr.bf16.gmra.mrb[0].mxu0 %v3799
      %v3835 = vpop.f32.mrb[0].mxu0
      %v3836 = vadd.f32 0.0, %v3835
      %v3837 = vpop.f32.mrb[0].mxu0
      %v3838 = vpop.f32.mrb[0].mxu0
      %v3839 = vadd.f32 0.0, %v3838
      %v3840 = vpop.f32.mrb[0].mxu0
      %3841 = vdwg.mxu0
      %v3842 = vadd.f32 %v3780, %v3836
      %v3843 = vadd.f32 %v3781, %v3839
      %v3844 = vld [vmem:[%s2 + $0xc0] sm:$0xf]
      %v3845 = vld [vmem:[%s2 + $0xc4] sm:$0xf]
      %v3846 = vld [vmem:[%s2 + $0xc8] sm:$0xf]
      %v3847 = vld [vmem:[%s2 + $0xcc] sm:$0xf]
      %v3852 = vunpack.c.l.b16 %v3844
      %v3853 = vunpack.c.l.b16 %v3845
      %v3854 = vunpack.c.l.b16 %v3846
      %v3855 = vunpack.c.l.b16 %v3847
      %v3856 = vpack.c.b16 %v3853, %v3852
      %v3857 = vpack.c.b16 %v3855, %v3854
      %v3861 = vsel %vm1275, %v3100, 0
      %3863 = vmatprep.subr.bf16.mxu0 0
      %3864 = vmatpush1.bf16.msra.mxu0 %v3856
      %3865 = vmatprep.subr.bf16.mxu0 0
      %3866 = vmatpush1.bf16.msra.mxu0 %v3857
      %3867 = vmatprep.subr.bf16.mxu0 0
      %3868 = vmatpush1.bf16.msra.mxu0 0
      %3869 = vmatprep.subr.bf16.mxu0 0
      %3870 = vmatpush1.bf16.msra.mxu0 0
      %3871 = vmatprep.subr.bf16.mxu0 0
      %3872 = vmatpush1.bf16.msra.mxu0 0
      %3873 = vmatprep.subr.bf16.mxu0 0
      %3874 = vmatpush1.bf16.msra.mxu0 0
      %3875 = vmatprep.subr.bf16.mxu0 0
      %3876 = vmatpush1.bf16.msra.mxu0 0
      %3877 = vmatprep.subr.bf16.mxu0 0
      %3878 = vmatpush1.bf16.msra.mxu0 0
      %3879 = vmatprep.subr.bf16.mxu0 0
      %3880 = vmatpush1.bf16.msra.mxu0 0
      %3881 = vmatprep.subr.bf16.mxu0 0
      %3882 = vmatpush1.bf16.msra.mxu0 0
      %3883 = vmatprep.subr.bf16.mxu0 0
      %3884 = vmatpush1.bf16.msra.mxu0 0
      %3885 = vmatprep.subr.bf16.mxu0 0
      %3886 = vmatpush1.bf16.msra.mxu0 0
      %3887 = vmatprep.subr.bf16.mxu0 0
      %3888 = vmatpush1.bf16.msra.mxu0 0
      %3889 = vmatprep.subr.bf16.mxu0 0
      %3890 = vmatpush1.bf16.msra.mxu0 0
      %3891 = vmatprep.subr.bf16.mxu0 0
      %3892 = vmatpush1.bf16.msra.mxu0 0
      %3893 = vmatprep.subr.bf16.mxu0 0
      %3894 = vmatpush1.bf16.msra.mxu0 0
      %3895 = vmatprep.mubr.bf16.mxu0 0
      %3896 = vmatmul.mubr.bf16.gmra.mrb[0].mxu0 %v3861
      %v3897 = vpop.f32.mrb[0].mxu0
      %v3898 = vadd.f32 0.0, %v3897
      %v3899 = vpop.f32.mrb[0].mxu0
      %v3900 = vpop.f32.mrb[0].mxu0
      %v3901 = vadd.f32 0.0, %v3900
      %v3902 = vpop.f32.mrb[0].mxu0
      %3903 = vdwg.mxu0
      %v3904 = vadd.f32 %v3842, %v3898
      %v3905 = vadd.f32 %v3843, %v3901
      %v3906 = vld [vmem:[%s2 + $0xd0] sm:$0xf]
      %v3907 = vld [vmem:[%s2 + $0xd4] sm:$0xf]
      %v3908 = vld [vmem:[%s2 + $0xd8] sm:$0xf]
      %v3909 = vld [vmem:[%s2 + $0xdc] sm:$0xf]
      %v3914 = vunpack.c.l.b16 %v3906
      %v3915 = vunpack.c.l.b16 %v3907
      %v3916 = vunpack.c.l.b16 %v3908
      %v3917 = vunpack.c.l.b16 %v3909
      %v3918 = vpack.c.b16 %v3915, %v3914
      %v3919 = vpack.c.b16 %v3917, %v3916
      %v3923 = vsel %vm1275, %v3101, 0
      %3925 = vmatprep.subr.bf16.mxu0 0
      %3926 = vmatpush1.bf16.msra.mxu0 %v3918
      %3927 = vmatprep.subr.bf16.mxu0 0
      %3928 = vmatpush1.bf16.msra.mxu0 %v3919
      %3929 = vmatprep.subr.bf16.mxu0 0
      %3930 = vmatpush1.bf16.msra.mxu0 0
      %3931 = vmatprep.subr.bf16.mxu0 0
      %3932 = vmatpush1.bf16.msra.mxu0 0
      %3933 = vmatprep.subr.bf16.mxu0 0
      %3934 = vmatpush1.bf16.msra.mxu0 0
      %3935 = vmatprep.subr.bf16.mxu0 0
      %3936 = vmatpush1.bf16.msra.mxu0 0
      %3937 = vmatprep.subr.bf16.mxu0 0
      %3938 = vmatpush1.bf16.msra.mxu0 0
      %3939 = vmatprep.subr.bf16.mxu0 0
      %3940 = vmatpush1.bf16.msra.mxu0 0
      %3941 = vmatprep.subr.bf16.mxu0 0
      %3942 = vmatpush1.bf16.msra.mxu0 0
      %3943 = vmatprep.subr.bf16.mxu0 0
      %3944 = vmatpush1.bf16.msra.mxu0 0
      %3945 = vmatprep.subr.bf16.mxu0 0
      %3946 = vmatpush1.bf16.msra.mxu0 0
      %3947 = vmatprep.subr.bf16.mxu0 0
      %3948 = vmatpush1.bf16.msra.mxu0 0
      %3949 = vmatprep.subr.bf16.mxu0 0
      %3950 = vmatpush1.bf16.msra.mxu0 0
      %3951 = vmatprep.subr.bf16.mxu0 0
      %3952 = vmatpush1.bf16.msra.mxu0 0
      %3953 = vmatprep.subr.bf16.mxu0 0
      %3954 = vmatpush1.bf16.msra.mxu0 0
      %3955 = vmatprep.subr.bf16.mxu0 0
      %3956 = vmatpush1.bf16.msra.mxu0 0
      %3957 = vmatprep.mubr.bf16.mxu0 0
      %3958 = vmatmul.mubr.bf16.gmra.mrb[0].mxu0 %v3923
      %v3959 = vpop.f32.mrb[0].mxu0
      %v3960 = vadd.f32 0.0, %v3959
      %v3961 = vpop.f32.mrb[0].mxu0
      %v3962 = vpop.f32.mrb[0].mxu0
      %v3963 = vadd.f32 0.0, %v3962
      %v3964 = vpop.f32.mrb[0].mxu0
      %3965 = vdwg.mxu0
      %v3966 = vadd.f32 %v3904, %v3960
      %v3967 = vadd.f32 %v3905, %v3963
      %v3968 = vld [vmem:[%s2 + $0xe0] sm:$0xf]
      %v3969 = vld [vmem:[%s2 + $0xe4] sm:$0xf]
      %v3970 = vld [vmem:[%s2 + $0xe8] sm:$0xf]
      %v3971 = vld [vmem:[%s2 + $0xec] sm:$0xf]
      %v3976 = vunpack.c.l.b16 %v3968
      %v3977 = vunpack.c.l.b16 %v3969
      %v3978 = vunpack.c.l.b16 %v3970
      %v3979 = vunpack.c.l.b16 %v3971
      %v3980 = vpack.c.b16 %v3977, %v3976
      %v3981 = vpack.c.b16 %v3979, %v3978
      %v3985 = vsel %vm1275, %v3102, 0
      %3987 = vmatprep.subr.bf16.mxu0 0
      %3988 = vmatpush1.bf16.msra.mxu0 %v3980
      %3989 = vmatprep.subr.bf16.mxu0 0
      %3990 = vmatpush1.bf16.msra.mxu0 %v3981
      %3991 = vmatprep.subr.bf16.mxu0 0
      %3992 = vmatpush1.bf16.msra.mxu0 0
      %3993 = vmatprep.subr.bf16.mxu0 0
      %3994 = vmatpush1.bf16.msra.mxu0 0
      %3995 = vmatprep.subr.bf16.mxu0 0
      %3996 = vmatpush1.bf16.msra.mxu0 0
      %3997 = vmatprep.subr.bf16.mxu0 0
      %3998 = vmatpush1.bf16.msra.mxu0 0
      %3999 = vmatprep.subr.bf16.mxu0 0
      %4000 = vmatpush1.bf16.msra.mxu0 0
      %4001 = vmatprep.subr.bf16.mxu0 0
      %4002 = vmatpush1.bf16.msra.mxu0 0
      %4003 = vmatprep.subr.bf16.mxu0 0
      %4004 = vmatpush1.bf16.msra.mxu0 0
      %4005 = vmatprep.subr.bf16.mxu0 0
      %4006 = vmatpush1.bf16.msra.mxu0 0
      %4007 = vmatprep.subr.bf16.mxu0 0
      %4008 = vmatpush1.bf16.msra.mxu0 0
      %4009 = vmatprep.subr.bf16.mxu0 0
      %4010 = vmatpush1.bf16.msra.mxu0 0
      %4011 = vmatprep.subr.bf16.mxu0 0
      %4012 = vmatpush1.bf16.msra.mxu0 0
      %4013 = vmatprep.subr.bf16.mxu0 0
      %4014 = vmatpush1.bf16.msra.mxu0 0
      %4015 = vmatprep.subr.bf16.mxu0 0
      %4016 = vmatpush1.bf16.msra.mxu0 0
      %4017 = vmatprep.subr.bf16.mxu0 0
      %4018 = vmatpush1.bf16.msra.mxu0 0
      %4019 = vmatprep.mubr.bf16.mxu0 0
      %4020 = vmatmul.mubr.bf16.gmra.mrb[0].mxu0 %v3985
      %v4021 = vpop.f32.mrb[0].mxu0
      %v4022 = vadd.f32 0.0, %v4021
      %v4023 = vpop.f32.mrb[0].mxu0
      %v4024 = vpop.f32.mrb[0].mxu0
      %v4025 = vadd.f32 0.0, %v4024
      %v4026 = vpop.f32.mrb[0].mxu0
      %4027 = vdwg.mxu0
      %v4028 = vadd.f32 %v3966, %v4022
      %v4029 = vadd.f32 %v3967, %v4025
      %v4030 = vld [vmem:[%s2 + $0xf0] sm:$0xf]
      %v4031 = vld [vmem:[%s2 + $0xf4] sm:$0xf]
      %v4032 = vld [vmem:[%s2 + $0xf8] sm:$0xf]
      %v4033 = vld [vmem:[%s2 + $0xfc] sm:$0xf]
      %v4038 = vunpack.c.l.b16 %v4030
      %v4039 = vunpack.c.l.b16 %v4031
      %v4040 = vunpack.c.l.b16 %v4032
      %v4041 = vunpack.c.l.b16 %v4033
      %v4042 = vpack.c.b16 %v4039, %v4038
      %v4043 = vpack.c.b16 %v4041, %v4040
      %v4047 = vsel %vm1275, %v3103, 0
      %4049 = vmatprep.subr.bf16.mxu0 0
      %4050 = vmatpush1.bf16.msra.mxu0 %v4042
      %4051 = vmatprep.subr.bf16.mxu0 0
      %4052 = vmatpush1.bf16.msra.mxu0 %v4043
      %4053 = vmatprep.subr.bf16.mxu0 0
      %4054 = vmatpush1.bf16.msra.mxu0 0
      %4055 = vmatprep.subr.bf16.mxu0 0
      %4056 = vmatpush1.bf16.msra.mxu0 0
      %4057 = vmatprep.subr.bf16.mxu0 0
      %4058 = vmatpush1.bf16.msra.mxu0 0
      %4059 = vmatprep.subr.bf16.mxu0 0
      %4060 = vmatpush1.bf16.msra.mxu0 0
      %4061 = vmatprep.subr.bf16.mxu0 0
      %4062 = vmatpush1.bf16.msra.mxu0 0
      %4063 = vmatprep.subr.bf16.mxu0 0
      %4064 = vmatpush1.bf16.msra.mxu0 0
      %4065 = vmatprep.subr.bf16.mxu0 0
      %4066 = vmatpush1.bf16.msra.mxu0 0
      %4067 = vmatprep.subr.bf16.mxu0 0
      %4068 = vmatpush1.bf16.msra.mxu0 0
      %4069 = vmatprep.subr.bf16.mxu0 0
      %4070 = vmatpush1.bf16.msra.mxu0 0
      %4071 = vmatprep.subr.bf16.mxu0 0
      %4072 = vmatpush1.bf16.msra.mxu0 0
      %4073 = vmatprep.subr.bf16.mxu0 0
      %4074 = vmatpush1.bf16.msra.mxu0 0
      %4075 = vmatprep.subr.bf16.mxu0 0
      %4076 = vmatpush1.bf16.msra.mxu0 0
      %4077 = vmatprep.subr.bf16.mxu0 0
      %4078 = vmatpush1.bf16.msra.mxu0 0
      %4079 = vmatprep.subr.bf16.mxu0 0
      %4080 = vmatpush1.bf16.msra.mxu0 0
      %4081 = vmatprep.mubr.bf16.mxu0 0
      %4082 = vmatmul.mubr.bf16.gmra.mrb[0].mxu0 %v4047
      %v4083 = vpop.f32.mrb[0].mxu0
      %v4084 = vadd.f32 0.0, %v4083
      %v4085 = vpop.f32.mrb[0].mxu0
      %v4086 = vpop.f32.mrb[0].mxu0
      %v4087 = vadd.f32 0.0, %v4086
      %v4088 = vpop.f32.mrb[0].mxu0
      %4089 = vdwg.mxu0
      %v4090 = vadd.f32 %v4028, %v4084
      %v4091 = vadd.f32 %v4029, %v4087
      %v4092 = vlaneseq
      %v4093 = vshrl.u32 %v4092, 7
      %v4094 = vsub.s32 0, %v4093
      %v4095 = vrot.slane %v207, %v4094
      %v4096 = vadd.f32 %v4090, %v4095
      %v4097 = vadd.f32 %v4091, %v4095
      %v4098 = vmax.f32 %v4096, 0.0
      %v4099 = vmax.f32 %v4097, 0.0
      %4101 = vset.pattern.permute.xlu0 0
      %4102 = vperm.xlu0 %4101, %v209
      %v4103 = vpop.permute.xlu0 %4102
      %vm4105 = vcmask 130048
      %v4107 = vsel %vm4105, %v208, 0
      %v4110 = vsel %vm4105, %v4098, 0
      %v4113 = vsel %vm4105, %v4099, 0
      %4115 = vmatprep.subr.mxu0 0.0
      %4116 = vmatpush1.xpose.msra.mxu0 %v4110
      %4117 = vmatprep.subr.mxu0 0.0
      %4118 = vmatpush1.xpose.msra.mxu0 %v4113
      %4119 = vmatprep.subr.mxu0 0.0
      %4120 = vmatpush1.xpose.msra.mxu0 0.0
      %4121 = vmatprep.subr.mxu0 0.0
      %4122 = vmatpush1.xpose.msra.mxu0 0.0
      %4123 = vmatprep.subr.mxu0 0.0
      %4124 = vmatpush1.xpose.msra.mxu0 0.0
      %4125 = vmatprep.subr.mxu0 0.0
      %4126 = vmatpush1.xpose.msra.mxu0 0.0
      %4127 = vmatprep.subr.mxu0 0.0
      %4128 = vmatpush1.xpose.msra.mxu0 0.0
      %4129 = vmatprep.subr.mxu0 0.0
      %4130 = vmatpush1.xpose.msra.mxu0 0.0
      %4131 = vmatprep.subr.mxu0 0.0
      %4132 = vmatpush1.xpose.msra.mxu0 0.0
      %4133 = vmatprep.subr.mxu0 0.0
      %4134 = vmatpush1.xpose.msra.mxu0 0.0
      %4135 = vmatprep.subr.mxu0 0.0
      %4136 = vmatpush1.xpose.msra.mxu0 0.0
      %4137 = vmatprep.subr.mxu0 0.0
      %4138 = vmatpush1.xpose.msra.mxu0 0.0
      %4139 = vmatprep.subr.mxu0 0.0
      %4140 = vmatpush1.xpose.msra.mxu0 0.0
      %4141 = vmatprep.subr.mxu0 0.0
      %4142 = vmatpush1.xpose.msra.mxu0 0.0
      %4143 = vmatprep.subr.mxu0 0.0
      %4144 = vmatpush1.xpose.msra.mxu0 0.0
      %4145 = vmatprep.subr.mxu0 0.0
      %4146 = vmatpush1.xpose.msra.mxu0 0.0
      %4147 = vmatprep.subr.mxu0 0.0
      %4148 = vmatpush1.xpose.msra.mxu0 0.0
      %4149 = vmatprep.subr.mxu0 0.0
      %4150 = vmatpush1.xpose.msra.mxu0 0.0
      %4151 = vmatprep.subr.mxu0 0.0
      %4152 = vmatpush1.xpose.msra.mxu0 0.0
      %4153 = vmatprep.subr.mxu0 0.0
      %4154 = vmatpush1.xpose.msra.mxu0 0.0
      %4155 = vmatprep.subr.mxu0 0.0
      %4156 = vmatpush1.xpose.msra.mxu0 0.0
      %4157 = vmatprep.subr.mxu0 0.0
      %4158 = vmatpush1.xpose.msra.mxu0 0.0
      %4159 = vmatprep.subr.mxu0 0.0
      %4160 = vmatpush1.xpose.msra.mxu0 0.0
      %4161 = vmatprep.subr.mxu0 0.0
      %4162 = vmatpush1.xpose.msra.mxu0 0.0
      %4163 = vmatprep.subr.mxu0 0.0
      %4164 = vmatpush1.xpose.msra.mxu0 0.0
      %4165 = vmatprep.subr.mxu0 0.0
      %4166 = vmatpush1.xpose.msra.mxu0 0.0
      %4167 = vmatprep.subr.mxu0 0.0
      %4168 = vmatpush1.xpose.msra.mxu0 0.0
      %4169 = vmatprep.subr.mxu0 0.0
      %4170 = vmatpush1.xpose.msra.mxu0 0.0
      %4171 = vmatprep.subr.mxu0 0.0
      %4172 = vmatpush1.xpose.msra.mxu0 0.0
      %4173 = vmatprep.subr.mxu0 0.0
      %4174 = vmatpush1.xpose.msra.mxu0 0.0
      %4175 = vmatprep.subr.mxu0 0.0
      %4176 = vmatpush1.xpose.msra.mxu0 0.0
      %4177 = vmatprep.subr.mxu0 0.0
      %4178 = vmatpush1.xpose.msra.mxu0 0.0
      %4179 = vmatprep.mubr.f32.mxu0 0.0
      %4180 = vmatmul.mubr.f32.gmra.mrb[0].mxu0 %v4107
      %v4181 = vpop.f32.mrb[0].mxu0
      %v4182 = vadd.f32 %v4103, %v4181
      %v4183 = vpop.f32.mrb[0].mxu0
      %4184 = vdwg.mxu0
      %vm4185 = vcmask 122880
      %4186 = vst.msk [vmem:[%s195] sm:$0x1] %vm4185, %v4182
      %p4187 = scmp.lt.s32.totalorder %s15, 1
      %s4188 = scalar_select %p4187, %s15, 1
      %s4189 = scalar_lea.vmem %s4, %s4188
      // Predicated region
      $region37: #{attention_gcn_forward.1} parent=35 // pred_check
        %p4190 = pneg %p122
      $region38: #{attention_gcn_forward.1} parent=35 // pred_check_branch
        %4192 = sbr.rel (%p4190) target = $region40
      $region39: #{attention_gcn_forward.1} parent=35 // pred_region
        _
      $region40: #{attention_gcn_forward.1} parent=35 // pred_fallthru
        _
    $region36: #{attention_gcn_forward.1} parent=5 // pred_fallthru
      _
    %p4193 = scmp.le.s32.totalorder 2, %s10
    // Predicated region
    $region41: #{attention_gcn_forward.1} parent=5 // pred_check
      %p4194 = pneg %p4193
    $region42: #{attention_gcn_forward.1} parent=5 // pred_check_branch
      %4196 = sbr.rel (%p4194) target = $region44
    $region43: #{attention_gcn_forward.1} parent=5 // pred_region
      %s4197 = ssub.s32 %s10, 2
      // Predicated region
      $region45: #{attention_gcn_forward.1} parent=43 // pred_check
        %p4198 = pneg %p128
      $region46: #{attention_gcn_forward.1} parent=43 // pred_check_branch
        %4200 = sbr.rel (%p4198) target = $region48
      $region47: #{attention_gcn_forward.1} parent=43 // pred_region
        %p4201 = scmp.lt.s32.totalorder %s16, 1
        %s4202 = scalar_select %p4201, %s16, 1
        %s4203 = scalar_lea.vmem %s4, %s4202
      $region48: #{attention_gcn_forward.1} parent=43 // pred_fallthru
        _
    $region44: #{attention_gcn_forward.1} parent=5 // pred_fallthru
      _
  $region6: #{attention_gcn_forward.1} parent=0 // loop_footer
    %s14 = sadd.s32 1, %s10
  $region7: #{attention_gcn_forward.1} parent=0 // loop_footer_branch
    %9 = sbr.rel target = $region3
  $region8: #{attention_gcn_forward.1} parent=0 // loop_exit
    _

</llo_original>
